<compile_context>
chip_gen: v5e
topology: v5e:2x2
jax: 0.10.0
libtpu: 0.0.40
codegen_flags: <defaults>
</compile_context>

<pallas_src>
import functools

import jax
import jax.numpy as jnp
from jax.experimental import pallas as pl
from jax.experimental.pallas import tpu as pltpu


# ----------------------------- fused Pallas kernel -----------------------------

def _policy_fused_kernel(xcat_ref, w1_ref, b1_ref, w2_ref, b2_ref, w3_ref, b3_ref,
                         fw1_ref, fb1_ref, fw2_ref, fb2_ref, o_ref, a1_ref,
                         *, k2, oh2):
    f32 = jnp.float32
    bf16 = jnp.bfloat16
    nb, oh1, kc1 = xcat_ref.shape

    # ---- conv1: single MXU matmul (both 2x2 taps folded into K).
    lhs1 = xcat_ref[...].reshape(nb * oh1, kc1)                 # leading-dim merge: free
    acc1 = jnp.dot(lhs1, w1_ref[...], preferred_element_type=f32)
    a1 = jnp.maximum(acc1 + b1_ref[...], 0.0)                   # (nb*oh1, ow1*32) f32
    a1_ref[...] = a1.reshape(nb, oh1, a1.shape[-1])             # VMEM-resident activation

    # ---- conv2: one matmul per output row; 4 H-taps folded into K.
    #      LHS = 4 lane-aligned (256-wide) row reads concatenated along lanes.
    w2 = w2_ref[...]
    b2 = b2_ref[...]
    rows2 = []
    for r2 in range(oh2):
        lhs2 = jnp.concatenate([a1_ref[:, 2 * r2 + i, :] for i in range(k2)],
                               axis=-1).astype(bf16)            # (nb, k2*ow1*32)
        acc2 = jnp.dot(lhs2, w2, preferred_element_type=f32)
        rows2.append(jnp.maximum(acc2 + b2, 0.0))               # (nb, 256) (padded cols = 0)

    # ---- conv3: 1x1 spatial output -> single matmul over the full window.
    lhs3 = jnp.concatenate(rows2, axis=-1).astype(bf16)         # (nb, oh2*256), 128-aligned
    acc3 = jnp.dot(lhs3, w3_ref[...], preferred_element_type=f32)
    a3 = jnp.maximum(acc3 + b3_ref[...], 0.0)                   # (nb, 64) == torch flatten order

    # ---- FC head: Linear -> ReLU -> Linear -> Softmax.  Action dim is padded
    #      to 128 lanes; pad logits are -1e30 so their exp is exactly 0.
    h = jnp.maximum(jnp.dot(a3.astype(bf16), fw1_ref[...],
                            preferred_element_type=f32) + fb1_ref[...], 0.0)
    logits = jnp.dot(h.astype(bf16), fw2_ref[...],
                     preferred_element_type=f32) + fb2_ref[...]
    m = jnp.max(logits, axis=-1, keepdims=True)
    e = jnp.exp(logits - m)
    denom = jnp.sum(e, axis=-1, keepdims=True)
    o_ref[...] = (e * pl.reciprocal(denom, approx=False)).astype(o_ref.dtype)


# ------------------------------- wrapper -----------------------------------

def policy_forward(kparams, x, *, out_actions, batch_block=None):
    n, c, h, w = x.shape
    assert h % 4 == 0 and w % 4 == 0
    oh1, ow1 = (h - 8) // 4 + 1, (w - 8) // 4 + 1
    oh2, ow2 = (oh1 - 4) // 2 + 1, (ow1 - 4) // 2 + 1
    oh3, ow3 = oh2 - 2, ow2 - 2
    # TODO(synk): oh3/ow3 > 1 would additionally need the NCHW-flatten feature
    # permutation folded into fw1 and a per-output-row conv3 loop; not needed here.
    assert oh3 == 1 and ow3 == 1

    nb = n if batch_block is None else min(batch_block, n)
    assert n % nb == 0
    # Keep the batch block a clean sublane multiple (or the whole batch) so the
    # (nb, A_pad) output block satisfies the (8,128) tiling rule.
    assert nb == n or nb % 8 == 0, "batch_block must equal n or be a multiple of 8"

    a_pad = kparams["fw2"].shape[1]
    o1 = kparams["b1"].shape[1] // ow1
    k2 = kparams["w2"].shape[0] // (ow1 * o1)

    # One-time XLA layout op: NCHW -> space-to-depth(4), channels-last rows,
    # then the two conv1 H-taps pre-concatenated along K (~37 KB/sample bf16).
    xd = x.reshape(n, c, h // 4, 4, w // 4, 4).transpose(0, 2, 4, 3, 5, 1)
    xd = xd.reshape(n, h // 4, (w // 4) * 16 * c)
    xcat = jnp.concatenate([xd[:, :oh1, :], xd[:, 1:oh1 + 1, :]],
                           axis=-1).astype(kparams["w1"].dtype)

    kern = functools.partial(_policy_fused_kernel, k2=k2, oh2=oh2)

    # Actual issued MXU MACs (banded conv1/conv2 K included), for the scheduler.
    macs = (oh1 * xcat.shape[-1] * (ow1 * o1)
            + oh2 * kparams["w2"].shape[0] * kparams["w2"].shape[1]
            + kparams["w3"].shape[0] * kparams["w3"].shape[1]
            + kparams["fw1"].shape[0] * kparams["fw1"].shape[1]
            + kparams["fw2"].shape[0] * kparams["fw2"].shape[1])
    bytes_acc = (int(xcat.size) * xcat.dtype.itemsize
                 + sum(int(v.size) * v.dtype.itemsize for v in kparams.values())
                 + n * a_pad * 4)

    grid_spec = pltpu.PrefetchScalarGridSpec(
        num_scalar_prefetch=0,
        grid=(n // nb,),
        in_specs=[
            pl.BlockSpec((nb,) + xcat.shape[1:], lambda b: (b, 0, 0)),
            pl.BlockSpec(kparams["w1"].shape, lambda b: (0, 0)),
            pl.BlockSpec(kparams["b1"].shape, lambda b: (0, 0)),
            pl.BlockSpec(kparams["w2"].shape, lambda b: (0, 0)),
            pl.BlockSpec(kparams["b2"].shape, lambda b: (0, 0)),
            pl.BlockSpec(kparams["w3"].shape, lambda b: (0, 0)),
            pl.BlockSpec(kparams["b3"].shape, lambda b: (0, 0)),
            pl.BlockSpec(kparams["fw1"].shape, lambda b: (0, 0)),
            pl.BlockSpec(kparams["fb1"].shape, lambda b: (0, 0)),
            pl.BlockSpec(kparams["fw2"].shape, lambda b: (0, 0)),
            pl.BlockSpec(kparams["fb2"].shape, lambda b: (0, 0)),
        ],
        out_specs=pl.BlockSpec((nb, a_pad), lambda b: (b, 0)),
        scratch_shapes=[pltpu.VMEM((nb, oh1, ow1 * o1), jnp.float32)],
    )

    probs_pad = pl.pallas_call(
        kern,
        out_shape=jax.ShapeDtypeStruct((n, a_pad), jnp.float32),
        grid_spec=grid_spec,
        compiler_params=pltpu.CompilerParams(dimension_semantics=("parallel",)),
        cost_estimate=pl.CostEstimate(flops=2 * n * macs,
                                      transcendentals=n * a_pad,
                                      bytes_accessed=int(bytes_acc)),
    )(xcat, kparams["w1"], kparams["b1"], kparams["w2"], kparams["b2"],
      kparams["w3"], kparams["b3"], kparams["fw1"], kparams["fb1"],
      kparams["fw2"], kparams["fb2"])
    return probs_pad[:, :out_actions], None


# ----------------------- parameters (torch layout) --------------------------

def init_params(key, in_shape, out_actions):
    c, h, w = in_shape
    h1, w1 = (h - 8) // 4 + 1, (w - 8) // 4 + 1
    h2, w2 = (h1 - 4) // 2 + 1, (w1 - 4) // 2 + 1
    h3, w3 = h2 - 2, w2 - 2
    cnn_flat = 64 * h3 * w3
    ks = jax.random.split(key, 10)

    def u(k, shape, fan_in):
        bound = 1.0 / (fan_in ** 0.5)
        return jax.random.uniform(k, shape, jnp.float32, -bound, bound)

    return {
        "cw1": u(ks[0], (32, c, 8, 8), c * 64),
        "cb1": u(ks[1], (32,), c * 64),
        "cw2": u(ks[2], (64, 32, 4, 4), 32 * 16),
        "cb2": u(ks[3], (64,), 32 * 16),
        "cw3": u(ks[4], (64, 64, 3, 3), 64 * 9),
        "cb3": u(ks[5], (64,), 64 * 9),
        "fw1": u(ks[6], (512, cnn_flat), cnn_flat),
        "fb1": u(ks[7], (512,), cnn_flat),
        "fw2": u(ks[8], (out_actions, 512), 512),
        "fb2": u(ks[9], (out_actions,), 512),
    }


def prepare_params(p, in_shape, *, dot_dtype=jnp.bfloat16):
    """One-time conversion of torch-layout weights to kernel-ready layouts."""
    c, h, w = in_shape
    f32 = jnp.float32
    wb_in = w // 4
    ow1 = (w - 8) // 4 + 1

    # conv1: per-(ib,jb) tap over the space-to-depth depth axis, banded over the
    # input w-block axis; jb bands are disjoint -> summed exactly; ib taps are
    # concatenated along K (matching the wrapper's xcat row concat).
    w1 = p["cw1"].astype(f32)
    o1 = w1.shape[0]
    w1t = w1.reshape(o1, c, 2, 4, 2, 4).transpose(2, 4, 3, 5, 1, 0)   # (ib,jb,dh,dw,c,o)
    w1t = w1t.reshape(2, 2, 16 * c, o1)                               # (ib,jb,d,o)
    sel1 = (jnp.arange(wb_in)[:, None, None] ==
            jnp.arange(ow1)[None, :, None] + jnp.arange(2)[None, None, :]).astype(f32)
    w1bd = jnp.einsum("wqj,bjdo->bjwdqo", sel1, w1t).reshape(2, 2, wb_in * 16 * c, ow1 * o1)
    w1cat = jnp.concatenate([w1bd[0, 0] + w1bd[0, 1],
                             w1bd[1, 0] + w1bd[1, 1]], axis=0)        # (2*576, ow1*32)
    b1t = jnp.tile(p["cb1"], ow1)[None, :]

    # conv2: banded along W (stride 2), H-taps folded into K; output columns
    # zero-padded to a 128-lane multiple so downstream concats stay aligned.
    w2 = p["cw2"].astype(f32)
    o2, c2, k2 = w2.shape[0], w2.shape[1], w2.shape[2]
    ow2 = (ow1 - k2) // 2 + 1
    n2 = ow2 * o2
    n2p = ((n2 + 127) // 128) * 128
    sel2 = (jnp.arange(ow1)[:, None, None] ==
            2 * jnp.arange(ow2)[None, :, None] + jnp.arange(k2)[None, None, :]).astype(f32)
    w2bd = jnp.einsum("wqj,ocij->iwcqo", sel2, w2).reshape(k2 * ow1 * c2, n2)
    w2bd = jnp.pad(w2bd, ((0, 0), (0, n2p - n2)))
    b2t = jnp.pad(jnp.tile(p["cb2"], ow2), (0, n2p - n2))[None, :]

    # conv3: 1x1 output -> single folded matmul; rows follow the padded conv2 layout.
    w3 = p["cw3"].astype(f32)
    o3, c3, k3 = w3.shape[0], w3.shape[1], w3.shape[2]
    w3bd = jnp.transpose(w3, (2, 3, 1, 0)).reshape(k3, ow2 * c3, o3)
    w3bd = jnp.pad(w3bd, ((0, 0), (0, n2p - n2), (0, 0))).reshape(k3 * n2p, o3)
    b3t = p["cb3"][None, :]

    # FC head; pad the action dim to a lane-dense 128 multiple (pad bias -1e30
    # so the padded softmax lanes contribute exactly 0).
    a_out = p["fw2"].shape[0]
    a_pad = ((a_out + 127) // 128) * 128
    fw2p = jnp.zeros((p["fw2"].shape[1], a_pad), f32).at[:, :a_out].set(p["fw2"].T)
    fb2p = jnp.full((1, a_pad), -1e30, f32).at[0, :a_out].set(p["fb2"])

    return dict(w1=w1cat.astype(dot_dtype), b1=b1t,
                w2=w2bd.astype(dot_dtype), b2=b2t,
                w3=w3bd.astype(dot_dtype), b3=b3t,
                fw1=p["fw1"].T.astype(dot_dtype), fb1=p["fb1"][None, :],
                fw2=fw2p.astype(dot_dtype), fb2=fb2p)


# ----------------------------- pure-JAX reference ---------------------------

def policy_forward_reference(p, x):
    dn = ("NCHW", "OIHW", "NCHW")
    hi = jax.lax.Precision.HIGHEST
    y = x
    for wname, bname, s in (("cw1", "cb1", 4), ("cw2", "cb2", 2), ("cw3", "cb3", 1)):
        y = jax.lax.conv_general_dilated(y, p[wname], (s, s), "VALID",
                                         dimension_numbers=dn, precision=hi)
        y = jax.nn.relu(y + p[bname][None, :, None, None])
    flat = y.reshape(y.shape[0], -1)
    h = jax.nn.relu(jnp.dot(flat, p["fw1"].T, precision=hi) + p["fb1"])
    logits = jnp.dot(h, p["fw2"].T, precision=hi) + p["fb2"]
    return jax.nn.softmax(logits, axis=-1)


# --------------------------------- main -------------------------------------

if __name__ == "__main__":
    key = jax.random.PRNGKey(0)
    kx, kp = jax.random.split(key)

    in_shape = (4, 36, 36)      # minimum spatial size for the 8/4 -> 4/2 -> 3/1 stack
    out_actions = 6
    batch = 16                  # small, but enough for a 2-step "parallel" grid
    batch_block = 8

    x = jax.random.normal(kx, (batch,) + in_shape, jnp.float32)
    params = init_params(kp, in_shape, out_actions)
    kparams = prepare_params(params, in_shape)

    fwd = jax.jit(functools.partial(policy_forward, out_actions=out_actions,
                                    batch_block=batch_block))
    probs, extra = fwd(kparams, x)
    probs = jax.block_until_ready(probs)

    assert probs.shape == (batch, out_actions)
    assert extra is None
    row_sums = jnp.sum(probs, axis=-1)
    assert bool(jnp.all(jnp.abs(row_sums - 1.0) < 1e-3)), row_sums

    ref = policy_forward_reference(params, x)
    # bf16 dot operands (f32 accumulation) vs the f32 HIGHEST reference.
    assert bool(jnp.max(jnp.abs(probs - ref)) < 3e-2), (probs, ref)

    print("KERNEL_OK")
</pallas_src>

<mosaic_0001>
module attributes {stable_mosaic.version = 11 : i64} {
  func.func @_policy_fused_kernel(%arg0: i32, %arg1: memref<8x8x1152xbf16, #tpu.memory_space<vmem>>, %arg2: memref<1152x256xbf16, #tpu.memory_space<vmem>>, %arg3: memref<1x256xf32, #tpu.memory_space<vmem>>, %arg4: memref<1024x256xbf16, #tpu.memory_space<vmem>>, %arg5: memref<1x256xf32, #tpu.memory_space<vmem>>, %arg6: memref<768x64xbf16, #tpu.memory_space<vmem>>, %arg7: memref<1x64xf32, #tpu.memory_space<vmem>>, %arg8: memref<64x512xbf16, #tpu.memory_space<vmem>>, %arg9: memref<1x512xf32, #tpu.memory_space<vmem>>, %arg10: memref<512x128xbf16, #tpu.memory_space<vmem>>, %arg11: memref<1x128xf32, #tpu.memory_space<vmem>>, %arg12: memref<8x128xf32, #tpu.memory_space<vmem>>, %arg13: memref<8x8x256xf32, #tpu.memory_space<vmem>>) attributes {dimension_semantics = [#tpu.dimension_semantics<parallel>], iteration_bounds = array<i64: 2>, scalar_prefetch = 0 : i64, scratch_operands = 1 : i64, tpu.core_type = #tpu.core_type<tc>, window_params = [{transform_indices = @transform_0, window_bounds = array<i64: 8, 8, 1152>}, {pipeline_mode = #tpu.pipeline_mode<synchronous>, transform_indices = @transform_1, window_bounds = array<i64: 1152, 256>}, {pipeline_mode = #tpu.pipeline_mode<synchronous>, transform_indices = @transform_2, window_bounds = array<i64: 1, 256>}, {pipeline_mode = #tpu.pipeline_mode<synchronous>, transform_indices = @transform_3, window_bounds = array<i64: 1024, 256>}, {pipeline_mode = #tpu.pipeline_mode<synchronous>, transform_indices = @transform_4, window_bounds = array<i64: 1, 256>}, {pipeline_mode = #tpu.pipeline_mode<synchronous>, transform_indices = @transform_5, window_bounds = array<i64: 768, 64>}, {pipeline_mode = #tpu.pipeline_mode<synchronous>, transform_indices = @transform_6, window_bounds = array<i64: 1, 64>}, {pipeline_mode = #tpu.pipeline_mode<synchronous>, transform_indices = @transform_7, window_bounds = array<i64: 64, 512>}, {pipeline_mode = #tpu.pipeline_mode<synchronous>, transform_indices = @transform_8, window_bounds = array<i64: 1, 512>}, {pipeline_mode = #tpu.pipeline_mode<synchronous>, transform_indices = @transform_9, window_bounds = array<i64: 512, 128>}, {pipeline_mode = #tpu.pipeline_mode<synchronous>, transform_indices = @transform_10, window_bounds = array<i64: 1, 128>}, {transform_indices = @transform_11, window_bounds = array<i64: 8, 128>}]} {
    %c0 = arith.constant 0 : index
    %c0_0 = arith.constant 0 : index
    %c0_1 = arith.constant 0 : index
    %0 = vector.load %arg1[%c0, %c0_0, %c0_1] : memref<8x8x1152xbf16, #tpu.memory_space<vmem>>, vector<8x8x1152xbf16>
    %1 = vector.shape_cast %0 : vector<8x8x1152xbf16> to vector<64x1152xbf16>
    %c0_2 = arith.constant 0 : index
    %c0_3 = arith.constant 0 : index
    %2 = vector.load %arg2[%c0_2, %c0_3] : memref<1152x256xbf16, #tpu.memory_space<vmem>>, vector<1152x256xbf16>
    %cst = arith.constant dense<0.000000e+00> : vector<64x256xf32>
    %3 = tpu.matmul %1, %2, %cst {dimension_numbers = #tpu.dot_dimension_numbers<[1], [0], [0], [1], [0, 0, 1, 1], [], []>} : vector<64x1152xbf16>, vector<1152x256xbf16>, vector<64x256xf32> -> vector<64x256xf32>
    %c0_4 = arith.constant 0 : index
    %c0_5 = arith.constant 0 : index
    %4 = vector.load %arg3[%c0_4, %c0_5] : memref<1x256xf32, #tpu.memory_space<vmem>>, vector<1x256xf32>
    %5 = vector.broadcast %4 : vector<1x256xf32> to vector<64x256xf32>
    %6 = arith.addf %3, %5 : vector<64x256xf32>
    %cst_6 = arith.constant 0.000000e+00 : f32
    %7 = vector.broadcast %cst_6 : f32 to vector<64x256xf32>
    %8 = arith.maximumf %6, %7 : vector<64x256xf32>
    %9 = vector.shape_cast %8 : vector<64x256xf32> to vector<8x8x256xf32>
    %c0_7 = arith.constant 0 : index
    %c0_8 = arith.constant 0 : index
    %c0_9 = arith.constant 0 : index
    %10 = vector.load %arg13[%c0_7, %c0_8, %c0_9] : memref<8x8x256xf32, #tpu.memory_space<vmem>>, vector<8x8x256xf32>
    tpu.vector_store %arg13[%c0_7, %c0_8, %c0_9], %9 {strides = array<i32>} : memref<8x8x256xf32, #tpu.memory_space<vmem>>, vector<8x8x256xf32>,
    %c0_10 = arith.constant 0 : index
    %c0_11 = arith.constant 0 : index
    %11 = vector.load %arg4[%c0_10, %c0_11] : memref<1024x256xbf16, #tpu.memory_space<vmem>>, vector<1024x256xbf16>
    %c0_12 = arith.constant 0 : index
    %c0_13 = arith.constant 0 : index
    %12 = vector.load %arg5[%c0_12, %c0_13] : memref<1x256xf32, #tpu.memory_space<vmem>>, vector<1x256xf32>
    %c0_14 = arith.constant 0 : index
    %c0_15 = arith.constant 0 : index
    %c0_16 = arith.constant 0 : index
    %13 = vector.load %arg13[%c0_14, %c0_15, %c0_16] : memref<8x8x256xf32, #tpu.memory_space<vmem>>, vector<8x1x256xf32>
    %14 = vector.shape_cast %13 : vector<8x1x256xf32> to vector<8x256xf32>
    %c0_17 = arith.constant 0 : index
    %c1 = arith.constant 1 : index
    %c0_18 = arith.constant 0 : index
    %15 = vector.load %arg13[%c0_17, %c1, %c0_18] : memref<8x8x256xf32, #tpu.memory_space<vmem>>, vector<8x1x256xf32>
    %16 = vector.shape_cast %15 : vector<8x1x256xf32> to vector<8x256xf32>
    %c0_19 = arith.constant 0 : index
    %c2 = arith.constant 2 : index
    %c0_20 = arith.constant 0 : index
    %17 = vector.load %arg13[%c0_19, %c2, %c0_20] : memref<8x8x256xf32, #tpu.memory_space<vmem>>, vector<8x1x256xf32>
    %18 = vector.shape_cast %17 : vector<8x1x256xf32> to vector<8x256xf32>
    %c0_21 = arith.constant 0 : index
    %c3 = arith.constant 3 : index
    %c0_22 = arith.constant 0 : index
    %19 = vector.load %arg13[%c0_21, %c3, %c0_22] : memref<8x8x256xf32, #tpu.memory_space<vmem>>, vector<8x1x256xf32>
    %20 = vector.shape_cast %19 : vector<8x1x256xf32> to vector<8x256xf32>
    %21 = tpu.concatenate %14, %16, %18, %20 in 1 : vector<8x256xf32>, vector<8x256xf32>, vector<8x256xf32>, vector<8x256xf32> -> vector<8x1024xf32>
    %22 = arith.truncf %21 : vector<8x1024xf32> to vector<8x1024xbf16>
    %cst_23 = arith.constant dense<0.000000e+00> : vector<8x256xf32>
    %23 = tpu.matmul %22, %11, %cst_23 {dimension_numbers = #tpu.dot_dimension_numbers<[1], [0], [0], [1], [0, 0, 1, 1], [], []>} : vector<8x1024xbf16>, vector<1024x256xbf16>, vector<8x256xf32> -> vector<8x256xf32>
    %24 = vector.broadcast %12 : vector<1x256xf32> to vector<8x256xf32>
    %25 = arith.addf %23, %24 : vector<8x256xf32>
    %cst_24 = arith.constant 0.000000e+00 : f32
    %26 = vector.broadcast %cst_24 : f32 to vector<8x256xf32>
    %27 = arith.maximumf %25, %26 : vector<8x256xf32>
    %c0_25 = arith.constant 0 : index
    %c2_26 = arith.constant 2 : index
    %c0_27 = arith.constant 0 : index
    %28 = vector.load %arg13[%c0_25, %c2_26, %c0_27] : memref<8x8x256xf32, #tpu.memory_space<vmem>>, vector<8x1x256xf32>
    %29 = vector.shape_cast %28 : vector<8x1x256xf32> to vector<8x256xf32>
    %c0_28 = arith.constant 0 : index
    %c3_29 = arith.constant 3 : index
    %c0_30 = arith.constant 0 : index
    %30 = vector.load %arg13[%c0_28, %c3_29, %c0_30] : memref<8x8x256xf32, #tpu.memory_space<vmem>>, vector<8x1x256xf32>
    %31 = vector.shape_cast %30 : vector<8x1x256xf32> to vector<8x256xf32>
    %c0_31 = arith.constant 0 : index
    %c4 = arith.constant 4 : index
    %c0_32 = arith.constant 0 : index
    %32 = vector.load %arg13[%c0_31, %c4, %c0_32] : memref<8x8x256xf32, #tpu.memory_space<vmem>>, vector<8x1x256xf32>
    %33 = vector.shape_cast %32 : vector<8x1x256xf32> to vector<8x256xf32>
    %c0_33 = arith.constant 0 : index
    %c5 = arith.constant 5 : index
    %c0_34 = arith.constant 0 : index
    %34 = vector.load %arg13[%c0_33, %c5, %c0_34] : memref<8x8x256xf32, #tpu.memory_space<vmem>>, vector<8x1x256xf32>
    %35 = vector.shape_cast %34 : vector<8x1x256xf32> to vector<8x256xf32>
    %36 = tpu.concatenate %29, %31, %33, %35 in 1 : vector<8x256xf32>, vector<8x256xf32>, vector<8x256xf32>, vector<8x256xf32> -> vector<8x1024xf32>
    %37 = arith.truncf %36 : vector<8x1024xf32> to vector<8x1024xbf16>
    %cst_35 = arith.constant dense<0.000000e+00> : vector<8x256xf32>
    %38 = tpu.matmul %37, %11, %cst_35 {dimension_numbers = #tpu.dot_dimension_numbers<[1], [0], [0], [1], [0, 0, 1, 1], [], []>} : vector<8x1024xbf16>, vector<1024x256xbf16>, vector<8x256xf32> -> vector<8x256xf32>
    %39 = vector.broadcast %12 : vector<1x256xf32> to vector<8x256xf32>
    %40 = arith.addf %38, %39 : vector<8x256xf32>
    %cst_36 = arith.constant 0.000000e+00 : f32
    %41 = vector.broadcast %cst_36 : f32 to vector<8x256xf32>
    %42 = arith.maximumf %40, %41 : vector<8x256xf32>
    %c0_37 = arith.constant 0 : index
    %c4_38 = arith.constant 4 : index
    %c0_39 = arith.constant 0 : index
    %43 = vector.load %arg13[%c0_37, %c4_38, %c0_39] : memref<8x8x256xf32, #tpu.memory_space<vmem>>, vector<8x1x256xf32>
    %44 = vector.shape_cast %43 : vector<8x1x256xf32> to vector<8x256xf32>
    %c0_40 = arith.constant 0 : index
    %c5_41 = arith.constant 5 : index
    %c0_42 = arith.constant 0 : index
    %45 = vector.load %arg13[%c0_40, %c5_41, %c0_42] : memref<8x8x256xf32, #tpu.memory_space<vmem>>, vector<8x1x256xf32>
    %46 = vector.shape_cast %45 : vector<8x1x256xf32> to vector<8x256xf32>
    %c0_43 = arith.constant 0 : index
    %c6 = arith.constant 6 : index
    %c0_44 = arith.constant 0 : index
    %47 = vector.load %arg13[%c0_43, %c6, %c0_44] : memref<8x8x256xf32, #tpu.memory_space<vmem>>, vector<8x1x256xf32>
    %48 = vector.shape_cast %47 : vector<8x1x256xf32> to vector<8x256xf32>
    %c0_45 = arith.constant 0 : index
    %c7 = arith.constant 7 : index
    %c0_46 = arith.constant 0 : index
    %49 = vector.load %arg13[%c0_45, %c7, %c0_46] : memref<8x8x256xf32, #tpu.memory_space<vmem>>, vector<8x1x256xf32>
    %50 = vector.shape_cast %49 : vector<8x1x256xf32> to vector<8x256xf32>
    %51 = tpu.concatenate %44, %46, %48, %50 in 1 : vector<8x256xf32>, vector<8x256xf32>, vector<8x256xf32>, vector<8x256xf32> -> vector<8x1024xf32>
    %52 = arith.truncf %51 : vector<8x1024xf32> to vector<8x1024xbf16>
    %cst_47 = arith.constant dense<0.000000e+00> : vector<8x256xf32>
    %53 = tpu.matmul %52, %11, %cst_47 {dimension_numbers = #tpu.dot_dimension_numbers<[1], [0], [0], [1], [0, 0, 1, 1], [], []>} : vector<8x1024xbf16>, vector<1024x256xbf16>, vector<8x256xf32> -> vector<8x256xf32>
    %54 = vector.broadcast %12 : vector<1x256xf32> to vector<8x256xf32>
    %55 = arith.addf %53, %54 : vector<8x256xf32>
    %cst_48 = arith.constant 0.000000e+00 : f32
    %56 = vector.broadcast %cst_48 : f32 to vector<8x256xf32>
    %57 = arith.maximumf %55, %56 : vector<8x256xf32>
    %58 = tpu.concatenate %27, %42, %57 in 1 : vector<8x256xf32>, vector<8x256xf32>, vector<8x256xf32> -> vector<8x768xf32>
    %59 = arith.truncf %58 : vector<8x768xf32> to vector<8x768xbf16>
    %c0_49 = arith.constant 0 : index
    %c0_50 = arith.constant 0 : index
    %60 = vector.load %arg6[%c0_49, %c0_50] : memref<768x64xbf16, #tpu.memory_space<vmem>>, vector<768x64xbf16>
    %cst_51 = arith.constant dense<0.000000e+00> : vector<8x64xf32>
    %61 = tpu.matmul %59, %60, %cst_51 {dimension_numbers = #tpu.dot_dimension_numbers<[1], [0], [0], [1], [0, 0, 1, 1], [], []>} : vector<8x768xbf16>, vector<768x64xbf16>, vector<8x64xf32> -> vector<8x64xf32>
    %c0_52 = arith.constant 0 : index
    %c0_53 = arith.constant 0 : index
    %62 = vector.load %arg7[%c0_52, %c0_53] : memref<1x64xf32, #tpu.memory_space<vmem>>, vector<1x64xf32>
    %63 = vector.broadcast %62 : vector<1x64xf32> to vector<8x64xf32>
    %64 = arith.addf %61, %63 : vector<8x64xf32>
    %cst_54 = arith.constant 0.000000e+00 : f32
    %65 = vector.broadcast %cst_54 : f32 to vector<8x64xf32>
    %66 = arith.maximumf %64, %65 : vector<8x64xf32>
    %67 = arith.truncf %66 : vector<8x64xf32> to vector<8x64xbf16>
    %c0_55 = arith.constant 0 : index
    %c0_56 = arith.constant 0 : index
    %68 = vector.load %arg8[%c0_55, %c0_56] : memref<64x512xbf16, #tpu.memory_space<vmem>>, vector<64x512xbf16>
    %cst_57 = arith.constant dense<0.000000e+00> : vector<8x512xf32>
    %69 = tpu.matmul %67, %68, %cst_57 {dimension_numbers = #tpu.dot_dimension_numbers<[1], [0], [0], [1], [0, 0, 1, 1], [], []>} : vector<8x64xbf16>, vector<64x512xbf16>, vector<8x512xf32> -> vector<8x512xf32>
    %c0_58 = arith.constant 0 : index
    %c0_59 = arith.constant 0 : index
    %70 = vector.load %arg9[%c0_58, %c0_59] : memref<1x512xf32, #tpu.memory_space<vmem>>, vector<1x512xf32>
    %71 = vector.broadcast %70 : vector<1x512xf32> to vector<8x512xf32>
    %72 = arith.addf %69, %71 : vector<8x512xf32>
    %cst_60 = arith.constant 0.000000e+00 : f32
    %73 = vector.broadcast %cst_60 : f32 to vector<8x512xf32>
    %74 = arith.maximumf %72, %73 : vector<8x512xf32>
    %75 = arith.truncf %74 : vector<8x512xf32> to vector<8x512xbf16>
    %c0_61 = arith.constant 0 : index
    %c0_62 = arith.constant 0 : index
    %76 = vector.load %arg10[%c0_61, %c0_62] : memref<512x128xbf16, #tpu.memory_space<vmem>>, vector<512x128xbf16>
    %cst_63 = arith.constant dense<0.000000e+00> : vector<8x128xf32>
    %77 = tpu.matmul %75, %76, %cst_63 {dimension_numbers = #tpu.dot_dimension_numbers<[1], [0], [0], [1], [0, 0, 1, 1], [], []>} : vector<8x512xbf16>, vector<512x128xbf16>, vector<8x128xf32> -> vector<8x128xf32>
    %c0_64 = arith.constant 0 : index
    %c0_65 = arith.constant 0 : index
    %78 = vector.load %arg11[%c0_64, %c0_65] : memref<1x128xf32, #tpu.memory_space<vmem>>, vector<1x128xf32>
    %79 = vector.broadcast %78 : vector<1x128xf32> to vector<8x128xf32>
    %80 = arith.addf %77, %79 : vector<8x128xf32>
    %cst_66 = arith.constant dense<0xFF800000> : vector<8xf32>
    %81 = vector.multi_reduction <maximumf>, %80, %cst_66 [1] : vector<8x128xf32> to vector<8xf32>
    %82 = vector.shape_cast %81 : vector<8xf32> to vector<8x1xf32>
    %83 = vector.broadcast %82 : vector<8x1xf32> to vector<8x128xf32>
    %84 = arith.subf %80, %83 : vector<8x128xf32>
    %85 = math.exp %84 : vector<8x128xf32>
    %cst_67 = arith.constant dense<0.000000e+00> : vector<8xf32>
    %86 = vector.multi_reduction <add>, %85, %cst_67 [1] : vector<8x128xf32> to vector<8xf32>
    %87 = vector.shape_cast %86 : vector<8xf32> to vector<8x1xf32>
    %88 = tpu.reciprocal %87 : vector<8x1xf32> -> vector<8x1xf32>
    %89 = vector.broadcast %88 : vector<8x1xf32> to vector<8x128xf32>
    %90 = arith.mulf %85, %89 : vector<8x128xf32>
    %c0_68 = arith.constant 0 : index
    %c0_69 = arith.constant 0 : index
    %91 = vector.load %arg12[%c0_68, %c0_69] : memref<8x128xf32, #tpu.memory_space<vmem>>, vector<8x128xf32>
    tpu.vector_store %arg12[%c0_68, %c0_69], %90 {strides = array<i32>} : memref<8x128xf32, #tpu.memory_space<vmem>>, vector<8x128xf32>,
    return
  }
  func.func @transform_0(%arg0: i32) -> (i32, i32, i32) {
    %c0_i32 = arith.constant 0 : i32
    %c0_i32_0 = arith.constant 0 : i32
    %c0_i32_1 = arith.constant 0 : i32
    return %arg0, %c0_i32, %c0_i32_0 : i32, i32, i32
  }
  func.func @transform_1(%arg0: i32) -> (i32, i32) {
    %c0_i32 = arith.constant 0 : i32
    %c0_i32_0 = arith.constant 0 : i32
    %c0_i32_1 = arith.constant 0 : i32
    return %c0_i32, %c0_i32_0 : i32, i32
  }
  func.func @transform_2(%arg0: i32) -> (i32, i32) {
    %c0_i32 = arith.constant 0 : i32
    %c0_i32_0 = arith.constant 0 : i32
    %c0_i32_1 = arith.constant 0 : i32
    return %c0_i32, %c0_i32_0 : i32, i32
  }
  func.func @transform_3(%arg0: i32) -> (i32, i32) {
    %c0_i32 = arith.constant 0 : i32
    %c0_i32_0 = arith.constant 0 : i32
    %c0_i32_1 = arith.constant 0 : i32
    return %c0_i32, %c0_i32_0 : i32, i32
  }
  func.func @transform_4(%arg0: i32) -> (i32, i32) {
    %c0_i32 = arith.constant 0 : i32
    %c0_i32_0 = arith.constant 0 : i32
    %c0_i32_1 = arith.constant 0 : i32
    return %c0_i32, %c0_i32_0 : i32, i32
  }
  func.func @transform_5(%arg0: i32) -> (i32, i32) {
    %c0_i32 = arith.constant 0 : i32
    %c0_i32_0 = arith.constant 0 : i32
    %c0_i32_1 = arith.constant 0 : i32
    return %c0_i32, %c0_i32_0 : i32, i32
  }
  func.func @transform_6(%arg0: i32) -> (i32, i32) {
    %c0_i32 = arith.constant 0 : i32
    %c0_i32_0 = arith.constant 0 : i32
    %c0_i32_1 = arith.constant 0 : i32
    return %c0_i32, %c0_i32_0 : i32, i32
  }
  func.func @transform_7(%arg0: i32) -> (i32, i32) {
    %c0_i32 = arith.constant 0 : i32
    %c0_i32_0 = arith.constant 0 : i32
    %c0_i32_1 = arith.constant 0 : i32
    return %c0_i32, %c0_i32_0 : i32, i32
  }
  func.func @transform_8(%arg0: i32) -> (i32, i32) {
    %c0_i32 = arith.constant 0 : i32
    %c0_i32_0 = arith.constant 0 : i32
    %c0_i32_1 = arith.constant 0 : i32
    return %c0_i32, %c0_i32_0 : i32, i32
  }
  func.func @transform_9(%arg0: i32) -> (i32, i32) {
    %c0_i32 = arith.constant 0 : i32
    %c0_i32_0 = arith.constant 0 : i32
    %c0_i32_1 = arith.constant 0 : i32
    return %c0_i32, %c0_i32_0 : i32, i32
  }
  func.func @transform_10(%arg0: i32) -> (i32, i32) {
    %c0_i32 = arith.constant 0 : i32
    %c0_i32_0 = arith.constant 0 : i32
    %c0_i32_1 = arith.constant 0 : i32
    return %c0_i32, %c0_i32_0 : i32, i32
  }
  func.func @transform_11(%arg0: i32) -> (i32, i32) {
    %c0_i32 = arith.constant 0 : i32
    %c0_i32_0 = arith.constant 0 : i32
    return %arg0, %c0_i32 : i32, i32
  }
}

</mosaic_0001>

<llo_original>
// kernel: policy_forward.1
$region0: #{policy_forward.1}
  #allocation0 [shape = 'u32[]', space=smem, size = 0x4, offset = 0x4, fixed_abs, tag = 'smem constant byte address 0x4 - core index']
  #allocation1 [shape = 'u32[72,128]{1,0:T(1,128)}', space=vmem, size = 0x9000, scoped, tag = 'internal scratch']
  #allocation2 [shape = 'f32[8,8,256]{2,1,0:T(8,128)}', space=vmem, size = 0x10000, scoped, tag = 'scratch operand']
  %s0 = inlined_call_operand.vmem [shape: bf16[16,8,1152], index: 0, kind: input, shape index: {}]
  %s1 = inlined_call_operand.vmem [shape: bf16[1152,256], index: 1, kind: input, shape index: {}]
  %s2 = inlined_call_operand.vmem [shape: f32[1,256], index: 2, kind: input, shape index: {}]
  %s3 = inlined_call_operand.vmem [shape: bf16[1024,256], index: 3, kind: input, shape index: {}]
  %s4 = inlined_call_operand.vmem [shape: f32[1,256], index: 4, kind: input, shape index: {}]
  %s5 = inlined_call_operand.vmem [shape: bf16[768,64], index: 5, kind: input, shape index: {}]
  %s6 = inlined_call_operand.vmem [shape: f32[1,64], index: 6, kind: input, shape index: {}]
  %s7 = inlined_call_operand.vmem [shape: bf16[64,512], index: 7, kind: input, shape index: {}]
  %s8 = inlined_call_operand.vmem [shape: f32[1,512], index: 8, kind: input, shape index: {}]
  %s9 = inlined_call_operand.vmem [shape: bf16[512,128], index: 9, kind: input, shape index: {}]
  %s10 = inlined_call_operand.vmem [shape: f32[1,128], index: 10, kind: input, shape index: {}]
  %s11 = inlined_call_operand.vmem [shape: f32[16,128], index: 11, kind: output, shape index: {}]
  %s12 = sld [smem:[#allocation0]]
  $region77: #{policy_forward.1} parent=0
    _
  %s14 = ssub.s32 1, %s12
  %s15 = scalar_select 0, %s14, %s12
  loop: start=0, step=1, limit=4
  $region2: #{policy_forward.1} parent=0 // loop_pre_header
    _
  $region3: #{policy_forward.1} parent=0 // loop_header
    %s17 = sphi 0, %s21
    %p18 = scmp.ge.s32.totalorder %s17, 4
    %s27 = sphi 0, %s29
    %s30 = sphi 0, %s27
    %s31 = sphi 0, %s30
    %s47 = sphi 0, %s31
    %s51 = sphi 0, %s51
    %s53 = sphi 0, %s51
    %s54 = sphi 0, %s53
    %s68 = sphi 0, %s54
    %s72 = sphi 0, %s72
    %s74 = sphi 0, %s72
    %s75 = sphi 0, %s74
    %s89 = sphi 0, %s75
    %s93 = sphi 0, %s93
    %s95 = sphi 0, %s93
    %s96 = sphi 0, %s95
    %s110 = sphi 0, %s96
    %s114 = sphi 0, %s114
    %s116 = sphi 0, %s114
    %s117 = sphi 0, %s116
    %s131 = sphi 0, %s117
    %s135 = sphi 0, %s135
    %s137 = sphi 0, %s135
    %s138 = sphi 0, %s137
    %s152 = sphi 0, %s138
    %s156 = sphi 0, %s156
    %s158 = sphi 0, %s156
    %s159 = sphi 0, %s158
    %s173 = sphi 0, %s159
    %s177 = sphi 0, %s177
    %s179 = sphi 0, %s177
    %s180 = sphi 0, %s179
    %s194 = sphi 0, %s180
    %s198 = sphi 0, %s198
    %s200 = sphi 0, %s198
    %s201 = sphi 0, %s200
    %s215 = sphi 0, %s201
    %s219 = sphi 0, %s219
    %s221 = sphi 0, %s219
    %s222 = sphi 0, %s221
    %s236 = sphi 0, %s222
    %s240 = sphi 0, %s240
    %s242 = sphi 0, %s240
    %s243 = sphi 0, %s242
    %s257 = sphi 0, %s243
    %s263 = sphi 0, %s265
    %s266 = sphi 0, %s263
    %s267 = sphi 0, %s266
    %s283 = sphi 0, %s267
  $region4: #{policy_forward.1} parent=0 // loop_header_branch
    %20 = sbr.rel (%p18) target = $region8
  $region5: #{policy_forward.1} parent=0 // loop_body
    %s22 = ssub.s32 %s17, 1
    %s23 = ssub.s32 %s17, 2
    %s24 = sadd.s32 %s17, 1
    %s25 = ssub.s32 %s17, %s24
    %p26 = scmp.eq.s32.totalorder %s25, 0
    %s28 = sadd.s32 %s27, 1
    %s29 = scalar_select %p26, %s27, %s28
    %p32 = pneg %p26
    %p33 = scmp.eq.s32.totalorder %s17, 1
    %p34 = por %p32, %p33
    %p35 = scmp.ne.s32.totalorder %s27, %s30
    %p36 = scmp.eq.s32.totalorder %s17, 0
    %p37 = por %p35, %p36
    %p38 = scmp.ne.s32.totalorder %s27, %s30
    %p39 = scmp.eq.s32.totalorder %s22, 1
    %p40 = por %p38, %p39
    %p41 = scmp.ne.s32.totalorder %s30, %s31
    %p42 = scmp.eq.s32.totalorder %s22, 0
    %p43 = por %p41, %p42
    %p44 = scmp.ne.s32.totalorder %s30, %s31
    %p45 = scmp.eq.s32.totalorder %s23, 1
    %p46 = por %p44, %p45
    %p48 = scmp.ne.s32.totalorder %s31, %s47
    %p49 = scmp.eq.s32.totalorder %s23, 0
    %p50 = por %p48, %p49
    %s52 = sadd.s32 %s51, 1
    %p55 = scmp.eq.s32.totalorder %s17, 1
    %p56 = scmp.ne.s32.totalorder %s51, %s53
    %p57 = scmp.eq.s32.totalorder %s17, 0
    %p58 = por %p56, %p57
    %p59 = scmp.ne.s32.totalorder %s51, %s53
    %p60 = scmp.eq.s32.totalorder %s22, 1
    %p61 = por %p59, %p60
    %p62 = scmp.ne.s32.totalorder %s53, %s54
    %p63 = scmp.eq.s32.totalorder %s22, 0
    %p64 = por %p62, %p63
    %p65 = scmp.ne.s32.totalorder %s53, %s54
    %p66 = scmp.eq.s32.totalorder %s23, 1
    %p67 = por %p65, %p66
    %p69 = scmp.ne.s32.totalorder %s54, %s68
    %p70 = scmp.eq.s32.totalorder %s23, 0
    %p71 = por %p69, %p70
    %s73 = sadd.s32 %s72, 1
    %p76 = scmp.eq.s32.totalorder %s17, 1
    %p77 = scmp.ne.s32.totalorder %s72, %s74
    %p78 = scmp.eq.s32.totalorder %s17, 0
    %p79 = por %p77, %p78
    %p80 = scmp.ne.s32.totalorder %s72, %s74
    %p81 = scmp.eq.s32.totalorder %s22, 1
    %p82 = por %p80, %p81
    %p83 = scmp.ne.s32.totalorder %s74, %s75
    %p84 = scmp.eq.s32.totalorder %s22, 0
    %p85 = por %p83, %p84
    %p86 = scmp.ne.s32.totalorder %s74, %s75
    %p87 = scmp.eq.s32.totalorder %s23, 1
    %p88 = por %p86, %p87
    %p90 = scmp.ne.s32.totalorder %s75, %s89
    %p91 = scmp.eq.s32.totalorder %s23, 0
    %p92 = por %p90, %p91
    %s94 = sadd.s32 %s93, 1
    %p97 = scmp.eq.s32.totalorder %s17, 1
    %p98 = scmp.ne.s32.totalorder %s93, %s95
    %p99 = scmp.eq.s32.totalorder %s17, 0
    %p100 = por %p98, %p99
    %p101 = scmp.ne.s32.totalorder %s93, %s95
    %p102 = scmp.eq.s32.totalorder %s22, 1
    %p103 = por %p101, %p102
    %p104 = scmp.ne.s32.totalorder %s95, %s96
    %p105 = scmp.eq.s32.totalorder %s22, 0
    %p106 = por %p104, %p105
    %p107 = scmp.ne.s32.totalorder %s95, %s96
    %p108 = scmp.eq.s32.totalorder %s23, 1
    %p109 = por %p107, %p108
    %p111 = scmp.ne.s32.totalorder %s96, %s110
    %p112 = scmp.eq.s32.totalorder %s23, 0
    %p113 = por %p111, %p112
    %s115 = sadd.s32 %s114, 1
    %p118 = scmp.eq.s32.totalorder %s17, 1
    %p119 = scmp.ne.s32.totalorder %s114, %s116
    %p120 = scmp.eq.s32.totalorder %s17, 0
    %p121 = por %p119, %p120
    %p122 = scmp.ne.s32.totalorder %s114, %s116
    %p123 = scmp.eq.s32.totalorder %s22, 1
    %p124 = por %p122, %p123
    %p125 = scmp.ne.s32.totalorder %s116, %s117
    %p126 = scmp.eq.s32.totalorder %s22, 0
    %p127 = por %p125, %p126
    %p128 = scmp.ne.s32.totalorder %s116, %s117
    %p129 = scmp.eq.s32.totalorder %s23, 1
    %p130 = por %p128, %p129
    %p132 = scmp.ne.s32.totalorder %s117, %s131
    %p133 = scmp.eq.s32.totalorder %s23, 0
    %p134 = por %p132, %p133
    %s136 = sadd.s32 %s135, 1
    %p139 = scmp.eq.s32.totalorder %s17, 1
    %p140 = scmp.ne.s32.totalorder %s135, %s137
    %p141 = scmp.eq.s32.totalorder %s17, 0
    %p142 = por %p140, %p141
    %p143 = scmp.ne.s32.totalorder %s135, %s137
    %p144 = scmp.eq.s32.totalorder %s22, 1
    %p145 = por %p143, %p144
    %p146 = scmp.ne.s32.totalorder %s137, %s138
    %p147 = scmp.eq.s32.totalorder %s22, 0
    %p148 = por %p146, %p147
    %p149 = scmp.ne.s32.totalorder %s137, %s138
    %p150 = scmp.eq.s32.totalorder %s23, 1
    %p151 = por %p149, %p150
    %p153 = scmp.ne.s32.totalorder %s138, %s152
    %p154 = scmp.eq.s32.totalorder %s23, 0
    %p155 = por %p153, %p154
    %s157 = sadd.s32 %s156, 1
    %p160 = scmp.eq.s32.totalorder %s17, 1
    %p161 = scmp.ne.s32.totalorder %s156, %s158
    %p162 = scmp.eq.s32.totalorder %s17, 0
    %p163 = por %p161, %p162
    %p164 = scmp.ne.s32.totalorder %s156, %s158
    %p165 = scmp.eq.s32.totalorder %s22, 1
    %p166 = por %p164, %p165
    %p167 = scmp.ne.s32.totalorder %s158, %s159
    %p168 = scmp.eq.s32.totalorder %s22, 0
    %p169 = por %p167, %p168
    %p170 = scmp.ne.s32.totalorder %s158, %s159
    %p171 = scmp.eq.s32.totalorder %s23, 1
    %p172 = por %p170, %p171
    %p174 = scmp.ne.s32.totalorder %s159, %s173
    %p175 = scmp.eq.s32.totalorder %s23, 0
    %p176 = por %p174, %p175
    %s178 = sadd.s32 %s177, 1
    %p181 = scmp.eq.s32.totalorder %s17, 1
    %p182 = scmp.ne.s32.totalorder %s177, %s179
    %p183 = scmp.eq.s32.totalorder %s17, 0
    %p184 = por %p182, %p183
    %p185 = scmp.ne.s32.totalorder %s177, %s179
    %p186 = scmp.eq.s32.totalorder %s22, 1
    %p187 = por %p185, %p186
    %p188 = scmp.ne.s32.totalorder %s179, %s180
    %p189 = scmp.eq.s32.totalorder %s22, 0
    %p190 = por %p188, %p189
    %p191 = scmp.ne.s32.totalorder %s179, %s180
    %p192 = scmp.eq.s32.totalorder %s23, 1
    %p193 = por %p191, %p192
    %p195 = scmp.ne.s32.totalorder %s180, %s194
    %p196 = scmp.eq.s32.totalorder %s23, 0
    %p197 = por %p195, %p196
    %s199 = sadd.s32 %s198, 1
    %p202 = scmp.eq.s32.totalorder %s17, 1
    %p203 = scmp.ne.s32.totalorder %s198, %s200
    %p204 = scmp.eq.s32.totalorder %s17, 0
    %p205 = por %p203, %p204
    %p206 = scmp.ne.s32.totalorder %s198, %s200
    %p207 = scmp.eq.s32.totalorder %s22, 1
    %p208 = por %p206, %p207
    %p209 = scmp.ne.s32.totalorder %s200, %s201
    %p210 = scmp.eq.s32.totalorder %s22, 0
    %p211 = por %p209, %p210
    %p212 = scmp.ne.s32.totalorder %s200, %s201
    %p213 = scmp.eq.s32.totalorder %s23, 1
    %p214 = por %p212, %p213
    %p216 = scmp.ne.s32.totalorder %s201, %s215
    %p217 = scmp.eq.s32.totalorder %s23, 0
    %p218 = por %p216, %p217
    %s220 = sadd.s32 %s219, 1
    %p223 = scmp.eq.s32.totalorder %s17, 1
    %p224 = scmp.ne.s32.totalorder %s219, %s221
    %p225 = scmp.eq.s32.totalorder %s17, 0
    %p226 = por %p224, %p225
    %p227 = scmp.ne.s32.totalorder %s219, %s221
    %p228 = scmp.eq.s32.totalorder %s22, 1
    %p229 = por %p227, %p228
    %p230 = scmp.ne.s32.totalorder %s221, %s222
    %p231 = scmp.eq.s32.totalorder %s22, 0
    %p232 = por %p230, %p231
    %p233 = scmp.ne.s32.totalorder %s221, %s222
    %p234 = scmp.eq.s32.totalorder %s23, 1
    %p235 = por %p233, %p234
    %p237 = scmp.ne.s32.totalorder %s222, %s236
    %p238 = scmp.eq.s32.totalorder %s23, 0
    %p239 = por %p237, %p238
    %s241 = sadd.s32 %s240, 1
    %p244 = scmp.eq.s32.totalorder %s17, 1
    %p245 = scmp.ne.s32.totalorder %s240, %s242
    %p246 = scmp.eq.s32.totalorder %s17, 0
    %p247 = por %p245, %p246
    %p248 = scmp.ne.s32.totalorder %s240, %s242
    %p249 = scmp.eq.s32.totalorder %s22, 1
    %p250 = por %p248, %p249
    %p251 = scmp.ne.s32.totalorder %s242, %s243
    %p252 = scmp.eq.s32.totalorder %s22, 0
    %p253 = por %p251, %p252
    %p254 = scmp.ne.s32.totalorder %s242, %s243
    %p255 = scmp.eq.s32.totalorder %s23, 1
    %p256 = por %p254, %p255
    %p258 = scmp.ne.s32.totalorder %s243, %s257
    %p259 = scmp.eq.s32.totalorder %s23, 0
    %p260 = por %p258, %p259
    %s261 = ssub.s32 %s17, %s24
    %p262 = scmp.eq.s32.totalorder %s261, 0
    %s264 = sadd.s32 %s263, 1
    %s265 = scalar_select %p262, %s263, %s264
    %p268 = pneg %p262
    %p269 = scmp.eq.s32.totalorder %s17, 1
    %p270 = por %p268, %p269
    %p271 = scmp.ne.s32.totalorder %s263, %s266
    %p272 = scmp.eq.s32.totalorder %s17, 0
    %p273 = por %p271, %p272
    %p274 = scmp.ne.s32.totalorder %s263, %s266
    %p275 = scmp.eq.s32.totalorder %s22, 1
    %p276 = por %p274, %p275
    %p277 = scmp.ne.s32.totalorder %s266, %s267
    %p278 = scmp.eq.s32.totalorder %s22, 0
    %p279 = por %p277, %p278
    %p280 = scmp.ne.s32.totalorder %s266, %s267
    %p281 = scmp.eq.s32.totalorder %s23, 1
    %p282 = por %p280, %p281
    %p284 = scmp.ne.s32.totalorder %s267, %s283
    %p285 = scmp.eq.s32.totalorder %s23, 0
    %p286 = por %p284, %p285
    %p287 = scmp.le.s32.totalorder 1, %s17
    %p288 = scmp.lt.s32.totalorder %s17, 3
    %p289 = pnand %p287, %p288
    %p290 = pneg %p289
    // Predicated region
    $region9: #{policy_forward.1} parent=5 // pred_check
      _
    $region10: #{policy_forward.1} parent=5 // pred_check_branch
      %292 = sbr.rel (%p289) target = $region12
    $region11: #{policy_forward.1} parent=5 // pred_region
      %s293 = ssub.s32 %s17, 1
      // Predicated region
      $region13: #{policy_forward.1} parent=11 // pred_check
        %p294 = pneg %p64
      $region14: #{policy_forward.1} parent=11 // pred_check_branch
        %296 = sbr.rel (%p294) target = $region16
      $region15: #{policy_forward.1} parent=11 // pred_region
        _
      $region16: #{policy_forward.1} parent=11 // pred_fallthru
        _
      // Predicated region
      $region17: #{policy_forward.1} parent=11 // pred_check
        %p297 = pneg %p85
      $region18: #{policy_forward.1} parent=11 // pred_check_branch
        %299 = sbr.rel (%p297) target = $region20
      $region19: #{policy_forward.1} parent=11 // pred_region
        _
      $region20: #{policy_forward.1} parent=11 // pred_fallthru
        _
      // Predicated region
      $region21: #{policy_forward.1} parent=11 // pred_check
        %p300 = pneg %p106
      $region22: #{policy_forward.1} parent=11 // pred_check_branch
        %302 = sbr.rel (%p300) target = $region24
      $region23: #{policy_forward.1} parent=11 // pred_region
        _
      $region24: #{policy_forward.1} parent=11 // pred_fallthru
        _
      // Predicated region
      $region25: #{policy_forward.1} parent=11 // pred_check
        %p303 = pneg %p127
      $region26: #{policy_forward.1} parent=11 // pred_check_branch
        %305 = sbr.rel (%p303) target = $region28
      $region27: #{policy_forward.1} parent=11 // pred_region
        _
      $region28: #{policy_forward.1} parent=11 // pred_fallthru
        _
      // Predicated region
      $region29: #{policy_forward.1} parent=11 // pred_check
        %p306 = pneg %p148
      $region30: #{policy_forward.1} parent=11 // pred_check_branch
        %308 = sbr.rel (%p306) target = $region32
      $region31: #{policy_forward.1} parent=11 // pred_region
        _
      $region32: #{policy_forward.1} parent=11 // pred_fallthru
        _
      // Predicated region
      $region33: #{policy_forward.1} parent=11 // pred_check
        %p309 = pneg %p169
      $region34: #{policy_forward.1} parent=11 // pred_check_branch
        %311 = sbr.rel (%p309) target = $region36
      $region35: #{policy_forward.1} parent=11 // pred_region
        _
      $region36: #{policy_forward.1} parent=11 // pred_fallthru
        _
      // Predicated region
      $region37: #{policy_forward.1} parent=11 // pred_check
        %p312 = pneg %p190
      $region38: #{policy_forward.1} parent=11 // pred_check_branch
        %314 = sbr.rel (%p312) target = $region40
      $region39: #{policy_forward.1} parent=11 // pred_region
        _
      $region40: #{policy_forward.1} parent=11 // pred_fallthru
        _
      // Predicated region
      $region41: #{policy_forward.1} parent=11 // pred_check
        %p315 = pneg %p211
      $region42: #{policy_forward.1} parent=11 // pred_check_branch
        %317 = sbr.rel (%p315) target = $region44
      $region43: #{policy_forward.1} parent=11 // pred_region
        _
      $region44: #{policy_forward.1} parent=11 // pred_fallthru
        _
      // Predicated region
      $region45: #{policy_forward.1} parent=11 // pred_check
        %p318 = pneg %p232
      $region46: #{policy_forward.1} parent=11 // pred_check_branch
        %320 = sbr.rel (%p318) target = $region48
      $region47: #{policy_forward.1} parent=11 // pred_region
        _
      $region48: #{policy_forward.1} parent=11 // pred_fallthru
        _
      // Predicated region
      $region49: #{policy_forward.1} parent=11 // pred_check
        %p321 = pneg %p253
      $region50: #{policy_forward.1} parent=11 // pred_check_branch
        %323 = sbr.rel (%p321) target = $region52
      $region51: #{policy_forward.1} parent=11 // pred_region
        _
      $region52: #{policy_forward.1} parent=11 // pred_fallthru
        _
    $region12: #{policy_forward.1} parent=5 // pred_fallthru
      _
    %p324 = scmp.lt.s32.totalorder %s17, 2
    // Predicated region
    $region53: #{policy_forward.1} parent=5 // pred_check
      %p325 = pneg %p324
    $region54: #{policy_forward.1} parent=5 // pred_check_branch
      %327 = sbr.rel (%p325) target = $region56
    $region55: #{policy_forward.1} parent=5 // pred_region
      // Predicated region
      $region57: #{policy_forward.1} parent=55 // pred_check
        %p328 = pneg %p37
      $region58: #{policy_forward.1} parent=55 // pred_check_branch
        %330 = sbr.rel (%p328) target = $region60
      $region59: #{policy_forward.1} parent=55 // pred_region
        %s331 = smul.u32 8, %s17
        %p332 = scmp.lt.s32.totalorder %s331, 15
        %s333 = scalar_select %p332, %s331, 15
        %s334 = smul.addr %s333, 9
        %s335 = smul.addr %s334, 4
        %s336 = scalar_lea.vmem %s0, %s335
        %s337 = smul.u32 8, %s17
      $region60: #{policy_forward.1} parent=55 // pred_fallthru
        _
    $region56: #{policy_forward.1} parent=5 // pred_fallthru
      _
    %p338 = scmp.le.s32.totalorder 1, %s17
    %p339 = scmp.lt.s32.totalorder %s17, 3
    %p340 = pnand %p338, %p339
    %p341 = pneg %p340
    // Predicated region
    $region61: #{policy_forward.1} parent=5 // pred_check
      _
    $region62: #{policy_forward.1} parent=5 // pred_check_branch
      %343 = sbr.rel (%p340) target = $region64
    $region63: #{policy_forward.1} parent=5 // pred_region
      %s344 = ssub.s32 %s17, 1
      %s345 = smul.u32 8, %s22
      %p346 = scmp.lt.s32.totalorder %s345, 15
      %s347 = scalar_select %p346, %s345, 15
      %s348 = smul.addr %s347, 9
      %s349 = smul.addr %s348, 4
      %s350 = scalar_lea.vmem %s0, %s349
      %p351 = pneg %p43
      %p352 = pneg %p40
      %p353 = pneg %p64
      %p354 = pneg %p61
      %p355 = pneg %p85
      %p356 = pneg %p82
      %p357 = pneg %p106
      %p358 = pneg %p103
      %p359 = pneg %p127
      %p360 = pneg %p124
      %p361 = pneg %p148
      %p362 = pneg %p145
      %p363 = pneg %p169
      %p364 = pneg %p166
      %p365 = pneg %p190
      %p366 = pneg %p187
      %p367 = pneg %p211
      %p368 = pneg %p208
      %p369 = pneg %p232
      %p370 = pneg %p229
      %p371 = pneg %p253
      %p372 = pneg %p250
      %p373 = pneg %p279
      %p374 = pneg %p276
      %p375 = scmp.lt.s32.totalorder %s22, 1
      %s376 = scalar_select %p375, %s22, 1
      %s377 = smul.addr %s376, 8
      %s378 = scalar_lea.vmem %s11, %s377
      %s379 = smul.u32 8, %s22
      %p380 = scmp.lt.s32.totalorder %s379, 15
      %s381 = scalar_select %p380, %s379, 15
      %s382 = smul.addr %s381, 9
      %s383 = smul.addr %s382, 4
      %s384 = scalar_lea.vmem %s0, %s383
      %s385 = smul.u32 8, %s22
      %p386 = scmp.lt.s32.totalorder %s22, 1
      %s387 = scalar_select %p386, %s22, 1
      %s388 = smul.addr %s387, 8
      %s389 = scalar_lea.vmem %s11, %s388
      %v391 = vld [vmem:[%s384] sm:$0xff]
      %v392 = vld [vmem:[%s384 + $0x8] sm:$0xff]
      %v393 = vld [vmem:[%s384 + $0x10] sm:$0xff]
      %v394 = vld [vmem:[%s384 + $0x18] sm:$0xff]
      %v395 = vld [vmem:[%s384 + $0x20] sm:$0xf]
      %v396 = vld [vmem:[%s384 + $0x24] sm:$0xff]
      %v397 = vld [vmem:[%s384 + $0x2c] sm:$0xff]
      %v398 = vld [vmem:[%s384 + $0x34] sm:$0xff]
      %v399 = vld [vmem:[%s384 + $0x3c] sm:$0xff]
      %v400 = vld [vmem:[%s384 + $0x44] sm:$0xf]
      %v401 = vld [vmem:[%s384 + $0x48] sm:$0xff]
      %v402 = vld [vmem:[%s384 + $0x50] sm:$0xff]
      %v403 = vld [vmem:[%s384 + $0x58] sm:$0xff]
      %v404 = vld [vmem:[%s384 + $0x60] sm:$0xff]
      %v405 = vld [vmem:[%s384 + $0x68] sm:$0xf]
      %v406 = vld [vmem:[%s384 + $0x6c] sm:$0xff]
      %v407 = vld [vmem:[%s384 + $0x74] sm:$0xff]
      %v408 = vld [vmem:[%s384 + $0x7c] sm:$0xff]
      %v409 = vld [vmem:[%s384 + $0x84] sm:$0xff]
      %v410 = vld [vmem:[%s384 + $0x8c] sm:$0xf]
      %v411 = vld [vmem:[%s384 + $0x90] sm:$0xff]
      %v412 = vld [vmem:[%s384 + $0x98] sm:$0xff]
      %v413 = vld [vmem:[%s384 + $0xa0] sm:$0xff]
      %v414 = vld [vmem:[%s384 + $0xa8] sm:$0xff]
      %v415 = vld [vmem:[%s384 + $0xb0] sm:$0xf]
      %v416 = vld [vmem:[%s384 + $0xb4] sm:$0xff]
      %v417 = vld [vmem:[%s384 + $0xbc] sm:$0xff]
      %v418 = vld [vmem:[%s384 + $0xc4] sm:$0xff]
      %v419 = vld [vmem:[%s384 + $0xcc] sm:$0xff]
      %v420 = vld [vmem:[%s384 + $0xd4] sm:$0xf]
      %v421 = vld [vmem:[%s384 + $0xd8] sm:$0xff]
      %v422 = vld [vmem:[%s384 + $0xe0] sm:$0xff]
      %v423 = vld [vmem:[%s384 + $0xe8] sm:$0xff]
      %v424 = vld [vmem:[%s384 + $0xf0] sm:$0xff]
      %v425 = vld [vmem:[%s384 + $0xf8] sm:$0xf]
      %v426 = vld [vmem:[%s384 + $0xfc] sm:$0xff]
      %v427 = vld [vmem:[%s384 + $0x104] sm:$0xff]
      %v428 = vld [vmem:[%s384 + $0x10c] sm:$0xff]
      %v429 = vld [vmem:[%s384 + $0x114] sm:$0xff]
      %v430 = vld [vmem:[%s384 + $0x11c] sm:$0xf]
      %v431 = vld [vmem:[%s1] sm:$0xff]
      %v432 = vld [vmem:[%s1 + $0x8] sm:$0xff]
      %v433 = vld [vmem:[%s1 + $0x10] sm:$0xff]
      %v434 = vld [vmem:[%s1 + $0x18] sm:$0xff]
      %v435 = vld [vmem:[%s1 + $0x20] sm:$0xff]
      %v436 = vld [vmem:[%s1 + $0x28] sm:$0xff]
      %v437 = vld [vmem:[%s1 + $0x30] sm:$0xff]
      %v438 = vld [vmem:[%s1 + $0x38] sm:$0xff]
      %v439 = vld [vmem:[%s1 + $0x40] sm:$0xff]
      %v440 = vld [vmem:[%s1 + $0x48] sm:$0xff]
      %v441 = vld [vmem:[%s1 + $0x50] sm:$0xff]
      %v442 = vld [vmem:[%s1 + $0x58] sm:$0xff]
      %v443 = vld [vmem:[%s1 + $0x60] sm:$0xff]
      %v444 = vld [vmem:[%s1 + $0x68] sm:$0xff]
      %v445 = vld [vmem:[%s1 + $0x70] sm:$0xff]
      %v446 = vld [vmem:[%s1 + $0x78] sm:$0xff]
      %v447 = vld [vmem:[%s1 + $0x80] sm:$0xff]
      %v448 = vld [vmem:[%s1 + $0x88] sm:$0xff]
      %v449 = vld [vmem:[%s1 + $0x90] sm:$0xff]
      %v450 = vld [vmem:[%s1 + $0x98] sm:$0xff]
      %v451 = vld [vmem:[%s1 + $0xa0] sm:$0xff]
      %v452 = vld [vmem:[%s1 + $0xa8] sm:$0xff]
      %v453 = vld [vmem:[%s1 + $0xb0] sm:$0xff]
      %v454 = vld [vmem:[%s1 + $0xb8] sm:$0xff]
      %v455 = vld [vmem:[%s1 + $0xc0] sm:$0xff]
      %v456 = vld [vmem:[%s1 + $0xc8] sm:$0xff]
      %v457 = vld [vmem:[%s1 + $0xd0] sm:$0xff]
      %v458 = vld [vmem:[%s1 + $0xd8] sm:$0xff]
      %v459 = vld [vmem:[%s1 + $0xe0] sm:$0xff]
      %v460 = vld [vmem:[%s1 + $0xe8] sm:$0xff]
      %v461 = vld [vmem:[%s1 + $0xf0] sm:$0xff]
      %v462 = vld [vmem:[%s1 + $0xf8] sm:$0xff]
      %v463 = vld [vmem:[%s1 + $0x100] sm:$0xff]
      %v464 = vld [vmem:[%s1 + $0x108] sm:$0xff]
      %v465 = vld [vmem:[%s1 + $0x110] sm:$0xff]
      %v466 = vld [vmem:[%s1 + $0x118] sm:$0xff]
      %v467 = vld [vmem:[%s1 + $0x120] sm:$0xff]
      %v468 = vld [vmem:[%s1 + $0x128] sm:$0xff]
      %v469 = vld [vmem:[%s1 + $0x130] sm:$0xff]
      %v470 = vld [vmem:[%s1 + $0x138] sm:$0xff]
      %v471 = vld [vmem:[%s1 + $0x140] sm:$0xff]
      %v472 = vld [vmem:[%s1 + $0x148] sm:$0xff]
      %v473 = vld [vmem:[%s1 + $0x150] sm:$0xff]
      %v474 = vld [vmem:[%s1 + $0x158] sm:$0xff]
      %v475 = vld [vmem:[%s1 + $0x160] sm:$0xff]
      %v476 = vld [vmem:[%s1 + $0x168] sm:$0xff]
      %v477 = vld [vmem:[%s1 + $0x170] sm:$0xff]
      %v478 = vld [vmem:[%s1 + $0x178] sm:$0xff]
      %v479 = vld [vmem:[%s1 + $0x180] sm:$0xff]
      %v480 = vld [vmem:[%s1 + $0x188] sm:$0xff]
      %v481 = vld [vmem:[%s1 + $0x190] sm:$0xff]
      %v482 = vld [vmem:[%s1 + $0x198] sm:$0xff]
      %v483 = vld [vmem:[%s1 + $0x1a0] sm:$0xff]
      %v484 = vld [vmem:[%s1 + $0x1a8] sm:$0xff]
      %v485 = vld [vmem:[%s1 + $0x1b0] sm:$0xff]
      %v486 = vld [vmem:[%s1 + $0x1b8] sm:$0xff]
      %v487 = vld [vmem:[%s1 + $0x1c0] sm:$0xff]
      %v488 = vld [vmem:[%s1 + $0x1c8] sm:$0xff]
      %v489 = vld [vmem:[%s1 + $0x1d0] sm:$0xff]
      %v490 = vld [vmem:[%s1 + $0x1d8] sm:$0xff]
      %v491 = vld [vmem:[%s1 + $0x1e0] sm:$0xff]
      %v492 = vld [vmem:[%s1 + $0x1e8] sm:$0xff]
      %v493 = vld [vmem:[%s1 + $0x1f0] sm:$0xff]
      %v494 = vld [vmem:[%s1 + $0x1f8] sm:$0xff]
      %v495 = vld [vmem:[%s1 + $0x200] sm:$0xff]
      %v496 = vld [vmem:[%s1 + $0x208] sm:$0xff]
      %v497 = vld [vmem:[%s1 + $0x210] sm:$0xff]
      %v498 = vld [vmem:[%s1 + $0x218] sm:$0xff]
      %v499 = vld [vmem:[%s1 + $0x220] sm:$0xff]
      %v500 = vld [vmem:[%s1 + $0x228] sm:$0xff]
      %v501 = vld [vmem:[%s1 + $0x230] sm:$0xff]
      %v502 = vld [vmem:[%s1 + $0x238] sm:$0xff]
      %v503 = vld [vmem:[%s1 + $0x240] sm:$0xff]
      %v504 = vld [vmem:[%s1 + $0x248] sm:$0xff]
      %v505 = vld [vmem:[%s1 + $0x250] sm:$0xff]
      %v506 = vld [vmem:[%s1 + $0x258] sm:$0xff]
      %v507 = vld [vmem:[%s1 + $0x260] sm:$0xff]
      %v508 = vld [vmem:[%s1 + $0x268] sm:$0xff]
      %v509 = vld [vmem:[%s1 + $0x270] sm:$0xff]
      %v510 = vld [vmem:[%s1 + $0x278] sm:$0xff]
      %v511 = vld [vmem:[%s1 + $0x280] sm:$0xff]
      %v512 = vld [vmem:[%s1 + $0x288] sm:$0xff]
      %v513 = vld [vmem:[%s1 + $0x290] sm:$0xff]
      %v514 = vld [vmem:[%s1 + $0x298] sm:$0xff]
      %v515 = vld [vmem:[%s1 + $0x2a0] sm:$0xff]
      %v516 = vld [vmem:[%s1 + $0x2a8] sm:$0xff]
      %v517 = vld [vmem:[%s1 + $0x2b0] sm:$0xff]
      %v518 = vld [vmem:[%s1 + $0x2b8] sm:$0xff]
      %v519 = vld [vmem:[%s1 + $0x2c0] sm:$0xff]
      %v520 = vld [vmem:[%s1 + $0x2c8] sm:$0xff]
      %v521 = vld [vmem:[%s1 + $0x2d0] sm:$0xff]
      %v522 = vld [vmem:[%s1 + $0x2d8] sm:$0xff]
      %v523 = vld [vmem:[%s1 + $0x2e0] sm:$0xff]
      %v524 = vld [vmem:[%s1 + $0x2e8] sm:$0xff]
      %v525 = vld [vmem:[%s1 + $0x2f0] sm:$0xff]
      %v526 = vld [vmem:[%s1 + $0x2f8] sm:$0xff]
      %v527 = vld [vmem:[%s1 + $0x300] sm:$0xff]
      %v528 = vld [vmem:[%s1 + $0x308] sm:$0xff]
      %v529 = vld [vmem:[%s1 + $0x310] sm:$0xff]
      %v530 = vld [vmem:[%s1 + $0x318] sm:$0xff]
      %v531 = vld [vmem:[%s1 + $0x320] sm:$0xff]
      %v532 = vld [vmem:[%s1 + $0x328] sm:$0xff]
      %v533 = vld [vmem:[%s1 + $0x330] sm:$0xff]
      %v534 = vld [vmem:[%s1 + $0x338] sm:$0xff]
      %v535 = vld [vmem:[%s1 + $0x340] sm:$0xff]
      %v536 = vld [vmem:[%s1 + $0x348] sm:$0xff]
      %v537 = vld [vmem:[%s1 + $0x350] sm:$0xff]
      %v538 = vld [vmem:[%s1 + $0x358] sm:$0xff]
      %v539 = vld [vmem:[%s1 + $0x360] sm:$0xff]
      %v540 = vld [vmem:[%s1 + $0x368] sm:$0xff]
      %v541 = vld [vmem:[%s1 + $0x370] sm:$0xff]
      %v542 = vld [vmem:[%s1 + $0x378] sm:$0xff]
      %v543 = vld [vmem:[%s1 + $0x380] sm:$0xff]
      %v544 = vld [vmem:[%s1 + $0x388] sm:$0xff]
      %v545 = vld [vmem:[%s1 + $0x390] sm:$0xff]
      %v546 = vld [vmem:[%s1 + $0x398] sm:$0xff]
      %v547 = vld [vmem:[%s1 + $0x3a0] sm:$0xff]
      %v548 = vld [vmem:[%s1 + $0x3a8] sm:$0xff]
      %v549 = vld [vmem:[%s1 + $0x3b0] sm:$0xff]
      %v550 = vld [vmem:[%s1 + $0x3b8] sm:$0xff]
      %v551 = vld [vmem:[%s1 + $0x3c0] sm:$0xff]
      %v552 = vld [vmem:[%s1 + $0x3c8] sm:$0xff]
      %v553 = vld [vmem:[%s1 + $0x3d0] sm:$0xff]
      %v554 = vld [vmem:[%s1 + $0x3d8] sm:$0xff]
      %v555 = vld [vmem:[%s1 + $0x3e0] sm:$0xff]
      %v556 = vld [vmem:[%s1 + $0x3e8] sm:$0xff]
      %v557 = vld [vmem:[%s1 + $0x3f0] sm:$0xff]
      %v558 = vld [vmem:[%s1 + $0x3f8] sm:$0xff]
      %v559 = vld [vmem:[%s1 + $0x400] sm:$0xff]
      %v560 = vld [vmem:[%s1 + $0x408] sm:$0xff]
      %v561 = vld [vmem:[%s1 + $0x410] sm:$0xff]
      %v562 = vld [vmem:[%s1 + $0x418] sm:$0xff]
      %v563 = vld [vmem:[%s1 + $0x420] sm:$0xff]
      %v564 = vld [vmem:[%s1 + $0x428] sm:$0xff]
      %v565 = vld [vmem:[%s1 + $0x430] sm:$0xff]
      %v566 = vld [vmem:[%s1 + $0x438] sm:$0xff]
      %v567 = vld [vmem:[%s1 + $0x440] sm:$0xff]
      %v568 = vld [vmem:[%s1 + $0x448] sm:$0xff]
      %v569 = vld [vmem:[%s1 + $0x450] sm:$0xff]
      %v570 = vld [vmem:[%s1 + $0x458] sm:$0xff]
      %v571 = vld [vmem:[%s1 + $0x460] sm:$0xff]
      %v572 = vld [vmem:[%s1 + $0x468] sm:$0xff]
      %v573 = vld [vmem:[%s1 + $0x470] sm:$0xff]
      %v574 = vld [vmem:[%s1 + $0x478] sm:$0xff]
      %v575 = vld [vmem:[%s2] sm:$0x3]
      %v577 = vperm.slane %v575, 0
      %v578 = vperm.slane %v575, 1
      %v621 = vunpack.c.l.b16 %v391
      %v622 = vunpack.c.h.b16 %v391
      %v623 = vunpack.c.l.b16 %v392
      %v624 = vunpack.c.h.b16 %v392
      %v625 = vunpack.c.l.b16 %v393
      %v626 = vunpack.c.h.b16 %v393
      %v627 = vunpack.c.l.b16 %v394
      %v628 = vunpack.c.h.b16 %v394
      %v629 = vunpack.c.l.b16 %v395
      %v630 = vunpack.c.l.b16 %v396
      %v631 = vunpack.c.h.b16 %v396
      %v632 = vunpack.c.l.b16 %v397
      %v633 = vunpack.c.h.b16 %v397
      %v634 = vunpack.c.l.b16 %v398
      %v635 = vunpack.c.h.b16 %v398
      %v636 = vunpack.c.l.b16 %v399
      %v637 = vunpack.c.h.b16 %v399
      %v638 = vunpack.c.l.b16 %v400
      %v639 = vunpack.c.l.b16 %v401
      %v640 = vunpack.c.h.b16 %v401
      %v641 = vunpack.c.l.b16 %v402
      %v642 = vunpack.c.h.b16 %v402
      %v643 = vunpack.c.l.b16 %v403
      %v644 = vunpack.c.h.b16 %v403
      %v645 = vunpack.c.l.b16 %v404
      %v646 = vunpack.c.h.b16 %v404
      %v647 = vunpack.c.l.b16 %v405
      %v648 = vunpack.c.l.b16 %v406
      %v649 = vunpack.c.h.b16 %v406
      %v650 = vunpack.c.l.b16 %v407
      %v651 = vunpack.c.h.b16 %v407
      %v652 = vunpack.c.l.b16 %v408
      %v653 = vunpack.c.h.b16 %v408
      %v654 = vunpack.c.l.b16 %v409
      %v655 = vunpack.c.h.b16 %v409
      %v656 = vunpack.c.l.b16 %v410
      %v657 = vunpack.c.l.b16 %v411
      %v658 = vunpack.c.h.b16 %v411
      %v659 = vunpack.c.l.b16 %v412
      %v660 = vunpack.c.h.b16 %v412
      %v661 = vunpack.c.l.b16 %v413
      %v662 = vunpack.c.h.b16 %v413
      %v663 = vunpack.c.l.b16 %v414
      %v664 = vunpack.c.h.b16 %v414
      %v665 = vunpack.c.l.b16 %v415
      %v666 = vunpack.c.l.b16 %v416
      %v667 = vunpack.c.h.b16 %v416
      %v668 = vunpack.c.l.b16 %v417
      %v669 = vunpack.c.h.b16 %v417
      %v670 = vunpack.c.l.b16 %v418
      %v671 = vunpack.c.h.b16 %v418
      %v672 = vunpack.c.l.b16 %v419
      %v673 = vunpack.c.h.b16 %v419
      %v674 = vunpack.c.l.b16 %v420
      %v675 = vunpack.c.l.b16 %v421
      %v676 = vunpack.c.h.b16 %v421
      %v677 = vunpack.c.l.b16 %v422
      %v678 = vunpack.c.h.b16 %v422
      %v679 = vunpack.c.l.b16 %v423
      %v680 = vunpack.c.h.b16 %v423
      %v681 = vunpack.c.l.b16 %v424
      %v682 = vunpack.c.h.b16 %v424
      %v683 = vunpack.c.l.b16 %v425
      %v684 = vunpack.c.l.b16 %v426
      %v685 = vunpack.c.h.b16 %v426
      %v686 = vunpack.c.l.b16 %v427
      %v687 = vunpack.c.h.b16 %v427
      %v688 = vunpack.c.l.b16 %v428
      %v689 = vunpack.c.h.b16 %v428
      %v690 = vunpack.c.l.b16 %v429
      %v691 = vunpack.c.h.b16 %v429
      %v692 = vunpack.c.l.b16 %v430
      %v693 = vpack.c.b16 %v630, %v621
      %v694 = vpack.c.b16 %v631, %v622
      %v695 = vpack.c.b16 %v632, %v623
      %v696 = vpack.c.b16 %v633, %v624
      %v697 = vpack.c.b16 %v634, %v625
      %v698 = vpack.c.b16 %v635, %v626
      %v699 = vpack.c.b16 %v636, %v627
      %v700 = vpack.c.b16 %v637, %v628
      %v701 = vpack.c.b16 %v638, %v629
      %v702 = vpack.c.b16 %v648, %v639
      %v703 = vpack.c.b16 %v649, %v640
      %v704 = vpack.c.b16 %v650, %v641
      %v705 = vpack.c.b16 %v651, %v642
      %v706 = vpack.c.b16 %v652, %v643
      %v707 = vpack.c.b16 %v653, %v644
      %v708 = vpack.c.b16 %v654, %v645
      %v709 = vpack.c.b16 %v655, %v646
      %v710 = vpack.c.b16 %v656, %v647
      %v711 = vpack.c.b16 %v666, %v657
      %v712 = vpack.c.b16 %v667, %v658
      %v713 = vpack.c.b16 %v668, %v659
      %v714 = vpack.c.b16 %v669, %v660
      %v715 = vpack.c.b16 %v670, %v661
      %v716 = vpack.c.b16 %v671, %v662
      %v717 = vpack.c.b16 %v672, %v663
      %v718 = vpack.c.b16 %v673, %v664
      %v719 = vpack.c.b16 %v674, %v665
      %v720 = vpack.c.b16 %v684, %v675
      %v721 = vpack.c.b16 %v685, %v676
      %v722 = vpack.c.b16 %v686, %v677
      %v723 = vpack.c.b16 %v687, %v678
      %v724 = vpack.c.b16 %v688, %v679
      %v725 = vpack.c.b16 %v689, %v680
      %v726 = vpack.c.b16 %v690, %v681
      %v727 = vpack.c.b16 %v691, %v682
      %v728 = vpack.c.b16 %v692, %v683
      %v909 = vunpack.c.l.b16 %v431
      %v910 = vunpack.c.h.b16 %v431
      %v911 = vunpack.c.l.b16 %v432
      %v912 = vunpack.c.h.b16 %v432
      %v913 = vunpack.c.l.b16 %v433
      %v914 = vunpack.c.h.b16 %v433
      %v915 = vunpack.c.l.b16 %v434
      %v916 = vunpack.c.h.b16 %v434
      %v917 = vunpack.c.l.b16 %v435
      %v918 = vunpack.c.h.b16 %v435
      %v919 = vunpack.c.l.b16 %v436
      %v920 = vunpack.c.h.b16 %v436
      %v921 = vunpack.c.l.b16 %v437
      %v922 = vunpack.c.h.b16 %v437
      %v923 = vunpack.c.l.b16 %v438
      %v924 = vunpack.c.h.b16 %v438
      %v925 = vunpack.c.l.b16 %v439
      %v926 = vunpack.c.h.b16 %v439
      %v927 = vunpack.c.l.b16 %v440
      %v928 = vunpack.c.h.b16 %v440
      %v929 = vunpack.c.l.b16 %v441
      %v930 = vunpack.c.h.b16 %v441
      %v931 = vunpack.c.l.b16 %v442
      %v932 = vunpack.c.h.b16 %v442
      %v933 = vunpack.c.l.b16 %v443
      %v934 = vunpack.c.h.b16 %v443
      %v935 = vunpack.c.l.b16 %v444
      %v936 = vunpack.c.h.b16 %v444
      %v937 = vunpack.c.l.b16 %v445
      %v938 = vunpack.c.h.b16 %v445
      %v939 = vunpack.c.l.b16 %v446
      %v940 = vunpack.c.h.b16 %v446
      %v941 = vunpack.c.l.b16 %v447
      %v942 = vunpack.c.h.b16 %v447
      %v943 = vunpack.c.l.b16 %v448
      %v944 = vunpack.c.h.b16 %v448
      %v945 = vunpack.c.l.b16 %v449
      %v946 = vunpack.c.h.b16 %v449
      %v947 = vunpack.c.l.b16 %v450
      %v948 = vunpack.c.h.b16 %v450
      %v949 = vunpack.c.l.b16 %v451
      %v950 = vunpack.c.h.b16 %v451
      %v951 = vunpack.c.l.b16 %v452
      %v952 = vunpack.c.h.b16 %v452
      %v953 = vunpack.c.l.b16 %v453
      %v954 = vunpack.c.h.b16 %v453
      %v955 = vunpack.c.l.b16 %v454
      %v956 = vunpack.c.h.b16 %v454
      %v957 = vunpack.c.l.b16 %v455
      %v958 = vunpack.c.h.b16 %v455
      %v959 = vunpack.c.l.b16 %v456
      %v960 = vunpack.c.h.b16 %v456
      %v961 = vunpack.c.l.b16 %v457
      %v962 = vunpack.c.h.b16 %v457
      %v963 = vunpack.c.l.b16 %v458
      %v964 = vunpack.c.h.b16 %v458
      %v965 = vunpack.c.l.b16 %v459
      %v966 = vunpack.c.h.b16 %v459
      %v967 = vunpack.c.l.b16 %v460
      %v968 = vunpack.c.h.b16 %v460
      %v969 = vunpack.c.l.b16 %v461
      %v970 = vunpack.c.h.b16 %v461
      %v971 = vunpack.c.l.b16 %v462
      %v972 = vunpack.c.h.b16 %v462
      %v973 = vunpack.c.l.b16 %v463
      %v974 = vunpack.c.h.b16 %v463
      %v975 = vunpack.c.l.b16 %v464
      %v976 = vunpack.c.h.b16 %v464
      %v977 = vunpack.c.l.b16 %v465
      %v978 = vunpack.c.h.b16 %v465
      %v979 = vunpack.c.l.b16 %v466
      %v980 = vunpack.c.h.b16 %v466
      %v981 = vunpack.c.l.b16 %v467
      %v982 = vunpack.c.h.b16 %v467
      %v983 = vunpack.c.l.b16 %v468
      %v984 = vunpack.c.h.b16 %v468
      %v985 = vunpack.c.l.b16 %v469
      %v986 = vunpack.c.h.b16 %v469
      %v987 = vunpack.c.l.b16 %v470
      %v988 = vunpack.c.h.b16 %v470
      %v989 = vunpack.c.l.b16 %v471
      %v990 = vunpack.c.h.b16 %v471
      %v991 = vunpack.c.l.b16 %v472
      %v992 = vunpack.c.h.b16 %v472
      %v993 = vunpack.c.l.b16 %v473
      %v994 = vunpack.c.h.b16 %v473
      %v995 = vunpack.c.l.b16 %v474
      %v996 = vunpack.c.h.b16 %v474
      %v997 = vunpack.c.l.b16 %v475
      %v998 = vunpack.c.h.b16 %v475
      %v999 = vunpack.c.l.b16 %v476
      %v1000 = vunpack.c.h.b16 %v476
      %v1001 = vunpack.c.l.b16 %v477
      %v1002 = vunpack.c.h.b16 %v477
      %v1003 = vunpack.c.l.b16 %v478
      %v1004 = vunpack.c.h.b16 %v478
      %v1005 = vunpack.c.l.b16 %v479
      %v1006 = vunpack.c.h.b16 %v479
      %v1007 = vunpack.c.l.b16 %v480
      %v1008 = vunpack.c.h.b16 %v480
      %v1009 = vunpack.c.l.b16 %v481
      %v1010 = vunpack.c.h.b16 %v481
      %v1011 = vunpack.c.l.b16 %v482
      %v1012 = vunpack.c.h.b16 %v482
      %v1013 = vunpack.c.l.b16 %v483
      %v1014 = vunpack.c.h.b16 %v483
      %v1015 = vunpack.c.l.b16 %v484
      %v1016 = vunpack.c.h.b16 %v484
      %v1017 = vunpack.c.l.b16 %v485
      %v1018 = vunpack.c.h.b16 %v485
      %v1019 = vunpack.c.l.b16 %v486
      %v1020 = vunpack.c.h.b16 %v486
      %v1021 = vunpack.c.l.b16 %v487
      %v1022 = vunpack.c.h.b16 %v487
      %v1023 = vunpack.c.l.b16 %v488
      %v1024 = vunpack.c.h.b16 %v488
      %v1025 = vunpack.c.l.b16 %v489
      %v1026 = vunpack.c.h.b16 %v489
      %v1027 = vunpack.c.l.b16 %v490
      %v1028 = vunpack.c.h.b16 %v490
      %v1029 = vunpack.c.l.b16 %v491
      %v1030 = vunpack.c.h.b16 %v491
      %v1031 = vunpack.c.l.b16 %v492
      %v1032 = vunpack.c.h.b16 %v492
      %v1033 = vunpack.c.l.b16 %v493
      %v1034 = vunpack.c.h.b16 %v493
      %v1035 = vunpack.c.l.b16 %v494
      %v1036 = vunpack.c.h.b16 %v494
      %v1037 = vunpack.c.l.b16 %v495
      %v1038 = vunpack.c.h.b16 %v495
      %v1039 = vunpack.c.l.b16 %v496
      %v1040 = vunpack.c.h.b16 %v496
      %v1041 = vunpack.c.l.b16 %v497
      %v1042 = vunpack.c.h.b16 %v497
      %v1043 = vunpack.c.l.b16 %v498
      %v1044 = vunpack.c.h.b16 %v498
      %v1045 = vunpack.c.l.b16 %v499
      %v1046 = vunpack.c.h.b16 %v499
      %v1047 = vunpack.c.l.b16 %v500
      %v1048 = vunpack.c.h.b16 %v500
      %v1049 = vunpack.c.l.b16 %v501
      %v1050 = vunpack.c.h.b16 %v501
      %v1051 = vunpack.c.l.b16 %v502
      %v1052 = vunpack.c.h.b16 %v502
      %v1053 = vunpack.c.l.b16 %v503
      %v1054 = vunpack.c.h.b16 %v503
      %v1055 = vunpack.c.l.b16 %v504
      %v1056 = vunpack.c.h.b16 %v504
      %v1057 = vunpack.c.l.b16 %v505
      %v1058 = vunpack.c.h.b16 %v505
      %v1059 = vunpack.c.l.b16 %v506
      %v1060 = vunpack.c.h.b16 %v506
      %v1061 = vunpack.c.l.b16 %v507
      %v1062 = vunpack.c.h.b16 %v507
      %v1063 = vunpack.c.l.b16 %v508
      %v1064 = vunpack.c.h.b16 %v508
      %v1065 = vunpack.c.l.b16 %v509
      %v1066 = vunpack.c.h.b16 %v509
      %v1067 = vunpack.c.l.b16 %v510
      %v1068 = vunpack.c.h.b16 %v510
      %v1069 = vunpack.c.l.b16 %v511
      %v1070 = vunpack.c.h.b16 %v511
      %v1071 = vunpack.c.l.b16 %v512
      %v1072 = vunpack.c.h.b16 %v512
      %v1073 = vunpack.c.l.b16 %v513
      %v1074 = vunpack.c.h.b16 %v513
      %v1075 = vunpack.c.l.b16 %v514
      %v1076 = vunpack.c.h.b16 %v514
      %v1077 = vunpack.c.l.b16 %v515
      %v1078 = vunpack.c.h.b16 %v515
      %v1079 = vunpack.c.l.b16 %v516
      %v1080 = vunpack.c.h.b16 %v516
      %v1081 = vunpack.c.l.b16 %v517
      %v1082 = vunpack.c.h.b16 %v517
      %v1083 = vunpack.c.l.b16 %v518
      %v1084 = vunpack.c.h.b16 %v518
      %v1085 = vunpack.c.l.b16 %v519
      %v1086 = vunpack.c.h.b16 %v519
      %v1087 = vunpack.c.l.b16 %v520
      %v1088 = vunpack.c.h.b16 %v520
      %v1089 = vunpack.c.l.b16 %v521
      %v1090 = vunpack.c.h.b16 %v521
      %v1091 = vunpack.c.l.b16 %v522
      %v1092 = vunpack.c.h.b16 %v522
      %v1093 = vunpack.c.l.b16 %v523
      %v1094 = vunpack.c.h.b16 %v523
      %v1095 = vunpack.c.l.b16 %v524
      %v1096 = vunpack.c.h.b16 %v524
      %v1097 = vunpack.c.l.b16 %v525
      %v1098 = vunpack.c.h.b16 %v525
      %v1099 = vunpack.c.l.b16 %v526
      %v1100 = vunpack.c.h.b16 %v526
      %v1101 = vunpack.c.l.b16 %v527
      %v1102 = vunpack.c.h.b16 %v527
      %v1103 = vunpack.c.l.b16 %v528
      %v1104 = vunpack.c.h.b16 %v528
      %v1105 = vunpack.c.l.b16 %v529
      %v1106 = vunpack.c.h.b16 %v529
      %v1107 = vunpack.c.l.b16 %v530
      %v1108 = vunpack.c.h.b16 %v530
      %v1109 = vunpack.c.l.b16 %v531
      %v1110 = vunpack.c.h.b16 %v531
      %v1111 = vunpack.c.l.b16 %v532
      %v1112 = vunpack.c.h.b16 %v532
      %v1113 = vunpack.c.l.b16 %v533
      %v1114 = vunpack.c.h.b16 %v533
      %v1115 = vunpack.c.l.b16 %v534
      %v1116 = vunpack.c.h.b16 %v534
      %v1117 = vunpack.c.l.b16 %v535
      %v1118 = vunpack.c.h.b16 %v535
      %v1119 = vunpack.c.l.b16 %v536
      %v1120 = vunpack.c.h.b16 %v536
      %v1121 = vunpack.c.l.b16 %v537
      %v1122 = vunpack.c.h.b16 %v537
      %v1123 = vunpack.c.l.b16 %v538
      %v1124 = vunpack.c.h.b16 %v538
      %v1125 = vunpack.c.l.b16 %v539
      %v1126 = vunpack.c.h.b16 %v539
      %v1127 = vunpack.c.l.b16 %v540
      %v1128 = vunpack.c.h.b16 %v540
      %v1129 = vunpack.c.l.b16 %v541
      %v1130 = vunpack.c.h.b16 %v541
      %v1131 = vunpack.c.l.b16 %v542
      %v1132 = vunpack.c.h.b16 %v542
      %v1133 = vunpack.c.l.b16 %v543
      %v1134 = vunpack.c.h.b16 %v543
      %v1135 = vunpack.c.l.b16 %v544
      %v1136 = vunpack.c.h.b16 %v544
      %v1137 = vunpack.c.l.b16 %v545
      %v1138 = vunpack.c.h.b16 %v545
      %v1139 = vunpack.c.l.b16 %v546
      %v1140 = vunpack.c.h.b16 %v546
      %v1141 = vunpack.c.l.b16 %v547
      %v1142 = vunpack.c.h.b16 %v547
      %v1143 = vunpack.c.l.b16 %v548
      %v1144 = vunpack.c.h.b16 %v548
      %v1145 = vunpack.c.l.b16 %v549
      %v1146 = vunpack.c.h.b16 %v549
      %v1147 = vunpack.c.l.b16 %v550
      %v1148 = vunpack.c.h.b16 %v550
      %v1149 = vunpack.c.l.b16 %v551
      %v1150 = vunpack.c.h.b16 %v551
      %v1151 = vunpack.c.l.b16 %v552
      %v1152 = vunpack.c.h.b16 %v552
      %v1153 = vunpack.c.l.b16 %v553
      %v1154 = vunpack.c.h.b16 %v553
      %v1155 = vunpack.c.l.b16 %v554
      %v1156 = vunpack.c.h.b16 %v554
      %v1157 = vunpack.c.l.b16 %v555
      %v1158 = vunpack.c.h.b16 %v555
      %v1159 = vunpack.c.l.b16 %v556
      %v1160 = vunpack.c.h.b16 %v556
      %v1161 = vunpack.c.l.b16 %v557
      %v1162 = vunpack.c.h.b16 %v557
      %v1163 = vunpack.c.l.b16 %v558
      %v1164 = vunpack.c.h.b16 %v558
      %v1165 = vunpack.c.l.b16 %v559
      %v1166 = vunpack.c.h.b16 %v559
      %v1167 = vunpack.c.l.b16 %v560
      %v1168 = vunpack.c.h.b16 %v560
      %v1169 = vunpack.c.l.b16 %v561
      %v1170 = vunpack.c.h.b16 %v561
      %v1171 = vunpack.c.l.b16 %v562
      %v1172 = vunpack.c.h.b16 %v562
      %v1173 = vunpack.c.l.b16 %v563
      %v1174 = vunpack.c.h.b16 %v563
      %v1175 = vunpack.c.l.b16 %v564
      %v1176 = vunpack.c.h.b16 %v564
      %v1177 = vunpack.c.l.b16 %v565
      %v1178 = vunpack.c.h.b16 %v565
      %v1179 = vunpack.c.l.b16 %v566
      %v1180 = vunpack.c.h.b16 %v566
      %v1181 = vunpack.c.l.b16 %v567
      %v1182 = vunpack.c.h.b16 %v567
      %v1183 = vunpack.c.l.b16 %v568
      %v1184 = vunpack.c.h.b16 %v568
      %v1185 = vunpack.c.l.b16 %v569
      %v1186 = vunpack.c.h.b16 %v569
      %v1187 = vunpack.c.l.b16 %v570
      %v1188 = vunpack.c.h.b16 %v570
      %v1189 = vunpack.c.l.b16 %v571
      %v1190 = vunpack.c.h.b16 %v571
      %v1191 = vunpack.c.l.b16 %v572
      %v1192 = vunpack.c.h.b16 %v572
      %v1193 = vunpack.c.l.b16 %v573
      %v1194 = vunpack.c.h.b16 %v573
      %v1195 = vunpack.c.l.b16 %v574
      %v1196 = vunpack.c.h.b16 %v574
      %v1197 = vpack.c.b16 %v911, %v909
      %v1198 = vpack.c.b16 %v912, %v910
      %v1199 = vpack.c.b16 %v915, %v913
      %v1200 = vpack.c.b16 %v916, %v914
      %v1201 = vpack.c.b16 %v919, %v917
      %v1202 = vpack.c.b16 %v920, %v918
      %v1203 = vpack.c.b16 %v923, %v921
      %v1204 = vpack.c.b16 %v924, %v922
      %v1205 = vpack.c.b16 %v927, %v925
      %v1206 = vpack.c.b16 %v928, %v926
      %v1207 = vpack.c.b16 %v931, %v929
      %v1208 = vpack.c.b16 %v932, %v930
      %v1209 = vpack.c.b16 %v935, %v933
      %v1210 = vpack.c.b16 %v936, %v934
      %v1211 = vpack.c.b16 %v939, %v937
      %v1212 = vpack.c.b16 %v940, %v938
      %v1213 = vpack.c.b16 %v943, %v941
      %v1214 = vpack.c.b16 %v944, %v942
      %v1215 = vpack.c.b16 %v947, %v945
      %v1216 = vpack.c.b16 %v948, %v946
      %v1217 = vpack.c.b16 %v951, %v949
      %v1218 = vpack.c.b16 %v952, %v950
      %v1219 = vpack.c.b16 %v955, %v953
      %v1220 = vpack.c.b16 %v956, %v954
      %v1221 = vpack.c.b16 %v959, %v957
      %v1222 = vpack.c.b16 %v960, %v958
      %v1223 = vpack.c.b16 %v963, %v961
      %v1224 = vpack.c.b16 %v964, %v962
      %v1225 = vpack.c.b16 %v967, %v965
      %v1226 = vpack.c.b16 %v968, %v966
      %v1227 = vpack.c.b16 %v971, %v969
      %v1228 = vpack.c.b16 %v972, %v970
      %v1229 = vpack.c.b16 %v975, %v973
      %v1230 = vpack.c.b16 %v976, %v974
      %v1231 = vpack.c.b16 %v979, %v977
      %v1232 = vpack.c.b16 %v980, %v978
      %v1233 = vpack.c.b16 %v983, %v981
      %v1234 = vpack.c.b16 %v984, %v982
      %v1235 = vpack.c.b16 %v987, %v985
      %v1236 = vpack.c.b16 %v988, %v986
      %v1237 = vpack.c.b16 %v991, %v989
      %v1238 = vpack.c.b16 %v992, %v990
      %v1239 = vpack.c.b16 %v995, %v993
      %v1240 = vpack.c.b16 %v996, %v994
      %v1241 = vpack.c.b16 %v999, %v997
      %v1242 = vpack.c.b16 %v1000, %v998
      %v1243 = vpack.c.b16 %v1003, %v1001
      %v1244 = vpack.c.b16 %v1004, %v1002
      %v1245 = vpack.c.b16 %v1007, %v1005
      %v1246 = vpack.c.b16 %v1008, %v1006
      %v1247 = vpack.c.b16 %v1011, %v1009
      %v1248 = vpack.c.b16 %v1012, %v1010
      %v1249 = vpack.c.b16 %v1015, %v1013
      %v1250 = vpack.c.b16 %v1016, %v1014
      %v1251 = vpack.c.b16 %v1019, %v1017
      %v1252 = vpack.c.b16 %v1020, %v1018
      %v1253 = vpack.c.b16 %v1023, %v1021
      %v1254 = vpack.c.b16 %v1024, %v1022
      %v1255 = vpack.c.b16 %v1027, %v1025
      %v1256 = vpack.c.b16 %v1028, %v1026
      %v1257 = vpack.c.b16 %v1031, %v1029
      %v1258 = vpack.c.b16 %v1032, %v1030
      %v1259 = vpack.c.b16 %v1035, %v1033
      %v1260 = vpack.c.b16 %v1036, %v1034
      %v1261 = vpack.c.b16 %v1039, %v1037
      %v1262 = vpack.c.b16 %v1040, %v1038
      %v1263 = vpack.c.b16 %v1043, %v1041
      %v1264 = vpack.c.b16 %v1044, %v1042
      %v1265 = vpack.c.b16 %v1047, %v1045
      %v1266 = vpack.c.b16 %v1048, %v1046
      %v1267 = vpack.c.b16 %v1051, %v1049
      %v1268 = vpack.c.b16 %v1052, %v1050
      %v1269 = vpack.c.b16 %v1055, %v1053
      %v1270 = vpack.c.b16 %v1056, %v1054
      %v1271 = vpack.c.b16 %v1059, %v1057
      %v1272 = vpack.c.b16 %v1060, %v1058
      %v1273 = vpack.c.b16 %v1063, %v1061
      %v1274 = vpack.c.b16 %v1064, %v1062
      %v1275 = vpack.c.b16 %v1067, %v1065
      %v1276 = vpack.c.b16 %v1068, %v1066
      %v1277 = vpack.c.b16 %v1071, %v1069
      %v1278 = vpack.c.b16 %v1072, %v1070
      %v1279 = vpack.c.b16 %v1075, %v1073
      %v1280 = vpack.c.b16 %v1076, %v1074
      %v1281 = vpack.c.b16 %v1079, %v1077
      %v1282 = vpack.c.b16 %v1080, %v1078
      %v1283 = vpack.c.b16 %v1083, %v1081
      %v1284 = vpack.c.b16 %v1084, %v1082
      %v1285 = vpack.c.b16 %v1087, %v1085
      %v1286 = vpack.c.b16 %v1088, %v1086
      %v1287 = vpack.c.b16 %v1091, %v1089
      %v1288 = vpack.c.b16 %v1092, %v1090
      %v1289 = vpack.c.b16 %v1095, %v1093
      %v1290 = vpack.c.b16 %v1096, %v1094
      %v1291 = vpack.c.b16 %v1099, %v1097
      %v1292 = vpack.c.b16 %v1100, %v1098
      %v1293 = vpack.c.b16 %v1103, %v1101
      %v1294 = vpack.c.b16 %v1104, %v1102
      %v1295 = vpack.c.b16 %v1107, %v1105
      %v1296 = vpack.c.b16 %v1108, %v1106
      %v1297 = vpack.c.b16 %v1111, %v1109
      %v1298 = vpack.c.b16 %v1112, %v1110
      %v1299 = vpack.c.b16 %v1115, %v1113
      %v1300 = vpack.c.b16 %v1116, %v1114
      %v1301 = vpack.c.b16 %v1119, %v1117
      %v1302 = vpack.c.b16 %v1120, %v1118
      %v1303 = vpack.c.b16 %v1123, %v1121
      %v1304 = vpack.c.b16 %v1124, %v1122
      %v1305 = vpack.c.b16 %v1127, %v1125
      %v1306 = vpack.c.b16 %v1128, %v1126
      %v1307 = vpack.c.b16 %v1131, %v1129
      %v1308 = vpack.c.b16 %v1132, %v1130
      %v1309 = vpack.c.b16 %v1135, %v1133
      %v1310 = vpack.c.b16 %v1136, %v1134
      %v1311 = vpack.c.b16 %v1139, %v1137
      %v1312 = vpack.c.b16 %v1140, %v1138
      %v1313 = vpack.c.b16 %v1143, %v1141
      %v1314 = vpack.c.b16 %v1144, %v1142
      %v1315 = vpack.c.b16 %v1147, %v1145
      %v1316 = vpack.c.b16 %v1148, %v1146
      %v1317 = vpack.c.b16 %v1151, %v1149
      %v1318 = vpack.c.b16 %v1152, %v1150
      %v1319 = vpack.c.b16 %v1155, %v1153
      %v1320 = vpack.c.b16 %v1156, %v1154
      %v1321 = vpack.c.b16 %v1159, %v1157
      %v1322 = vpack.c.b16 %v1160, %v1158
      %v1323 = vpack.c.b16 %v1163, %v1161
      %v1324 = vpack.c.b16 %v1164, %v1162
      %v1325 = vpack.c.b16 %v1167, %v1165
      %v1326 = vpack.c.b16 %v1168, %v1166
      %v1327 = vpack.c.b16 %v1171, %v1169
      %v1328 = vpack.c.b16 %v1172, %v1170
      %v1329 = vpack.c.b16 %v1175, %v1173
      %v1330 = vpack.c.b16 %v1176, %v1174
      %v1331 = vpack.c.b16 %v1179, %v1177
      %v1332 = vpack.c.b16 %v1180, %v1178
      %v1333 = vpack.c.b16 %v1183, %v1181
      %v1334 = vpack.c.b16 %v1184, %v1182
      %v1335 = vpack.c.b16 %v1187, %v1185
      %v1336 = vpack.c.b16 %v1188, %v1186
      %v1337 = vpack.c.b16 %v1191, %v1189
      %v1338 = vpack.c.b16 %v1192, %v1190
      %v1339 = vpack.c.b16 %v1195, %v1193
      %v1340 = vpack.c.b16 %v1196, %v1194
      %1485 = vmatpush.bf16.msra.mxu0 %v1211
      %1486 = vmatpush.bf16.msra.mxu0 %v1209
      %1487 = vmatpush.bf16.msra.mxu0 %v1207
      %1488 = vmatpush.bf16.msra.mxu0 %v1205
      %1489 = vmatpush.bf16.msra.mxu0 %v1203
      %1490 = vmatpush.bf16.msra.mxu0 %v1201
      %1491 = vmatpush.bf16.msra.mxu0 %v1199
      %1492 = vmatpush.bf16.msra.mxu0 %v1197
      %1493 = vmatmul.bf16.gmra.mxu0 %v693
      %v1494 = vpop.f32.mrf.mxu0
      %v1495 = vadd.f32 %v577, %v1494
      %v1496 = vpop.f32.mrf.mxu0
      %v1497 = vadd.f32 %v577, %v1496
      %1498 = vmatmul.bf16.gmra.mxu0 %v702
      %v1499 = vpop.f32.mrf.mxu0
      %v1500 = vadd.f32 %v577, %v1499
      %v1501 = vpop.f32.mrf.mxu0
      %v1502 = vadd.f32 %v577, %v1501
      %1503 = vmatmul.bf16.gmra.mxu0 %v711
      %v1504 = vpop.f32.mrf.mxu0
      %v1505 = vadd.f32 %v577, %v1504
      %v1506 = vpop.f32.mrf.mxu0
      %v1507 = vadd.f32 %v577, %v1506
      %1508 = vmatmul.bf16.gmra.mxu0 %v720
      %v1509 = vpop.f32.mrf.mxu0
      %v1510 = vadd.f32 %v577, %v1509
      %v1511 = vpop.f32.mrf.mxu0
      %v1512 = vadd.f32 %v577, %v1511
      %1513 = vdwg.mxu0
      %1514 = vmatpush.bf16.msra.mxu0 %v1227
      %1515 = vmatpush.bf16.msra.mxu0 %v1225
      %1516 = vmatpush.bf16.msra.mxu0 %v1223
      %1517 = vmatpush.bf16.msra.mxu0 %v1221
      %1518 = vmatpush.bf16.msra.mxu0 %v1219
      %1519 = vmatpush.bf16.msra.mxu0 %v1217
      %1520 = vmatpush.bf16.msra.mxu0 %v1215
      %1521 = vmatpush.bf16.msra.mxu0 %v1213
      %1522 = vmatmul.bf16.gmra.mxu0 %v694
      %v1523 = vpop.f32.mrf.mxu0
      %v1524 = vadd.f32 %v1495, %v1523
      %v1525 = vpop.f32.mrf.mxu0
      %v1526 = vadd.f32 %v1497, %v1525
      %1527 = vmatmul.bf16.gmra.mxu0 %v703
      %v1528 = vpop.f32.mrf.mxu0
      %v1529 = vadd.f32 %v1500, %v1528
      %v1530 = vpop.f32.mrf.mxu0
      %v1531 = vadd.f32 %v1502, %v1530
      %1532 = vmatmul.bf16.gmra.mxu0 %v712
      %v1533 = vpop.f32.mrf.mxu0
      %v1534 = vadd.f32 %v1505, %v1533
      %v1535 = vpop.f32.mrf.mxu0
      %v1536 = vadd.f32 %v1507, %v1535
      %1537 = vmatmul.bf16.gmra.mxu0 %v721
      %v1538 = vpop.f32.mrf.mxu0
      %v1539 = vadd.f32 %v1510, %v1538
      %v1540 = vpop.f32.mrf.mxu0
      %v1541 = vadd.f32 %v1512, %v1540
      %1542 = vdwg.mxu0
      %1543 = vmatpush.bf16.msra.mxu0 %v1243
      %1544 = vmatpush.bf16.msra.mxu0 %v1241
      %1545 = vmatpush.bf16.msra.mxu0 %v1239
      %1546 = vmatpush.bf16.msra.mxu0 %v1237
      %1547 = vmatpush.bf16.msra.mxu0 %v1235
      %1548 = vmatpush.bf16.msra.mxu0 %v1233
      %1549 = vmatpush.bf16.msra.mxu0 %v1231
      %1550 = vmatpush.bf16.msra.mxu0 %v1229
      %1551 = vmatmul.bf16.gmra.mxu0 %v695
      %v1552 = vpop.f32.mrf.mxu0
      %v1553 = vadd.f32 %v1524, %v1552
      %v1554 = vpop.f32.mrf.mxu0
      %v1555 = vadd.f32 %v1526, %v1554
      %1556 = vmatmul.bf16.gmra.mxu0 %v704
      %v1557 = vpop.f32.mrf.mxu0
      %v1558 = vadd.f32 %v1529, %v1557
      %v1559 = vpop.f32.mrf.mxu0
      %v1560 = vadd.f32 %v1531, %v1559
      %1561 = vmatmul.bf16.gmra.mxu0 %v713
      %v1562 = vpop.f32.mrf.mxu0
      %v1563 = vadd.f32 %v1534, %v1562
      %v1564 = vpop.f32.mrf.mxu0
      %v1565 = vadd.f32 %v1536, %v1564
      %1566 = vmatmul.bf16.gmra.mxu0 %v722
      %v1567 = vpop.f32.mrf.mxu0
      %v1568 = vadd.f32 %v1539, %v1567
      %v1569 = vpop.f32.mrf.mxu0
      %v1570 = vadd.f32 %v1541, %v1569
      %1571 = vdwg.mxu0
      %1572 = vmatpush.bf16.msra.mxu0 %v1259
      %1573 = vmatpush.bf16.msra.mxu0 %v1257
      %1574 = vmatpush.bf16.msra.mxu0 %v1255
      %1575 = vmatpush.bf16.msra.mxu0 %v1253
      %1576 = vmatpush.bf16.msra.mxu0 %v1251
      %1577 = vmatpush.bf16.msra.mxu0 %v1249
      %1578 = vmatpush.bf16.msra.mxu0 %v1247
      %1579 = vmatpush.bf16.msra.mxu0 %v1245
      %1580 = vmatmul.bf16.gmra.mxu0 %v696
      %v1581 = vpop.f32.mrf.mxu0
      %v1582 = vadd.f32 %v1553, %v1581
      %v1583 = vpop.f32.mrf.mxu0
      %v1584 = vadd.f32 %v1555, %v1583
      %1585 = vmatmul.bf16.gmra.mxu0 %v705
      %v1586 = vpop.f32.mrf.mxu0
      %v1587 = vadd.f32 %v1558, %v1586
      %v1588 = vpop.f32.mrf.mxu0
      %v1589 = vadd.f32 %v1560, %v1588
      %1590 = vmatmul.bf16.gmra.mxu0 %v714
      %v1591 = vpop.f32.mrf.mxu0
      %v1592 = vadd.f32 %v1563, %v1591
      %v1593 = vpop.f32.mrf.mxu0
      %v1594 = vadd.f32 %v1565, %v1593
      %1595 = vmatmul.bf16.gmra.mxu0 %v723
      %v1596 = vpop.f32.mrf.mxu0
      %v1597 = vadd.f32 %v1568, %v1596
      %v1598 = vpop.f32.mrf.mxu0
      %v1599 = vadd.f32 %v1570, %v1598
      %1600 = vdwg.mxu0
      %1601 = vmatpush.bf16.msra.mxu0 %v1275
      %1602 = vmatpush.bf16.msra.mxu0 %v1273
      %1603 = vmatpush.bf16.msra.mxu0 %v1271
      %1604 = vmatpush.bf16.msra.mxu0 %v1269
      %1605 = vmatpush.bf16.msra.mxu0 %v1267
      %1606 = vmatpush.bf16.msra.mxu0 %v1265
      %1607 = vmatpush.bf16.msra.mxu0 %v1263
      %1608 = vmatpush.bf16.msra.mxu0 %v1261
      %1609 = vmatmul.bf16.gmra.mxu0 %v697
      %v1610 = vpop.f32.mrf.mxu0
      %v1611 = vadd.f32 %v1582, %v1610
      %v1612 = vpop.f32.mrf.mxu0
      %v1613 = vadd.f32 %v1584, %v1612
      %1614 = vmatmul.bf16.gmra.mxu0 %v706
      %v1615 = vpop.f32.mrf.mxu0
      %v1616 = vadd.f32 %v1587, %v1615
      %v1617 = vpop.f32.mrf.mxu0
      %v1618 = vadd.f32 %v1589, %v1617
      %1619 = vmatmul.bf16.gmra.mxu0 %v715
      %v1620 = vpop.f32.mrf.mxu0
      %v1621 = vadd.f32 %v1592, %v1620
      %v1622 = vpop.f32.mrf.mxu0
      %v1623 = vadd.f32 %v1594, %v1622
      %1624 = vmatmul.bf16.gmra.mxu0 %v724
      %v1625 = vpop.f32.mrf.mxu0
      %v1626 = vadd.f32 %v1597, %v1625
      %v1627 = vpop.f32.mrf.mxu0
      %v1628 = vadd.f32 %v1599, %v1627
      %1629 = vdwg.mxu0
      %1630 = vmatpush.bf16.msra.mxu0 %v1291
      %1631 = vmatpush.bf16.msra.mxu0 %v1289
      %1632 = vmatpush.bf16.msra.mxu0 %v1287
      %1633 = vmatpush.bf16.msra.mxu0 %v1285
      %1634 = vmatpush.bf16.msra.mxu0 %v1283
      %1635 = vmatpush.bf16.msra.mxu0 %v1281
      %1636 = vmatpush.bf16.msra.mxu0 %v1279
      %1637 = vmatpush.bf16.msra.mxu0 %v1277
      %1638 = vmatmul.bf16.gmra.mxu0 %v698
      %v1639 = vpop.f32.mrf.mxu0
      %v1640 = vadd.f32 %v1611, %v1639
      %v1641 = vpop.f32.mrf.mxu0
      %v1642 = vadd.f32 %v1613, %v1641
      %1643 = vmatmul.bf16.gmra.mxu0 %v707
      %v1644 = vpop.f32.mrf.mxu0
      %v1645 = vadd.f32 %v1616, %v1644
      %v1646 = vpop.f32.mrf.mxu0
      %v1647 = vadd.f32 %v1618, %v1646
      %1648 = vmatmul.bf16.gmra.mxu0 %v716
      %v1649 = vpop.f32.mrf.mxu0
      %v1650 = vadd.f32 %v1621, %v1649
      %v1651 = vpop.f32.mrf.mxu0
      %v1652 = vadd.f32 %v1623, %v1651
      %1653 = vmatmul.bf16.gmra.mxu0 %v725
      %v1654 = vpop.f32.mrf.mxu0
      %v1655 = vadd.f32 %v1626, %v1654
      %v1656 = vpop.f32.mrf.mxu0
      %v1657 = vadd.f32 %v1628, %v1656
      %1658 = vdwg.mxu0
      %1659 = vmatpush.bf16.msra.mxu0 %v1307
      %1660 = vmatpush.bf16.msra.mxu0 %v1305
      %1661 = vmatpush.bf16.msra.mxu0 %v1303
      %1662 = vmatpush.bf16.msra.mxu0 %v1301
      %1663 = vmatpush.bf16.msra.mxu0 %v1299
      %1664 = vmatpush.bf16.msra.mxu0 %v1297
      %1665 = vmatpush.bf16.msra.mxu0 %v1295
      %1666 = vmatpush.bf16.msra.mxu0 %v1293
      %1667 = vmatmul.bf16.gmra.mxu0 %v699
      %v1668 = vpop.f32.mrf.mxu0
      %v1669 = vadd.f32 %v1640, %v1668
      %v1670 = vpop.f32.mrf.mxu0
      %v1671 = vadd.f32 %v1642, %v1670
      %1672 = vmatmul.bf16.gmra.mxu0 %v708
      %v1673 = vpop.f32.mrf.mxu0
      %v1674 = vadd.f32 %v1645, %v1673
      %v1675 = vpop.f32.mrf.mxu0
      %v1676 = vadd.f32 %v1647, %v1675
      %1677 = vmatmul.bf16.gmra.mxu0 %v717
      %v1678 = vpop.f32.mrf.mxu0
      %v1679 = vadd.f32 %v1650, %v1678
      %v1680 = vpop.f32.mrf.mxu0
      %v1681 = vadd.f32 %v1652, %v1680
      %1682 = vmatmul.bf16.gmra.mxu0 %v726
      %v1683 = vpop.f32.mrf.mxu0
      %v1684 = vadd.f32 %v1655, %v1683
      %v1685 = vpop.f32.mrf.mxu0
      %v1686 = vadd.f32 %v1657, %v1685
      %1687 = vdwg.mxu0
      %1688 = vmatpush.bf16.msra.mxu0 %v1323
      %1689 = vmatpush.bf16.msra.mxu0 %v1321
      %1690 = vmatpush.bf16.msra.mxu0 %v1319
      %1691 = vmatpush.bf16.msra.mxu0 %v1317
      %1692 = vmatpush.bf16.msra.mxu0 %v1315
      %1693 = vmatpush.bf16.msra.mxu0 %v1313
      %1694 = vmatpush.bf16.msra.mxu0 %v1311
      %1695 = vmatpush.bf16.msra.mxu0 %v1309
      %1696 = vmatmul.bf16.gmra.mxu0 %v700
      %v1697 = vpop.f32.mrf.mxu0
      %v1698 = vadd.f32 %v1669, %v1697
      %v1699 = vpop.f32.mrf.mxu0
      %v1700 = vadd.f32 %v1671, %v1699
      %1701 = vmatmul.bf16.gmra.mxu0 %v709
      %v1702 = vpop.f32.mrf.mxu0
      %v1703 = vadd.f32 %v1674, %v1702
      %v1704 = vpop.f32.mrf.mxu0
      %v1705 = vadd.f32 %v1676, %v1704
      %1706 = vmatmul.bf16.gmra.mxu0 %v718
      %v1707 = vpop.f32.mrf.mxu0
      %v1708 = vadd.f32 %v1679, %v1707
      %v1709 = vpop.f32.mrf.mxu0
      %v1710 = vadd.f32 %v1681, %v1709
      %1711 = vmatmul.bf16.gmra.mxu0 %v727
      %v1712 = vpop.f32.mrf.mxu0
      %v1713 = vadd.f32 %v1684, %v1712
      %v1714 = vpop.f32.mrf.mxu0
      %v1715 = vadd.f32 %v1686, %v1714
      %1716 = vdwg.mxu0
      %1717 = vmatpush.bf16.msra.mxu0 %v1339
      %1718 = vmatpush.bf16.msra.mxu0 %v1337
      %1719 = vmatpush.bf16.msra.mxu0 %v1335
      %1720 = vmatpush.bf16.msra.mxu0 %v1333
      %1721 = vmatpush.bf16.msra.mxu0 %v1331
      %1722 = vmatpush.bf16.msra.mxu0 %v1329
      %1723 = vmatpush.bf16.msra.mxu0 %v1327
      %1724 = vmatpush.bf16.msra.mxu0 %v1325
      %1725 = vmatmul.bf16.gmra.mxu0 %v701
      %v1726 = vpop.f32.mrf.mxu0
      %v1727 = vadd.f32 %v1698, %v1726
      %v1728 = vpop.f32.mrf.mxu0
      %v1729 = vadd.f32 %v1700, %v1728
      %1730 = vmatmul.bf16.gmra.mxu0 %v710
      %v1731 = vpop.f32.mrf.mxu0
      %v1732 = vadd.f32 %v1703, %v1731
      %v1733 = vpop.f32.mrf.mxu0
      %v1734 = vadd.f32 %v1705, %v1733
      %1735 = vmatmul.bf16.gmra.mxu0 %v719
      %v1736 = vpop.f32.mrf.mxu0
      %v1737 = vadd.f32 %v1708, %v1736
      %v1738 = vpop.f32.mrf.mxu0
      %v1739 = vadd.f32 %v1710, %v1738
      %1740 = vmatmul.bf16.gmra.mxu0 %v728
      %v1741 = vpop.f32.mrf.mxu0
      %v1742 = vadd.f32 %v1713, %v1741
      %v1743 = vpop.f32.mrf.mxu0
      %v1744 = vadd.f32 %v1715, %v1743
      %1745 = vdwg.mxu0
      %1746 = vmatpush.bf16.msra.mxu0 %v1212
      %1747 = vmatpush.bf16.msra.mxu0 %v1210
      %1748 = vmatpush.bf16.msra.mxu0 %v1208
      %1749 = vmatpush.bf16.msra.mxu0 %v1206
      %1750 = vmatpush.bf16.msra.mxu0 %v1204
      %1751 = vmatpush.bf16.msra.mxu0 %v1202
      %1752 = vmatpush.bf16.msra.mxu0 %v1200
      %1753 = vmatpush.bf16.msra.mxu0 %v1198
      %1754 = vmatmul.bf16.gmra.mxu0 %v693
      %v1755 = vpop.f32.mrf.mxu0
      %v1756 = vadd.f32 %v578, %v1755
      %v1757 = vpop.f32.mrf.mxu0
      %v1758 = vadd.f32 %v578, %v1757
      %1759 = vmatmul.bf16.gmra.mxu0 %v702
      %v1760 = vpop.f32.mrf.mxu0
      %v1761 = vadd.f32 %v578, %v1760
      %v1762 = vpop.f32.mrf.mxu0
      %v1763 = vadd.f32 %v578, %v1762
      %1764 = vmatmul.bf16.gmra.mxu0 %v711
      %v1765 = vpop.f32.mrf.mxu0
      %v1766 = vadd.f32 %v578, %v1765
      %v1767 = vpop.f32.mrf.mxu0
      %v1768 = vadd.f32 %v578, %v1767
      %1769 = vmatmul.bf16.gmra.mxu0 %v720
      %v1770 = vpop.f32.mrf.mxu0
      %v1771 = vadd.f32 %v578, %v1770
      %v1772 = vpop.f32.mrf.mxu0
      %v1773 = vadd.f32 %v578, %v1772
      %1774 = vdwg.mxu0
      %1775 = vmatpush.bf16.msra.mxu0 %v1228
      %1776 = vmatpush.bf16.msra.mxu0 %v1226
      %1777 = vmatpush.bf16.msra.mxu0 %v1224
      %1778 = vmatpush.bf16.msra.mxu0 %v1222
      %1779 = vmatpush.bf16.msra.mxu0 %v1220
      %1780 = vmatpush.bf16.msra.mxu0 %v1218
      %1781 = vmatpush.bf16.msra.mxu0 %v1216
      %1782 = vmatpush.bf16.msra.mxu0 %v1214
      %1783 = vmatmul.bf16.gmra.mxu0 %v694
      %v1784 = vpop.f32.mrf.mxu0
      %v1785 = vadd.f32 %v1756, %v1784
      %v1786 = vpop.f32.mrf.mxu0
      %v1787 = vadd.f32 %v1758, %v1786
      %1788 = vmatmul.bf16.gmra.mxu0 %v703
      %v1789 = vpop.f32.mrf.mxu0
      %v1790 = vadd.f32 %v1761, %v1789
      %v1791 = vpop.f32.mrf.mxu0
      %v1792 = vadd.f32 %v1763, %v1791
      %1793 = vmatmul.bf16.gmra.mxu0 %v712
      %v1794 = vpop.f32.mrf.mxu0
      %v1795 = vadd.f32 %v1766, %v1794
      %v1796 = vpop.f32.mrf.mxu0
      %v1797 = vadd.f32 %v1768, %v1796
      %1798 = vmatmul.bf16.gmra.mxu0 %v721
      %v1799 = vpop.f32.mrf.mxu0
      %v1800 = vadd.f32 %v1771, %v1799
      %v1801 = vpop.f32.mrf.mxu0
      %v1802 = vadd.f32 %v1773, %v1801
      %1803 = vdwg.mxu0
      %1804 = vmatpush.bf16.msra.mxu0 %v1244
      %1805 = vmatpush.bf16.msra.mxu0 %v1242
      %1806 = vmatpush.bf16.msra.mxu0 %v1240
      %1807 = vmatpush.bf16.msra.mxu0 %v1238
      %1808 = vmatpush.bf16.msra.mxu0 %v1236
      %1809 = vmatpush.bf16.msra.mxu0 %v1234
      %1810 = vmatpush.bf16.msra.mxu0 %v1232
      %1811 = vmatpush.bf16.msra.mxu0 %v1230
      %1812 = vmatmul.bf16.gmra.mxu0 %v695
      %v1813 = vpop.f32.mrf.mxu0
      %v1814 = vadd.f32 %v1785, %v1813
      %v1815 = vpop.f32.mrf.mxu0
      %v1816 = vadd.f32 %v1787, %v1815
      %1817 = vmatmul.bf16.gmra.mxu0 %v704
      %v1818 = vpop.f32.mrf.mxu0
      %v1819 = vadd.f32 %v1790, %v1818
      %v1820 = vpop.f32.mrf.mxu0
      %v1821 = vadd.f32 %v1792, %v1820
      %1822 = vmatmul.bf16.gmra.mxu0 %v713
      %v1823 = vpop.f32.mrf.mxu0
      %v1824 = vadd.f32 %v1795, %v1823
      %v1825 = vpop.f32.mrf.mxu0
      %v1826 = vadd.f32 %v1797, %v1825
      %1827 = vmatmul.bf16.gmra.mxu0 %v722
      %v1828 = vpop.f32.mrf.mxu0
      %v1829 = vadd.f32 %v1800, %v1828
      %v1830 = vpop.f32.mrf.mxu0
      %v1831 = vadd.f32 %v1802, %v1830
      %1832 = vdwg.mxu0
      %1833 = vmatpush.bf16.msra.mxu0 %v1260
      %1834 = vmatpush.bf16.msra.mxu0 %v1258
      %1835 = vmatpush.bf16.msra.mxu0 %v1256
      %1836 = vmatpush.bf16.msra.mxu0 %v1254
      %1837 = vmatpush.bf16.msra.mxu0 %v1252
      %1838 = vmatpush.bf16.msra.mxu0 %v1250
      %1839 = vmatpush.bf16.msra.mxu0 %v1248
      %1840 = vmatpush.bf16.msra.mxu0 %v1246
      %1841 = vmatmul.bf16.gmra.mxu0 %v696
      %v1842 = vpop.f32.mrf.mxu0
      %v1843 = vadd.f32 %v1814, %v1842
      %v1844 = vpop.f32.mrf.mxu0
      %v1845 = vadd.f32 %v1816, %v1844
      %1846 = vmatmul.bf16.gmra.mxu0 %v705
      %v1847 = vpop.f32.mrf.mxu0
      %v1848 = vadd.f32 %v1819, %v1847
      %v1849 = vpop.f32.mrf.mxu0
      %v1850 = vadd.f32 %v1821, %v1849
      %1851 = vmatmul.bf16.gmra.mxu0 %v714
      %v1852 = vpop.f32.mrf.mxu0
      %v1853 = vadd.f32 %v1824, %v1852
      %v1854 = vpop.f32.mrf.mxu0
      %v1855 = vadd.f32 %v1826, %v1854
      %1856 = vmatmul.bf16.gmra.mxu0 %v723
      %v1857 = vpop.f32.mrf.mxu0
      %v1858 = vadd.f32 %v1829, %v1857
      %v1859 = vpop.f32.mrf.mxu0
      %v1860 = vadd.f32 %v1831, %v1859
      %1861 = vdwg.mxu0
      %1862 = vmatpush.bf16.msra.mxu0 %v1276
      %1863 = vmatpush.bf16.msra.mxu0 %v1274
      %1864 = vmatpush.bf16.msra.mxu0 %v1272
      %1865 = vmatpush.bf16.msra.mxu0 %v1270
      %1866 = vmatpush.bf16.msra.mxu0 %v1268
      %1867 = vmatpush.bf16.msra.mxu0 %v1266
      %1868 = vmatpush.bf16.msra.mxu0 %v1264
      %1869 = vmatpush.bf16.msra.mxu0 %v1262
      %1870 = vmatmul.bf16.gmra.mxu0 %v697
      %v1871 = vpop.f32.mrf.mxu0
      %v1872 = vadd.f32 %v1843, %v1871
      %v1873 = vpop.f32.mrf.mxu0
      %v1874 = vadd.f32 %v1845, %v1873
      %1875 = vmatmul.bf16.gmra.mxu0 %v706
      %v1876 = vpop.f32.mrf.mxu0
      %v1877 = vadd.f32 %v1848, %v1876
      %v1878 = vpop.f32.mrf.mxu0
      %v1879 = vadd.f32 %v1850, %v1878
      %1880 = vmatmul.bf16.gmra.mxu0 %v715
      %v1881 = vpop.f32.mrf.mxu0
      %v1882 = vadd.f32 %v1853, %v1881
      %v1883 = vpop.f32.mrf.mxu0
      %v1884 = vadd.f32 %v1855, %v1883
      %1885 = vmatmul.bf16.gmra.mxu0 %v724
      %v1886 = vpop.f32.mrf.mxu0
      %v1887 = vadd.f32 %v1858, %v1886
      %v1888 = vpop.f32.mrf.mxu0
      %v1889 = vadd.f32 %v1860, %v1888
      %1890 = vdwg.mxu0
      %1891 = vmatpush.bf16.msra.mxu0 %v1292
      %1892 = vmatpush.bf16.msra.mxu0 %v1290
      %1893 = vmatpush.bf16.msra.mxu0 %v1288
      %1894 = vmatpush.bf16.msra.mxu0 %v1286
      %1895 = vmatpush.bf16.msra.mxu0 %v1284
      %1896 = vmatpush.bf16.msra.mxu0 %v1282
      %1897 = vmatpush.bf16.msra.mxu0 %v1280
      %1898 = vmatpush.bf16.msra.mxu0 %v1278
      %1899 = vmatmul.bf16.gmra.mxu0 %v698
      %v1900 = vpop.f32.mrf.mxu0
      %v1901 = vadd.f32 %v1872, %v1900
      %v1902 = vpop.f32.mrf.mxu0
      %v1903 = vadd.f32 %v1874, %v1902
      %1904 = vmatmul.bf16.gmra.mxu0 %v707
      %v1905 = vpop.f32.mrf.mxu0
      %v1906 = vadd.f32 %v1877, %v1905
      %v1907 = vpop.f32.mrf.mxu0
      %v1908 = vadd.f32 %v1879, %v1907
      %1909 = vmatmul.bf16.gmra.mxu0 %v716
      %v1910 = vpop.f32.mrf.mxu0
      %v1911 = vadd.f32 %v1882, %v1910
      %v1912 = vpop.f32.mrf.mxu0
      %v1913 = vadd.f32 %v1884, %v1912
      %1914 = vmatmul.bf16.gmra.mxu0 %v725
      %v1915 = vpop.f32.mrf.mxu0
      %v1916 = vadd.f32 %v1887, %v1915
      %v1917 = vpop.f32.mrf.mxu0
      %v1918 = vadd.f32 %v1889, %v1917
      %1919 = vdwg.mxu0
      %1920 = vmatpush.bf16.msra.mxu0 %v1308
      %1921 = vmatpush.bf16.msra.mxu0 %v1306
      %1922 = vmatpush.bf16.msra.mxu0 %v1304
      %1923 = vmatpush.bf16.msra.mxu0 %v1302
      %1924 = vmatpush.bf16.msra.mxu0 %v1300
      %1925 = vmatpush.bf16.msra.mxu0 %v1298
      %1926 = vmatpush.bf16.msra.mxu0 %v1296
      %1927 = vmatpush.bf16.msra.mxu0 %v1294
      %1928 = vmatmul.bf16.gmra.mxu0 %v699
      %v1929 = vpop.f32.mrf.mxu0
      %v1930 = vadd.f32 %v1901, %v1929
      %v1931 = vpop.f32.mrf.mxu0
      %v1932 = vadd.f32 %v1903, %v1931
      %1933 = vmatmul.bf16.gmra.mxu0 %v708
      %v1934 = vpop.f32.mrf.mxu0
      %v1935 = vadd.f32 %v1906, %v1934
      %v1936 = vpop.f32.mrf.mxu0
      %v1937 = vadd.f32 %v1908, %v1936
      %1938 = vmatmul.bf16.gmra.mxu0 %v717
      %v1939 = vpop.f32.mrf.mxu0
      %v1940 = vadd.f32 %v1911, %v1939
      %v1941 = vpop.f32.mrf.mxu0
      %v1942 = vadd.f32 %v1913, %v1941
      %1943 = vmatmul.bf16.gmra.mxu0 %v726
      %v1944 = vpop.f32.mrf.mxu0
      %v1945 = vadd.f32 %v1916, %v1944
      %v1946 = vpop.f32.mrf.mxu0
      %v1947 = vadd.f32 %v1918, %v1946
      %1948 = vdwg.mxu0
      %1949 = vmatpush.bf16.msra.mxu0 %v1324
      %1950 = vmatpush.bf16.msra.mxu0 %v1322
      %1951 = vmatpush.bf16.msra.mxu0 %v1320
      %1952 = vmatpush.bf16.msra.mxu0 %v1318
      %1953 = vmatpush.bf16.msra.mxu0 %v1316
      %1954 = vmatpush.bf16.msra.mxu0 %v1314
      %1955 = vmatpush.bf16.msra.mxu0 %v1312
      %1956 = vmatpush.bf16.msra.mxu0 %v1310
      %1957 = vmatmul.bf16.gmra.mxu0 %v700
      %v1958 = vpop.f32.mrf.mxu0
      %v1959 = vadd.f32 %v1930, %v1958
      %v1960 = vpop.f32.mrf.mxu0
      %v1961 = vadd.f32 %v1932, %v1960
      %1962 = vmatmul.bf16.gmra.mxu0 %v709
      %v1963 = vpop.f32.mrf.mxu0
      %v1964 = vadd.f32 %v1935, %v1963
      %v1965 = vpop.f32.mrf.mxu0
      %v1966 = vadd.f32 %v1937, %v1965
      %1967 = vmatmul.bf16.gmra.mxu0 %v718
      %v1968 = vpop.f32.mrf.mxu0
      %v1969 = vadd.f32 %v1940, %v1968
      %v1970 = vpop.f32.mrf.mxu0
      %v1971 = vadd.f32 %v1942, %v1970
      %1972 = vmatmul.bf16.gmra.mxu0 %v727
      %v1973 = vpop.f32.mrf.mxu0
      %v1974 = vadd.f32 %v1945, %v1973
      %v1975 = vpop.f32.mrf.mxu0
      %v1976 = vadd.f32 %v1947, %v1975
      %1977 = vdwg.mxu0
      %1978 = vmatpush.bf16.msra.mxu0 %v1340
      %1979 = vmatpush.bf16.msra.mxu0 %v1338
      %1980 = vmatpush.bf16.msra.mxu0 %v1336
      %1981 = vmatpush.bf16.msra.mxu0 %v1334
      %1982 = vmatpush.bf16.msra.mxu0 %v1332
      %1983 = vmatpush.bf16.msra.mxu0 %v1330
      %1984 = vmatpush.bf16.msra.mxu0 %v1328
      %1985 = vmatpush.bf16.msra.mxu0 %v1326
      %1986 = vmatmul.bf16.gmra.mxu0 %v701
      %v1987 = vpop.f32.mrf.mxu0
      %v1988 = vadd.f32 %v1959, %v1987
      %v1989 = vpop.f32.mrf.mxu0
      %v1990 = vadd.f32 %v1961, %v1989
      %1991 = vmatmul.bf16.gmra.mxu0 %v710
      %v1992 = vpop.f32.mrf.mxu0
      %v1993 = vadd.f32 %v1964, %v1992
      %v1994 = vpop.f32.mrf.mxu0
      %v1995 = vadd.f32 %v1966, %v1994
      %1996 = vmatmul.bf16.gmra.mxu0 %v719
      %v1997 = vpop.f32.mrf.mxu0
      %v1998 = vadd.f32 %v1969, %v1997
      %v1999 = vpop.f32.mrf.mxu0
      %v2000 = vadd.f32 %v1971, %v1999
      %2001 = vmatmul.bf16.gmra.mxu0 %v728
      %v2002 = vpop.f32.mrf.mxu0
      %v2003 = vadd.f32 %v1974, %v2002
      %v2004 = vpop.f32.mrf.mxu0
      %v2005 = vadd.f32 %v1976, %v2004
      %2006 = vdwg.mxu0
      %v2007 = vmax.f32 %v1727, 0.0
      %v2008 = vmax.f32 %v1988, 0.0
      %v2009 = vmax.f32 %v1729, 0.0
      %v2010 = vmax.f32 %v1990, 0.0
      %v2011 = vmax.f32 %v1732, 0.0
      %v2012 = vmax.f32 %v1993, 0.0
      %v2013 = vmax.f32 %v1734, 0.0
      %v2014 = vmax.f32 %v1995, 0.0
      %v2015 = vmax.f32 %v1737, 0.0
      %v2016 = vmax.f32 %v1998, 0.0
      %v2017 = vmax.f32 %v1739, 0.0
      %v2018 = vmax.f32 %v2000, 0.0
      %v2019 = vmax.f32 %v1742, 0.0
      %v2020 = vmax.f32 %v2003, 0.0
      %v2021 = vmax.f32 %v1744, 0.0
      %v2022 = vmax.f32 %v2005, 0.0
      %2023 = vst [vmem:[#allocation2] sm:$0xff] %v2007
      %2024 = vst [vmem:[#allocation2 + $0x8] sm:$0xff] %v2008
      %2025 = vst [vmem:[#allocation2 + $0x10] sm:$0xff] %v2009
      %2026 = vst [vmem:[#allocation2 + $0x18] sm:$0xff] %v2010
      %2027 = vst [vmem:[#allocation2 + $0x20] sm:$0xff] %v2011
      %2028 = vst [vmem:[#allocation2 + $0x28] sm:$0xff] %v2012
      %2029 = vst [vmem:[#allocation2 + $0x30] sm:$0xff] %v2013
      %2030 = vst [vmem:[#allocation2 + $0x38] sm:$0xff] %v2014
      %2031 = vst [vmem:[#allocation2 + $0x40] sm:$0xff] %v2015
      %2032 = vst [vmem:[#allocation2 + $0x48] sm:$0xff] %v2016
      %2033 = vst [vmem:[#allocation2 + $0x50] sm:$0xff] %v2017
      %2034 = vst [vmem:[#allocation2 + $0x58] sm:$0xff] %v2018
      %2035 = vst [vmem:[#allocation2 + $0x60] sm:$0xff] %v2019
      %2036 = vst [vmem:[#allocation2 + $0x68] sm:$0xff] %v2020
      %2037 = vst [vmem:[#allocation2 + $0x70] sm:$0xff] %v2021
      %2038 = vst [vmem:[#allocation2 + $0x78] sm:$0xff] %v2022
      %v2039 = vld [vmem:[%s3] sm:$0xff]
      %v2040 = vld [vmem:[%s3 + $0x8] sm:$0xff]
      %v2041 = vld [vmem:[%s3 + $0x10] sm:$0xff]
      %v2042 = vld [vmem:[%s3 + $0x18] sm:$0xff]
      %v2043 = vld [vmem:[%s3 + $0x20] sm:$0xff]
      %v2044 = vld [vmem:[%s3 + $0x28] sm:$0xff]
      %v2045 = vld [vmem:[%s3 + $0x30] sm:$0xff]
      %v2046 = vld [vmem:[%s3 + $0x38] sm:$0xff]
      %v2047 = vld [vmem:[%s3 + $0x40] sm:$0xff]
      %v2048 = vld [vmem:[%s3 + $0x48] sm:$0xff]
      %v2049 = vld [vmem:[%s3 + $0x50] sm:$0xff]
      %v2050 = vld [vmem:[%s3 + $0x58] sm:$0xff]
      %v2051 = vld [vmem:[%s3 + $0x60] sm:$0xff]
      %v2052 = vld [vmem:[%s3 + $0x68] sm:$0xff]
      %v2053 = vld [vmem:[%s3 + $0x70] sm:$0xff]
      %v2054 = vld [vmem:[%s3 + $0x78] sm:$0xff]
      %v2055 = vld [vmem:[%s3 + $0x80] sm:$0xff]
      %v2056 = vld [vmem:[%s3 + $0x88] sm:$0xff]
      %v2057 = vld [vmem:[%s3 + $0x90] sm:$0xff]
      %v2058 = vld [vmem:[%s3 + $0x98] sm:$0xff]
      %v2059 = vld [vmem:[%s3 + $0xa0] sm:$0xff]
      %v2060 = vld [vmem:[%s3 + $0xa8] sm:$0xff]
      %v2061 = vld [vmem:[%s3 + $0xb0] sm:$0xff]
      %v2062 = vld [vmem:[%s3 + $0xb8] sm:$0xff]
      %v2063 = vld [vmem:[%s3 + $0xc0] sm:$0xff]
      %v2064 = vld [vmem:[%s3 + $0xc8] sm:$0xff]
      %v2065 = vld [vmem:[%s3 + $0xd0] sm:$0xff]
      %v2066 = vld [vmem:[%s3 + $0xd8] sm:$0xff]
      %v2067 = vld [vmem:[%s3 + $0xe0] sm:$0xff]
      %v2068 = vld [vmem:[%s3 + $0xe8] sm:$0xff]
      %v2069 = vld [vmem:[%s3 + $0xf0] sm:$0xff]
      %v2070 = vld [vmem:[%s3 + $0xf8] sm:$0xff]
      %v2071 = vld [vmem:[%s3 + $0x100] sm:$0xff]
      %v2072 = vld [vmem:[%s3 + $0x108] sm:$0xff]
      %v2073 = vld [vmem:[%s3 + $0x110] sm:$0xff]
      %v2074 = vld [vmem:[%s3 + $0x118] sm:$0xff]
      %v2075 = vld [vmem:[%s3 + $0x120] sm:$0xff]
      %v2076 = vld [vmem:[%s3 + $0x128] sm:$0xff]
      %v2077 = vld [vmem:[%s3 + $0x130] sm:$0xff]
      %v2078 = vld [vmem:[%s3 + $0x138] sm:$0xff]
      %v2079 = vld [vmem:[%s3 + $0x140] sm:$0xff]
      %v2080 = vld [vmem:[%s3 + $0x148] sm:$0xff]
      %v2081 = vld [vmem:[%s3 + $0x150] sm:$0xff]
      %v2082 = vld [vmem:[%s3 + $0x158] sm:$0xff]
      %v2083 = vld [vmem:[%s3 + $0x160] sm:$0xff]
      %v2084 = vld [vmem:[%s3 + $0x168] sm:$0xff]
      %v2085 = vld [vmem:[%s3 + $0x170] sm:$0xff]
      %v2086 = vld [vmem:[%s3 + $0x178] sm:$0xff]
      %v2087 = vld [vmem:[%s3 + $0x180] sm:$0xff]
      %v2088 = vld [vmem:[%s3 + $0x188] sm:$0xff]
      %v2089 = vld [vmem:[%s3 + $0x190] sm:$0xff]
      %v2090 = vld [vmem:[%s3 + $0x198] sm:$0xff]
      %v2091 = vld [vmem:[%s3 + $0x1a0] sm:$0xff]
      %v2092 = vld [vmem:[%s3 + $0x1a8] sm:$0xff]
      %v2093 = vld [vmem:[%s3 + $0x1b0] sm:$0xff]
      %v2094 = vld [vmem:[%s3 + $0x1b8] sm:$0xff]
      %v2095 = vld [vmem:[%s3 + $0x1c0] sm:$0xff]
      %v2096 = vld [vmem:[%s3 + $0x1c8] sm:$0xff]
      %v2097 = vld [vmem:[%s3 + $0x1d0] sm:$0xff]
      %v2098 = vld [vmem:[%s3 + $0x1d8] sm:$0xff]
      %v2099 = vld [vmem:[%s3 + $0x1e0] sm:$0xff]
      %v2100 = vld [vmem:[%s3 + $0x1e8] sm:$0xff]
      %v2101 = vld [vmem:[%s3 + $0x1f0] sm:$0xff]
      %v2102 = vld [vmem:[%s3 + $0x1f8] sm:$0xff]
      %v2103 = vld [vmem:[%s3 + $0x200] sm:$0xff]
      %v2104 = vld [vmem:[%s3 + $0x208] sm:$0xff]
      %v2105 = vld [vmem:[%s3 + $0x210] sm:$0xff]
      %v2106 = vld [vmem:[%s3 + $0x218] sm:$0xff]
      %v2107 = vld [vmem:[%s3 + $0x220] sm:$0xff]
      %v2108 = vld [vmem:[%s3 + $0x228] sm:$0xff]
      %v2109 = vld [vmem:[%s3 + $0x230] sm:$0xff]
      %v2110 = vld [vmem:[%s3 + $0x238] sm:$0xff]
      %v2111 = vld [vmem:[%s3 + $0x240] sm:$0xff]
      %v2112 = vld [vmem:[%s3 + $0x248] sm:$0xff]
      %v2113 = vld [vmem:[%s3 + $0x250] sm:$0xff]
      %v2114 = vld [vmem:[%s3 + $0x258] sm:$0xff]
      %v2115 = vld [vmem:[%s3 + $0x260] sm:$0xff]
      %v2116 = vld [vmem:[%s3 + $0x268] sm:$0xff]
      %v2117 = vld [vmem:[%s3 + $0x270] sm:$0xff]
      %v2118 = vld [vmem:[%s3 + $0x278] sm:$0xff]
      %v2119 = vld [vmem:[%s3 + $0x280] sm:$0xff]
      %v2120 = vld [vmem:[%s3 + $0x288] sm:$0xff]
      %v2121 = vld [vmem:[%s3 + $0x290] sm:$0xff]
      %v2122 = vld [vmem:[%s3 + $0x298] sm:$0xff]
      %v2123 = vld [vmem:[%s3 + $0x2a0] sm:$0xff]
      %v2124 = vld [vmem:[%s3 + $0x2a8] sm:$0xff]
      %v2125 = vld [vmem:[%s3 + $0x2b0] sm:$0xff]
      %v2126 = vld [vmem:[%s3 + $0x2b8] sm:$0xff]
      %v2127 = vld [vmem:[%s3 + $0x2c0] sm:$0xff]
      %v2128 = vld [vmem:[%s3 + $0x2c8] sm:$0xff]
      %v2129 = vld [vmem:[%s3 + $0x2d0] sm:$0xff]
      %v2130 = vld [vmem:[%s3 + $0x2d8] sm:$0xff]
      %v2131 = vld [vmem:[%s3 + $0x2e0] sm:$0xff]
      %v2132 = vld [vmem:[%s3 + $0x2e8] sm:$0xff]
      %v2133 = vld [vmem:[%s3 + $0x2f0] sm:$0xff]
      %v2134 = vld [vmem:[%s3 + $0x2f8] sm:$0xff]
      %v2135 = vld [vmem:[%s3 + $0x300] sm:$0xff]
      %v2136 = vld [vmem:[%s3 + $0x308] sm:$0xff]
      %v2137 = vld [vmem:[%s3 + $0x310] sm:$0xff]
      %v2138 = vld [vmem:[%s3 + $0x318] sm:$0xff]
      %v2139 = vld [vmem:[%s3 + $0x320] sm:$0xff]
      %v2140 = vld [vmem:[%s3 + $0x328] sm:$0xff]
      %v2141 = vld [vmem:[%s3 + $0x330] sm:$0xff]
      %v2142 = vld [vmem:[%s3 + $0x338] sm:$0xff]
      %v2143 = vld [vmem:[%s3 + $0x340] sm:$0xff]
      %v2144 = vld [vmem:[%s3 + $0x348] sm:$0xff]
      %v2145 = vld [vmem:[%s3 + $0x350] sm:$0xff]
      %v2146 = vld [vmem:[%s3 + $0x358] sm:$0xff]
      %v2147 = vld [vmem:[%s3 + $0x360] sm:$0xff]
      %v2148 = vld [vmem:[%s3 + $0x368] sm:$0xff]
      %v2149 = vld [vmem:[%s3 + $0x370] sm:$0xff]
      %v2150 = vld [vmem:[%s3 + $0x378] sm:$0xff]
      %v2151 = vld [vmem:[%s3 + $0x380] sm:$0xff]
      %v2152 = vld [vmem:[%s3 + $0x388] sm:$0xff]
      %v2153 = vld [vmem:[%s3 + $0x390] sm:$0xff]
      %v2154 = vld [vmem:[%s3 + $0x398] sm:$0xff]
      %v2155 = vld [vmem:[%s3 + $0x3a0] sm:$0xff]
      %v2156 = vld [vmem:[%s3 + $0x3a8] sm:$0xff]
      %v2157 = vld [vmem:[%s3 + $0x3b0] sm:$0xff]
      %v2158 = vld [vmem:[%s3 + $0x3b8] sm:$0xff]
      %v2159 = vld [vmem:[%s3 + $0x3c0] sm:$0xff]
      %v2160 = vld [vmem:[%s3 + $0x3c8] sm:$0xff]
      %v2161 = vld [vmem:[%s3 + $0x3d0] sm:$0xff]
      %v2162 = vld [vmem:[%s3 + $0x3d8] sm:$0xff]
      %v2163 = vld [vmem:[%s3 + $0x3e0] sm:$0xff]
      %v2164 = vld [vmem:[%s3 + $0x3e8] sm:$0xff]
      %v2165 = vld [vmem:[%s3 + $0x3f0] sm:$0xff]
      %v2166 = vld [vmem:[%s3 + $0x3f8] sm:$0xff]
      %v2167 = vld [vmem:[%s4] sm:$0x3]
      %v2168 = vld [vmem:[#allocation2] ss:$8 sm:$0x3]
      %s2169 = scalar_lea.vmem [#allocation2], 16
      %v2170 = vld [vmem:[%s2169] ss:$8 sm:$0x3]
      %s2171 = scalar_lea.vmem [#allocation2], 32
      %v2172 = vld [vmem:[%s2171] ss:$8 sm:$0x3]
      %s2173 = scalar_lea.vmem [#allocation2], 48
      %v2174 = vld [vmem:[%s2173] ss:$8 sm:$0x3]
      %s2175 = scalar_lea.vmem [#allocation2], 64
      %v2176 = vld [vmem:[%s2175] ss:$8 sm:$0x3]
      %s2177 = scalar_lea.vmem [#allocation2], 80
      %v2178 = vld [vmem:[%s2177] ss:$8 sm:$0x3]
      %s2179 = scalar_lea.vmem [#allocation2], 96
      %v2180 = vld [vmem:[%s2179] ss:$8 sm:$0x3]
      %s2181 = scalar_lea.vmem [#allocation2], 112
      %v2182 = vld [vmem:[%s2181] ss:$8 sm:$0x3]
      %s2183 = scalar_lea.vmem [#allocation2], 1
      %v2184 = vld [vmem:[%s2183] ss:$8 sm:$0x3]
      %s2185 = scalar_lea.vmem [#allocation2], 17
      %v2186 = vld [vmem:[%s2185] ss:$8 sm:$0x3]
      %s2187 = scalar_lea.vmem [#allocation2], 33
      %v2188 = vld [vmem:[%s2187] ss:$8 sm:$0x3]
      %s2189 = scalar_lea.vmem [#allocation2], 49
      %v2190 = vld [vmem:[%s2189] ss:$8 sm:$0x3]
      %s2191 = scalar_lea.vmem [#allocation2], 65
      %v2192 = vld [vmem:[%s2191] ss:$8 sm:$0x3]
      %s2193 = scalar_lea.vmem [#allocation2], 81
      %v2194 = vld [vmem:[%s2193] ss:$8 sm:$0x3]
      %s2195 = scalar_lea.vmem [#allocation2], 97
      %v2196 = vld [vmem:[%s2195] ss:$8 sm:$0x3]
      %s2197 = scalar_lea.vmem [#allocation2], 113
      %v2198 = vld [vmem:[%s2197] ss:$8 sm:$0x3]
      %s2199 = scalar_lea.vmem [#allocation2], 2
      %v2200 = vld [vmem:[%s2199] ss:$8 sm:$0x3]
      %s2201 = scalar_lea.vmem [#allocation2], 18
      %v2202 = vld [vmem:[%s2201] ss:$8 sm:$0x3]
      %s2203 = scalar_lea.vmem [#allocation2], 34
      %v2204 = vld [vmem:[%s2203] ss:$8 sm:$0x3]
      %s2205 = scalar_lea.vmem [#allocation2], 50
      %v2206 = vld [vmem:[%s2205] ss:$8 sm:$0x3]
      %s2207 = scalar_lea.vmem [#allocation2], 66
      %v2208 = vld [vmem:[%s2207] ss:$8 sm:$0x3]
      %s2209 = scalar_lea.vmem [#allocation2], 82
      %v2210 = vld [vmem:[%s2209] ss:$8 sm:$0x3]
      %s2211 = scalar_lea.vmem [#allocation2], 98
      %v2212 = vld [vmem:[%s2211] ss:$8 sm:$0x3]
      %s2213 = scalar_lea.vmem [#allocation2], 114
      %v2214 = vld [vmem:[%s2213] ss:$8 sm:$0x3]
      %s2215 = scalar_lea.vmem [#allocation2], 3
      %v2216 = vld [vmem:[%s2215] ss:$8 sm:$0x3]
      %s2217 = scalar_lea.vmem [#allocation2], 19
      %v2218 = vld [vmem:[%s2217] ss:$8 sm:$0x3]
      %s2219 = scalar_lea.vmem [#allocation2], 35
      %v2220 = vld [vmem:[%s2219] ss:$8 sm:$0x3]
      %s2221 = scalar_lea.vmem [#allocation2], 51
      %v2222 = vld [vmem:[%s2221] ss:$8 sm:$0x3]
      %s2223 = scalar_lea.vmem [#allocation2], 67
      %v2224 = vld [vmem:[%s2223] ss:$8 sm:$0x3]
      %s2225 = scalar_lea.vmem [#allocation2], 83
      %v2226 = vld [vmem:[%s2225] ss:$8 sm:$0x3]
      %s2227 = scalar_lea.vmem [#allocation2], 99
      %v2228 = vld [vmem:[%s2227] ss:$8 sm:$0x3]
      %s2229 = scalar_lea.vmem [#allocation2], 115
      %v2230 = vld [vmem:[%s2229] ss:$8 sm:$0x3]
      %2239 = vst [vmem:[#allocation1] ss:$9 sm:$0xff] %v2168
      %s2240 = scalar_lea.vmem [#allocation1], 1
      %2241 = vst [vmem:[%s2240] ss:$9 sm:$0xff] %v2170
      %s2242 = scalar_lea.vmem [#allocation1], 2
      %2243 = vst [vmem:[%s2242] ss:$9 sm:$0xff] %v2172
      %s2244 = scalar_lea.vmem [#allocation1], 3
      %2245 = vst [vmem:[%s2244] ss:$9 sm:$0xff] %v2174
      %s2246 = scalar_lea.vmem [#allocation1], 4
      %2247 = vst [vmem:[%s2246] ss:$9 sm:$0xff] %v2176
      %s2248 = scalar_lea.vmem [#allocation1], 5
      %2249 = vst [vmem:[%s2248] ss:$9 sm:$0xff] %v2178
      %s2250 = scalar_lea.vmem [#allocation1], 6
      %2251 = vst [vmem:[%s2250] ss:$9 sm:$0xff] %v2180
      %s2252 = scalar_lea.vmem [#allocation1], 7
      %2253 = vst [vmem:[%s2252] ss:$9 sm:$0xff] %v2182
      %v2254 = vld [vmem:[#allocation1] sm:$0xff]
      %v2255 = vld [vmem:[#allocation1 + $0x9] sm:$0xff]
      %2266 = vst [vmem:[#allocation1] ss:$9 sm:$0xff] %v2184
      %s2267 = scalar_lea.vmem [#allocation1], 1
      %2268 = vst [vmem:[%s2267] ss:$9 sm:$0xff] %v2186
      %s2269 = scalar_lea.vmem [#allocation1], 2
      %2270 = vst [vmem:[%s2269] ss:$9 sm:$0xff] %v2188
      %s2271 = scalar_lea.vmem [#allocation1], 3
      %2272 = vst [vmem:[%s2271] ss:$9 sm:$0xff] %v2190
      %s2273 = scalar_lea.vmem [#allocation1], 4
      %2274 = vst [vmem:[%s2273] ss:$9 sm:$0xff] %v2192
      %s2275 = scalar_lea.vmem [#allocation1], 5
      %2276 = vst [vmem:[%s2275] ss:$9 sm:$0xff] %v2194
      %s2277 = scalar_lea.vmem [#allocation1], 6
      %2278 = vst [vmem:[%s2277] ss:$9 sm:$0xff] %v2196
      %s2279 = scalar_lea.vmem [#allocation1], 7
      %2280 = vst [vmem:[%s2279] ss:$9 sm:$0xff] %v2198
      %v2281 = vld [vmem:[#allocation1] sm:$0xff]
      %v2282 = vld [vmem:[#allocation1 + $0x9] sm:$0xff]
      %2293 = vst [vmem:[#allocation1] ss:$9 sm:$0xff] %v2200
      %s2294 = scalar_lea.vmem [#allocation1], 1
      %2295 = vst [vmem:[%s2294] ss:$9 sm:$0xff] %v2202
      %s2296 = scalar_lea.vmem [#allocation1], 2
      %2297 = vst [vmem:[%s2296] ss:$9 sm:$0xff] %v2204
      %s2298 = scalar_lea.vmem [#allocation1], 3
      %2299 = vst [vmem:[%s2298] ss:$9 sm:$0xff] %v2206
      %s2300 = scalar_lea.vmem [#allocation1], 4
      %2301 = vst [vmem:[%s2300] ss:$9 sm:$0xff] %v2208
      %s2302 = scalar_lea.vmem [#allocation1], 5
      %2303 = vst [vmem:[%s2302] ss:$9 sm:$0xff] %v2210
      %s2304 = scalar_lea.vmem [#allocation1], 6
      %2305 = vst [vmem:[%s2304] ss:$9 sm:$0xff] %v2212
      %s2306 = scalar_lea.vmem [#allocation1], 7
      %2307 = vst [vmem:[%s2306] ss:$9 sm:$0xff] %v2214
      %v2308 = vld [vmem:[#allocation1] sm:$0xff]
      %v2309 = vld [vmem:[#allocation1 + $0x9] sm:$0xff]
      %2320 = vst [vmem:[#allocation1] ss:$9 sm:$0xff] %v2216
      %s2321 = scalar_lea.vmem [#allocation1], 1
      %2322 = vst [vmem:[%s2321] ss:$9 sm:$0xff] %v2218
      %s2323 = scalar_lea.vmem [#allocation1], 2
      %2324 = vst [vmem:[%s2323] ss:$9 sm:$0xff] %v2220
      %s2325 = scalar_lea.vmem [#allocation1], 3
      %2326 = vst [vmem:[%s2325] ss:$9 sm:$0xff] %v2222
      %s2327 = scalar_lea.vmem [#allocation1], 4
      %2328 = vst [vmem:[%s2327] ss:$9 sm:$0xff] %v2224
      %s2329 = scalar_lea.vmem [#allocation1], 5
      %2330 = vst [vmem:[%s2329] ss:$9 sm:$0xff] %v2226
      %s2331 = scalar_lea.vmem [#allocation1], 6
      %2332 = vst [vmem:[%s2331] ss:$9 sm:$0xff] %v2228
      %s2333 = scalar_lea.vmem [#allocation1], 7
      %2334 = vst [vmem:[%s2333] ss:$9 sm:$0xff] %v2230
      %v2335 = vld [vmem:[#allocation1] sm:$0xff]
      %v2336 = vld [vmem:[#allocation1 + $0x9] sm:$0xff]
      %v2339 = vpack.c.bf16 %v2254, %v2254
      %v2340 = vpack.c.bf16 %v2255, %v2255
      %v2341 = vpack.c.bf16 %v2281, %v2281
      %v2342 = vpack.c.bf16 %v2282, %v2282
      %v2343 = vpack.c.bf16 %v2308, %v2308
      %v2344 = vpack.c.bf16 %v2309, %v2309
      %v2345 = vpack.c.bf16 %v2335, %v2335
      %v2346 = vpack.c.bf16 %v2336, %v2336
      %v2348 = vperm.slane %v2167, 0
      %v2349 = vperm.slane %v2167, 1
      %v2480 = vunpack.c.l.b16 %v2039
      %v2481 = vunpack.c.h.b16 %v2039
      %v2482 = vunpack.c.l.b16 %v2040
      %v2483 = vunpack.c.h.b16 %v2040
      %v2484 = vunpack.c.l.b16 %v2041
      %v2485 = vunpack.c.h.b16 %v2041
      %v2486 = vunpack.c.l.b16 %v2042
      %v2487 = vunpack.c.h.b16 %v2042
      %v2488 = vunpack.c.l.b16 %v2043
      %v2489 = vunpack.c.h.b16 %v2043
      %v2490 = vunpack.c.l.b16 %v2044
      %v2491 = vunpack.c.h.b16 %v2044
      %v2492 = vunpack.c.l.b16 %v2045
      %v2493 = vunpack.c.h.b16 %v2045
      %v2494 = vunpack.c.l.b16 %v2046
      %v2495 = vunpack.c.h.b16 %v2046
      %v2496 = vunpack.c.l.b16 %v2047
      %v2497 = vunpack.c.h.b16 %v2047
      %v2498 = vunpack.c.l.b16 %v2048
      %v2499 = vunpack.c.h.b16 %v2048
      %v2500 = vunpack.c.l.b16 %v2049
      %v2501 = vunpack.c.h.b16 %v2049
      %v2502 = vunpack.c.l.b16 %v2050
      %v2503 = vunpack.c.h.b16 %v2050
      %v2504 = vunpack.c.l.b16 %v2051
      %v2505 = vunpack.c.h.b16 %v2051
      %v2506 = vunpack.c.l.b16 %v2052
      %v2507 = vunpack.c.h.b16 %v2052
      %v2508 = vunpack.c.l.b16 %v2053
      %v2509 = vunpack.c.h.b16 %v2053
      %v2510 = vunpack.c.l.b16 %v2054
      %v2511 = vunpack.c.h.b16 %v2054
      %v2512 = vunpack.c.l.b16 %v2055
      %v2513 = vunpack.c.h.b16 %v2055
      %v2514 = vunpack.c.l.b16 %v2056
      %v2515 = vunpack.c.h.b16 %v2056
      %v2516 = vunpack.c.l.b16 %v2057
      %v2517 = vunpack.c.h.b16 %v2057
      %v2518 = vunpack.c.l.b16 %v2058
      %v2519 = vunpack.c.h.b16 %v2058
      %v2520 = vunpack.c.l.b16 %v2059
      %v2521 = vunpack.c.h.b16 %v2059
      %v2522 = vunpack.c.l.b16 %v2060
      %v2523 = vunpack.c.h.b16 %v2060
      %v2524 = vunpack.c.l.b16 %v2061
      %v2525 = vunpack.c.h.b16 %v2061
      %v2526 = vunpack.c.l.b16 %v2062
      %v2527 = vunpack.c.h.b16 %v2062
      %v2528 = vunpack.c.l.b16 %v2063
      %v2529 = vunpack.c.h.b16 %v2063
      %v2530 = vunpack.c.l.b16 %v2064
      %v2531 = vunpack.c.h.b16 %v2064
      %v2532 = vunpack.c.l.b16 %v2065
      %v2533 = vunpack.c.h.b16 %v2065
      %v2534 = vunpack.c.l.b16 %v2066
      %v2535 = vunpack.c.h.b16 %v2066
      %v2536 = vunpack.c.l.b16 %v2067
      %v2537 = vunpack.c.h.b16 %v2067
      %v2538 = vunpack.c.l.b16 %v2068
      %v2539 = vunpack.c.h.b16 %v2068
      %v2540 = vunpack.c.l.b16 %v2069
      %v2541 = vunpack.c.h.b16 %v2069
      %v2542 = vunpack.c.l.b16 %v2070
      %v2543 = vunpack.c.h.b16 %v2070
      %v2544 = vunpack.c.l.b16 %v2071
      %v2545 = vunpack.c.h.b16 %v2071
      %v2546 = vunpack.c.l.b16 %v2072
      %v2547 = vunpack.c.h.b16 %v2072
      %v2548 = vunpack.c.l.b16 %v2073
      %v2549 = vunpack.c.h.b16 %v2073
      %v2550 = vunpack.c.l.b16 %v2074
      %v2551 = vunpack.c.h.b16 %v2074
      %v2552 = vunpack.c.l.b16 %v2075
      %v2553 = vunpack.c.h.b16 %v2075
      %v2554 = vunpack.c.l.b16 %v2076
      %v2555 = vunpack.c.h.b16 %v2076
      %v2556 = vunpack.c.l.b16 %v2077
      %v2557 = vunpack.c.h.b16 %v2077
      %v2558 = vunpack.c.l.b16 %v2078
      %v2559 = vunpack.c.h.b16 %v2078
      %v2560 = vunpack.c.l.b16 %v2079
      %v2561 = vunpack.c.h.b16 %v2079
      %v2562 = vunpack.c.l.b16 %v2080
      %v2563 = vunpack.c.h.b16 %v2080
      %v2564 = vunpack.c.l.b16 %v2081
      %v2565 = vunpack.c.h.b16 %v2081
      %v2566 = vunpack.c.l.b16 %v2082
      %v2567 = vunpack.c.h.b16 %v2082
      %v2568 = vunpack.c.l.b16 %v2083
      %v2569 = vunpack.c.h.b16 %v2083
      %v2570 = vunpack.c.l.b16 %v2084
      %v2571 = vunpack.c.h.b16 %v2084
      %v2572 = vunpack.c.l.b16 %v2085
      %v2573 = vunpack.c.h.b16 %v2085
      %v2574 = vunpack.c.l.b16 %v2086
      %v2575 = vunpack.c.h.b16 %v2086
      %v2576 = vunpack.c.l.b16 %v2087
      %v2577 = vunpack.c.h.b16 %v2087
      %v2578 = vunpack.c.l.b16 %v2088
      %v2579 = vunpack.c.h.b16 %v2088
      %v2580 = vunpack.c.l.b16 %v2089
      %v2581 = vunpack.c.h.b16 %v2089
      %v2582 = vunpack.c.l.b16 %v2090
      %v2583 = vunpack.c.h.b16 %v2090
      %v2584 = vunpack.c.l.b16 %v2091
      %v2585 = vunpack.c.h.b16 %v2091
      %v2586 = vunpack.c.l.b16 %v2092
      %v2587 = vunpack.c.h.b16 %v2092
      %v2588 = vunpack.c.l.b16 %v2093
      %v2589 = vunpack.c.h.b16 %v2093
      %v2590 = vunpack.c.l.b16 %v2094
      %v2591 = vunpack.c.h.b16 %v2094
      %v2592 = vunpack.c.l.b16 %v2095
      %v2593 = vunpack.c.h.b16 %v2095
      %v2594 = vunpack.c.l.b16 %v2096
      %v2595 = vunpack.c.h.b16 %v2096
      %v2596 = vunpack.c.l.b16 %v2097
      %v2597 = vunpack.c.h.b16 %v2097
      %v2598 = vunpack.c.l.b16 %v2098
      %v2599 = vunpack.c.h.b16 %v2098
      %v2600 = vunpack.c.l.b16 %v2099
      %v2601 = vunpack.c.h.b16 %v2099
      %v2602 = vunpack.c.l.b16 %v2100
      %v2603 = vunpack.c.h.b16 %v2100
      %v2604 = vunpack.c.l.b16 %v2101
      %v2605 = vunpack.c.h.b16 %v2101
      %v2606 = vunpack.c.l.b16 %v2102
      %v2607 = vunpack.c.h.b16 %v2102
      %v2608 = vunpack.c.l.b16 %v2103
      %v2609 = vunpack.c.h.b16 %v2103
      %v2610 = vunpack.c.l.b16 %v2104
      %v2611 = vunpack.c.h.b16 %v2104
      %v2612 = vunpack.c.l.b16 %v2105
      %v2613 = vunpack.c.h.b16 %v2105
      %v2614 = vunpack.c.l.b16 %v2106
      %v2615 = vunpack.c.h.b16 %v2106
      %v2616 = vunpack.c.l.b16 %v2107
      %v2617 = vunpack.c.h.b16 %v2107
      %v2618 = vunpack.c.l.b16 %v2108
      %v2619 = vunpack.c.h.b16 %v2108
      %v2620 = vunpack.c.l.b16 %v2109
      %v2621 = vunpack.c.h.b16 %v2109
      %v2622 = vunpack.c.l.b16 %v2110
      %v2623 = vunpack.c.h.b16 %v2110
      %v2624 = vunpack.c.l.b16 %v2111
      %v2625 = vunpack.c.h.b16 %v2111
      %v2626 = vunpack.c.l.b16 %v2112
      %v2627 = vunpack.c.h.b16 %v2112
      %v2628 = vunpack.c.l.b16 %v2113
      %v2629 = vunpack.c.h.b16 %v2113
      %v2630 = vunpack.c.l.b16 %v2114
      %v2631 = vunpack.c.h.b16 %v2114
      %v2632 = vunpack.c.l.b16 %v2115
      %v2633 = vunpack.c.h.b16 %v2115
      %v2634 = vunpack.c.l.b16 %v2116
      %v2635 = vunpack.c.h.b16 %v2116
      %v2636 = vunpack.c.l.b16 %v2117
      %v2637 = vunpack.c.h.b16 %v2117
      %v2638 = vunpack.c.l.b16 %v2118
      %v2639 = vunpack.c.h.b16 %v2118
      %v2640 = vunpack.c.l.b16 %v2119
      %v2641 = vunpack.c.h.b16 %v2119
      %v2642 = vunpack.c.l.b16 %v2120
      %v2643 = vunpack.c.h.b16 %v2120
      %v2644 = vunpack.c.l.b16 %v2121
      %v2645 = vunpack.c.h.b16 %v2121
      %v2646 = vunpack.c.l.b16 %v2122
      %v2647 = vunpack.c.h.b16 %v2122
      %v2648 = vunpack.c.l.b16 %v2123
      %v2649 = vunpack.c.h.b16 %v2123
      %v2650 = vunpack.c.l.b16 %v2124
      %v2651 = vunpack.c.h.b16 %v2124
      %v2652 = vunpack.c.l.b16 %v2125
      %v2653 = vunpack.c.h.b16 %v2125
      %v2654 = vunpack.c.l.b16 %v2126
      %v2655 = vunpack.c.h.b16 %v2126
      %v2656 = vunpack.c.l.b16 %v2127
      %v2657 = vunpack.c.h.b16 %v2127
      %v2658 = vunpack.c.l.b16 %v2128
      %v2659 = vunpack.c.h.b16 %v2128
      %v2660 = vunpack.c.l.b16 %v2129
      %v2661 = vunpack.c.h.b16 %v2129
      %v2662 = vunpack.c.l.b16 %v2130
      %v2663 = vunpack.c.h.b16 %v2130
      %v2664 = vunpack.c.l.b16 %v2131
      %v2665 = vunpack.c.h.b16 %v2131
      %v2666 = vunpack.c.l.b16 %v2132
      %v2667 = vunpack.c.h.b16 %v2132
      %v2668 = vunpack.c.l.b16 %v2133
      %v2669 = vunpack.c.h.b16 %v2133
      %v2670 = vunpack.c.l.b16 %v2134
      %v2671 = vunpack.c.h.b16 %v2134
      %v2672 = vunpack.c.l.b16 %v2135
      %v2673 = vunpack.c.h.b16 %v2135
      %v2674 = vunpack.c.l.b16 %v2136
      %v2675 = vunpack.c.h.b16 %v2136
      %v2676 = vunpack.c.l.b16 %v2137
      %v2677 = vunpack.c.h.b16 %v2137
      %v2678 = vunpack.c.l.b16 %v2138
      %v2679 = vunpack.c.h.b16 %v2138
      %v2680 = vunpack.c.l.b16 %v2139
      %v2681 = vunpack.c.h.b16 %v2139
      %v2682 = vunpack.c.l.b16 %v2140
      %v2683 = vunpack.c.h.b16 %v2140
      %v2684 = vunpack.c.l.b16 %v2141
      %v2685 = vunpack.c.h.b16 %v2141
      %v2686 = vunpack.c.l.b16 %v2142
      %v2687 = vunpack.c.h.b16 %v2142
      %v2688 = vunpack.c.l.b16 %v2143
      %v2689 = vunpack.c.h.b16 %v2143
      %v2690 = vunpack.c.l.b16 %v2144
      %v2691 = vunpack.c.h.b16 %v2144
      %v2692 = vunpack.c.l.b16 %v2145
      %v2693 = vunpack.c.h.b16 %v2145
      %v2694 = vunpack.c.l.b16 %v2146
      %v2695 = vunpack.c.h.b16 %v2146
      %v2696 = vunpack.c.l.b16 %v2147
      %v2697 = vunpack.c.h.b16 %v2147
      %v2698 = vunpack.c.l.b16 %v2148
      %v2699 = vunpack.c.h.b16 %v2148
      %v2700 = vunpack.c.l.b16 %v2149
      %v2701 = vunpack.c.h.b16 %v2149
      %v2702 = vunpack.c.l.b16 %v2150
      %v2703 = vunpack.c.h.b16 %v2150
      %v2704 = vunpack.c.l.b16 %v2151
      %v2705 = vunpack.c.h.b16 %v2151
      %v2706 = vunpack.c.l.b16 %v2152
      %v2707 = vunpack.c.h.b16 %v2152
      %v2708 = vunpack.c.l.b16 %v2153
      %v2709 = vunpack.c.h.b16 %v2153
      %v2710 = vunpack.c.l.b16 %v2154
      %v2711 = vunpack.c.h.b16 %v2154
      %v2712 = vunpack.c.l.b16 %v2155
      %v2713 = vunpack.c.h.b16 %v2155
      %v2714 = vunpack.c.l.b16 %v2156
      %v2715 = vunpack.c.h.b16 %v2156
      %v2716 = vunpack.c.l.b16 %v2157
      %v2717 = vunpack.c.h.b16 %v2157
      %v2718 = vunpack.c.l.b16 %v2158
      %v2719 = vunpack.c.h.b16 %v2158
      %v2720 = vunpack.c.l.b16 %v2159
      %v2721 = vunpack.c.h.b16 %v2159
      %v2722 = vunpack.c.l.b16 %v2160
      %v2723 = vunpack.c.h.b16 %v2160
      %v2724 = vunpack.c.l.b16 %v2161
      %v2725 = vunpack.c.h.b16 %v2161
      %v2726 = vunpack.c.l.b16 %v2162
      %v2727 = vunpack.c.h.b16 %v2162
      %v2728 = vunpack.c.l.b16 %v2163
      %v2729 = vunpack.c.h.b16 %v2163
      %v2730 = vunpack.c.l.b16 %v2164
      %v2731 = vunpack.c.h.b16 %v2164
      %v2732 = vunpack.c.l.b16 %v2165
      %v2733 = vunpack.c.h.b16 %v2165
      %v2734 = vunpack.c.l.b16 %v2166
      %v2735 = vunpack.c.h.b16 %v2166
      %v2736 = vpack.c.b16 %v2482, %v2480
      %v2737 = vpack.c.b16 %v2483, %v2481
      %v2738 = vpack.c.b16 %v2486, %v2484
      %v2739 = vpack.c.b16 %v2487, %v2485
      %v2740 = vpack.c.b16 %v2490, %v2488
      %v2741 = vpack.c.b16 %v2491, %v2489
      %v2742 = vpack.c.b16 %v2494, %v2492
      %v2743 = vpack.c.b16 %v2495, %v2493
      %v2744 = vpack.c.b16 %v2498, %v2496
      %v2745 = vpack.c.b16 %v2499, %v2497
      %v2746 = vpack.c.b16 %v2502, %v2500
      %v2747 = vpack.c.b16 %v2503, %v2501
      %v2748 = vpack.c.b16 %v2506, %v2504
      %v2749 = vpack.c.b16 %v2507, %v2505
      %v2750 = vpack.c.b16 %v2510, %v2508
      %v2751 = vpack.c.b16 %v2511, %v2509
      %v2752 = vpack.c.b16 %v2514, %v2512
      %v2753 = vpack.c.b16 %v2515, %v2513
      %v2754 = vpack.c.b16 %v2518, %v2516
      %v2755 = vpack.c.b16 %v2519, %v2517
      %v2756 = vpack.c.b16 %v2522, %v2520
      %v2757 = vpack.c.b16 %v2523, %v2521
      %v2758 = vpack.c.b16 %v2526, %v2524
      %v2759 = vpack.c.b16 %v2527, %v2525
      %v2760 = vpack.c.b16 %v2530, %v2528
      %v2761 = vpack.c.b16 %v2531, %v2529
      %v2762 = vpack.c.b16 %v2534, %v2532
      %v2763 = vpack.c.b16 %v2535, %v2533
      %v2764 = vpack.c.b16 %v2538, %v2536
      %v2765 = vpack.c.b16 %v2539, %v2537
      %v2766 = vpack.c.b16 %v2542, %v2540
      %v2767 = vpack.c.b16 %v2543, %v2541
      %v2768 = vpack.c.b16 %v2546, %v2544
      %v2769 = vpack.c.b16 %v2547, %v2545
      %v2770 = vpack.c.b16 %v2550, %v2548
      %v2771 = vpack.c.b16 %v2551, %v2549
      %v2772 = vpack.c.b16 %v2554, %v2552
      %v2773 = vpack.c.b16 %v2555, %v2553
      %v2774 = vpack.c.b16 %v2558, %v2556
      %v2775 = vpack.c.b16 %v2559, %v2557
      %v2776 = vpack.c.b16 %v2562, %v2560
      %v2777 = vpack.c.b16 %v2563, %v2561
      %v2778 = vpack.c.b16 %v2566, %v2564
      %v2779 = vpack.c.b16 %v2567, %v2565
      %v2780 = vpack.c.b16 %v2570, %v2568
      %v2781 = vpack.c.b16 %v2571, %v2569
      %v2782 = vpack.c.b16 %v2574, %v2572
      %v2783 = vpack.c.b16 %v2575, %v2573
      %v2784 = vpack.c.b16 %v2578, %v2576
      %v2785 = vpack.c.b16 %v2579, %v2577
      %v2786 = vpack.c.b16 %v2582, %v2580
      %v2787 = vpack.c.b16 %v2583, %v2581
      %v2788 = vpack.c.b16 %v2586, %v2584
      %v2789 = vpack.c.b16 %v2587, %v2585
      %v2790 = vpack.c.b16 %v2590, %v2588
      %v2791 = vpack.c.b16 %v2591, %v2589
      %v2792 = vpack.c.b16 %v2594, %v2592
      %v2793 = vpack.c.b16 %v2595, %v2593
      %v2794 = vpack.c.b16 %v2598, %v2596
      %v2795 = vpack.c.b16 %v2599, %v2597
      %v2796 = vpack.c.b16 %v2602, %v2600
      %v2797 = vpack.c.b16 %v2603, %v2601
      %v2798 = vpack.c.b16 %v2606, %v2604
      %v2799 = vpack.c.b16 %v2607, %v2605
      %v2800 = vpack.c.b16 %v2610, %v2608
      %v2801 = vpack.c.b16 %v2611, %v2609
      %v2802 = vpack.c.b16 %v2614, %v2612
      %v2803 = vpack.c.b16 %v2615, %v2613
      %v2804 = vpack.c.b16 %v2618, %v2616
      %v2805 = vpack.c.b16 %v2619, %v2617
      %v2806 = vpack.c.b16 %v2622, %v2620
      %v2807 = vpack.c.b16 %v2623, %v2621
      %v2808 = vpack.c.b16 %v2626, %v2624
      %v2809 = vpack.c.b16 %v2627, %v2625
      %v2810 = vpack.c.b16 %v2630, %v2628
      %v2811 = vpack.c.b16 %v2631, %v2629
      %v2812 = vpack.c.b16 %v2634, %v2632
      %v2813 = vpack.c.b16 %v2635, %v2633
      %v2814 = vpack.c.b16 %v2638, %v2636
      %v2815 = vpack.c.b16 %v2639, %v2637
      %v2816 = vpack.c.b16 %v2642, %v2640
      %v2817 = vpack.c.b16 %v2643, %v2641
      %v2818 = vpack.c.b16 %v2646, %v2644
      %v2819 = vpack.c.b16 %v2647, %v2645
      %v2820 = vpack.c.b16 %v2650, %v2648
      %v2821 = vpack.c.b16 %v2651, %v2649
      %v2822 = vpack.c.b16 %v2654, %v2652
      %v2823 = vpack.c.b16 %v2655, %v2653
      %v2824 = vpack.c.b16 %v2658, %v2656
      %v2825 = vpack.c.b16 %v2659, %v2657
      %v2826 = vpack.c.b16 %v2662, %v2660
      %v2827 = vpack.c.b16 %v2663, %v2661
      %v2828 = vpack.c.b16 %v2666, %v2664
      %v2829 = vpack.c.b16 %v2667, %v2665
      %v2830 = vpack.c.b16 %v2670, %v2668
      %v2831 = vpack.c.b16 %v2671, %v2669
      %v2832 = vpack.c.b16 %v2674, %v2672
      %v2833 = vpack.c.b16 %v2675, %v2673
      %v2834 = vpack.c.b16 %v2678, %v2676
      %v2835 = vpack.c.b16 %v2679, %v2677
      %v2836 = vpack.c.b16 %v2682, %v2680
      %v2837 = vpack.c.b16 %v2683, %v2681
      %v2838 = vpack.c.b16 %v2686, %v2684
      %v2839 = vpack.c.b16 %v2687, %v2685
      %v2840 = vpack.c.b16 %v2690, %v2688
      %v2841 = vpack.c.b16 %v2691, %v2689
      %v2842 = vpack.c.b16 %v2694, %v2692
      %v2843 = vpack.c.b16 %v2695, %v2693
      %v2844 = vpack.c.b16 %v2698, %v2696
      %v2845 = vpack.c.b16 %v2699, %v2697
      %v2846 = vpack.c.b16 %v2702, %v2700
      %v2847 = vpack.c.b16 %v2703, %v2701
      %v2848 = vpack.c.b16 %v2706, %v2704
      %v2849 = vpack.c.b16 %v2707, %v2705
      %v2850 = vpack.c.b16 %v2710, %v2708
      %v2851 = vpack.c.b16 %v2711, %v2709
      %v2852 = vpack.c.b16 %v2714, %v2712
      %v2853 = vpack.c.b16 %v2715, %v2713
      %v2854 = vpack.c.b16 %v2718, %v2716
      %v2855 = vpack.c.b16 %v2719, %v2717
      %v2856 = vpack.c.b16 %v2722, %v2720
      %v2857 = vpack.c.b16 %v2723, %v2721
      %v2858 = vpack.c.b16 %v2726, %v2724
      %v2859 = vpack.c.b16 %v2727, %v2725
      %v2860 = vpack.c.b16 %v2730, %v2728
      %v2861 = vpack.c.b16 %v2731, %v2729
      %v2862 = vpack.c.b16 %v2734, %v2732
      %v2863 = vpack.c.b16 %v2735, %v2733
      %2992 = vmatpush.bf16.msra.mxu0 %v2750
      %2993 = vmatpush.bf16.msra.mxu0 %v2748
      %2994 = vmatpush.bf16.msra.mxu0 %v2746
      %2995 = vmatpush.bf16.msra.mxu0 %v2744
      %2996 = vmatpush.bf16.msra.mxu0 %v2742
      %2997 = vmatpush.bf16.msra.mxu0 %v2740
      %2998 = vmatpush.bf16.msra.mxu0 %v2738
      %2999 = vmatpush.bf16.msra.mxu0 %v2736
      %3000 = vmatmul.bf16.gmra.mxu0 %v2339
      %v3001 = vpop.f32.mrf.mxu0
      %v3002 = vadd.f32 %v2348, %v3001
      %v3003 = vpop.f32.mrf.mxu0
      %3004 = vdwg.mxu0
      %3005 = vmatpush.bf16.msra.mxu0 %v2766
      %3006 = vmatpush.bf16.msra.mxu0 %v2764
      %3007 = vmatpush.bf16.msra.mxu0 %v2762
      %3008 = vmatpush.bf16.msra.mxu0 %v2760
      %3009 = vmatpush.bf16.msra.mxu0 %v2758
      %3010 = vmatpush.bf16.msra.mxu0 %v2756
      %3011 = vmatpush.bf16.msra.mxu0 %v2754
      %3012 = vmatpush.bf16.msra.mxu0 %v2752
      %3013 = vmatmul.bf16.gmra.mxu0 %v2340
      %v3014 = vpop.f32.mrf.mxu0
      %v3015 = vadd.f32 %v3002, %v3014
      %v3016 = vpop.f32.mrf.mxu0
      %3017 = vdwg.mxu0
      %3018 = vmatpush.bf16.msra.mxu0 %v2782
      %3019 = vmatpush.bf16.msra.mxu0 %v2780
      %3020 = vmatpush.bf16.msra.mxu0 %v2778
      %3021 = vmatpush.bf16.msra.mxu0 %v2776
      %3022 = vmatpush.bf16.msra.mxu0 %v2774
      %3023 = vmatpush.bf16.msra.mxu0 %v2772
      %3024 = vmatpush.bf16.msra.mxu0 %v2770
      %3025 = vmatpush.bf16.msra.mxu0 %v2768
      %3026 = vmatmul.bf16.gmra.mxu0 %v2341
      %v3027 = vpop.f32.mrf.mxu0
      %v3028 = vadd.f32 %v3015, %v3027
      %v3029 = vpop.f32.mrf.mxu0
      %3030 = vdwg.mxu0
      %3031 = vmatpush.bf16.msra.mxu0 %v2798
      %3032 = vmatpush.bf16.msra.mxu0 %v2796
      %3033 = vmatpush.bf16.msra.mxu0 %v2794
      %3034 = vmatpush.bf16.msra.mxu0 %v2792
      %3035 = vmatpush.bf16.msra.mxu0 %v2790
      %3036 = vmatpush.bf16.msra.mxu0 %v2788
      %3037 = vmatpush.bf16.msra.mxu0 %v2786
      %3038 = vmatpush.bf16.msra.mxu0 %v2784
      %3039 = vmatmul.bf16.gmra.mxu0 %v2342
      %v3040 = vpop.f32.mrf.mxu0
      %v3041 = vadd.f32 %v3028, %v3040
      %v3042 = vpop.f32.mrf.mxu0
      %3043 = vdwg.mxu0
      %3044 = vmatpush.bf16.msra.mxu0 %v2814
      %3045 = vmatpush.bf16.msra.mxu0 %v2812
      %3046 = vmatpush.bf16.msra.mxu0 %v2810
      %3047 = vmatpush.bf16.msra.mxu0 %v2808
      %3048 = vmatpush.bf16.msra.mxu0 %v2806
      %3049 = vmatpush.bf16.msra.mxu0 %v2804
      %3050 = vmatpush.bf16.msra.mxu0 %v2802
      %3051 = vmatpush.bf16.msra.mxu0 %v2800
      %3052 = vmatmul.bf16.gmra.mxu0 %v2343
      %v3053 = vpop.f32.mrf.mxu0
      %v3054 = vadd.f32 %v3041, %v3053
      %v3055 = vpop.f32.mrf.mxu0
      %3056 = vdwg.mxu0
      %3057 = vmatpush.bf16.msra.mxu0 %v2830
      %3058 = vmatpush.bf16.msra.mxu0 %v2828
      %3059 = vmatpush.bf16.msra.mxu0 %v2826
      %3060 = vmatpush.bf16.msra.mxu0 %v2824
      %3061 = vmatpush.bf16.msra.mxu0 %v2822
      %3062 = vmatpush.bf16.msra.mxu0 %v2820
      %3063 = vmatpush.bf16.msra.mxu0 %v2818
      %3064 = vmatpush.bf16.msra.mxu0 %v2816
      %3065 = vmatmul.bf16.gmra.mxu0 %v2344
      %v3066 = vpop.f32.mrf.mxu0
      %v3067 = vadd.f32 %v3054, %v3066
      %v3068 = vpop.f32.mrf.mxu0
      %3069 = vdwg.mxu0
      %3070 = vmatpush.bf16.msra.mxu0 %v2846
      %3071 = vmatpush.bf16.msra.mxu0 %v2844
      %3072 = vmatpush.bf16.msra.mxu0 %v2842
      %3073 = vmatpush.bf16.msra.mxu0 %v2840
      %3074 = vmatpush.bf16.msra.mxu0 %v2838
      %3075 = vmatpush.bf16.msra.mxu0 %v2836
      %3076 = vmatpush.bf16.msra.mxu0 %v2834
      %3077 = vmatpush.bf16.msra.mxu0 %v2832
      %3078 = vmatmul.bf16.gmra.mxu0 %v2345
      %v3079 = vpop.f32.mrf.mxu0
      %v3080 = vadd.f32 %v3067, %v3079
      %v3081 = vpop.f32.mrf.mxu0
      %3082 = vdwg.mxu0
      %3083 = vmatpush.bf16.msra.mxu0 %v2862
      %3084 = vmatpush.bf16.msra.mxu0 %v2860
      %3085 = vmatpush.bf16.msra.mxu0 %v2858
      %3086 = vmatpush.bf16.msra.mxu0 %v2856
      %3087 = vmatpush.bf16.msra.mxu0 %v2854
      %3088 = vmatpush.bf16.msra.mxu0 %v2852
      %3089 = vmatpush.bf16.msra.mxu0 %v2850
      %3090 = vmatpush.bf16.msra.mxu0 %v2848
      %3091 = vmatmul.bf16.gmra.mxu0 %v2346
      %v3092 = vpop.f32.mrf.mxu0
      %v3093 = vadd.f32 %v3080, %v3092
      %v3094 = vpop.f32.mrf.mxu0
      %3095 = vdwg.mxu0
      %3096 = vmatpush.bf16.msra.mxu0 %v2751
      %3097 = vmatpush.bf16.msra.mxu0 %v2749
      %3098 = vmatpush.bf16.msra.mxu0 %v2747
      %3099 = vmatpush.bf16.msra.mxu0 %v2745
      %3100 = vmatpush.bf16.msra.mxu0 %v2743
      %3101 = vmatpush.bf16.msra.mxu0 %v2741
      %3102 = vmatpush.bf16.msra.mxu0 %v2739
      %3103 = vmatpush.bf16.msra.mxu0 %v2737
      %3104 = vmatmul.bf16.gmra.mxu0 %v2339
      %v3105 = vpop.f32.mrf.mxu0
      %v3106 = vadd.f32 %v2349, %v3105
      %v3107 = vpop.f32.mrf.mxu0
      %3108 = vdwg.mxu0
      %3109 = vmatpush.bf16.msra.mxu0 %v2767
      %3110 = vmatpush.bf16.msra.mxu0 %v2765
      %3111 = vmatpush.bf16.msra.mxu0 %v2763
      %3112 = vmatpush.bf16.msra.mxu0 %v2761
      %3113 = vmatpush.bf16.msra.mxu0 %v2759
      %3114 = vmatpush.bf16.msra.mxu0 %v2757
      %3115 = vmatpush.bf16.msra.mxu0 %v2755
      %3116 = vmatpush.bf16.msra.mxu0 %v2753
      %3117 = vmatmul.bf16.gmra.mxu0 %v2340
      %v3118 = vpop.f32.mrf.mxu0
      %v3119 = vadd.f32 %v3106, %v3118
      %v3120 = vpop.f32.mrf.mxu0
      %3121 = vdwg.mxu0
      %3122 = vmatpush.bf16.msra.mxu0 %v2783
      %3123 = vmatpush.bf16.msra.mxu0 %v2781
      %3124 = vmatpush.bf16.msra.mxu0 %v2779
      %3125 = vmatpush.bf16.msra.mxu0 %v2777
      %3126 = vmatpush.bf16.msra.mxu0 %v2775
      %3127 = vmatpush.bf16.msra.mxu0 %v2773
      %3128 = vmatpush.bf16.msra.mxu0 %v2771
      %3129 = vmatpush.bf16.msra.mxu0 %v2769
      %3130 = vmatmul.bf16.gmra.mxu0 %v2341
      %v3131 = vpop.f32.mrf.mxu0
      %v3132 = vadd.f32 %v3119, %v3131
      %v3133 = vpop.f32.mrf.mxu0
      %3134 = vdwg.mxu0
      %3135 = vmatpush.bf16.msra.mxu0 %v2799
      %3136 = vmatpush.bf16.msra.mxu0 %v2797
      %3137 = vmatpush.bf16.msra.mxu0 %v2795
      %3138 = vmatpush.bf16.msra.mxu0 %v2793
      %3139 = vmatpush.bf16.msra.mxu0 %v2791
      %3140 = vmatpush.bf16.msra.mxu0 %v2789
      %3141 = vmatpush.bf16.msra.mxu0 %v2787
      %3142 = vmatpush.bf16.msra.mxu0 %v2785
      %3143 = vmatmul.bf16.gmra.mxu0 %v2342
      %v3144 = vpop.f32.mrf.mxu0
      %v3145 = vadd.f32 %v3132, %v3144
      %v3146 = vpop.f32.mrf.mxu0
      %3147 = vdwg.mxu0
      %3148 = vmatpush.bf16.msra.mxu0 %v2815
      %3149 = vmatpush.bf16.msra.mxu0 %v2813
      %3150 = vmatpush.bf16.msra.mxu0 %v2811
      %3151 = vmatpush.bf16.msra.mxu0 %v2809
      %3152 = vmatpush.bf16.msra.mxu0 %v2807
      %3153 = vmatpush.bf16.msra.mxu0 %v2805
      %3154 = vmatpush.bf16.msra.mxu0 %v2803
      %3155 = vmatpush.bf16.msra.mxu0 %v2801
      %3156 = vmatmul.bf16.gmra.mxu0 %v2343
      %v3157 = vpop.f32.mrf.mxu0
      %v3158 = vadd.f32 %v3145, %v3157
      %v3159 = vpop.f32.mrf.mxu0
      %3160 = vdwg.mxu0
      %3161 = vmatpush.bf16.msra.mxu0 %v2831
      %3162 = vmatpush.bf16.msra.mxu0 %v2829
      %3163 = vmatpush.bf16.msra.mxu0 %v2827
      %3164 = vmatpush.bf16.msra.mxu0 %v2825
      %3165 = vmatpush.bf16.msra.mxu0 %v2823
      %3166 = vmatpush.bf16.msra.mxu0 %v2821
      %3167 = vmatpush.bf16.msra.mxu0 %v2819
      %3168 = vmatpush.bf16.msra.mxu0 %v2817
      %3169 = vmatmul.bf16.gmra.mxu0 %v2344
      %v3170 = vpop.f32.mrf.mxu0
      %v3171 = vadd.f32 %v3158, %v3170
      %v3172 = vpop.f32.mrf.mxu0
      %3173 = vdwg.mxu0
      %3174 = vmatpush.bf16.msra.mxu0 %v2847
      %3175 = vmatpush.bf16.msra.mxu0 %v2845
      %3176 = vmatpush.bf16.msra.mxu0 %v2843
      %3177 = vmatpush.bf16.msra.mxu0 %v2841
      %3178 = vmatpush.bf16.msra.mxu0 %v2839
      %3179 = vmatpush.bf16.msra.mxu0 %v2837
      %3180 = vmatpush.bf16.msra.mxu0 %v2835
      %3181 = vmatpush.bf16.msra.mxu0 %v2833
      %3182 = vmatmul.bf16.gmra.mxu0 %v2345
      %v3183 = vpop.f32.mrf.mxu0
      %v3184 = vadd.f32 %v3171, %v3183
      %v3185 = vpop.f32.mrf.mxu0
      %3186 = vdwg.mxu0
      %3187 = vmatpush.bf16.msra.mxu0 %v2863
      %3188 = vmatpush.bf16.msra.mxu0 %v2861
      %3189 = vmatpush.bf16.msra.mxu0 %v2859
      %3190 = vmatpush.bf16.msra.mxu0 %v2857
      %3191 = vmatpush.bf16.msra.mxu0 %v2855
      %3192 = vmatpush.bf16.msra.mxu0 %v2853
      %3193 = vmatpush.bf16.msra.mxu0 %v2851
      %3194 = vmatpush.bf16.msra.mxu0 %v2849
      %3195 = vmatmul.bf16.gmra.mxu0 %v2346
      %v3196 = vpop.f32.mrf.mxu0
      %v3197 = vadd.f32 %v3184, %v3196
      %v3198 = vpop.f32.mrf.mxu0
      %3199 = vdwg.mxu0
      %v3200 = vmax.f32 %v3093, 0.0
      %v3201 = vmax.f32 %v3197, 0.0
      %s3202 = scalar_lea.vmem [#allocation2], 4
      %v3203 = vld [vmem:[%s3202] ss:$8 sm:$0x3]
      %s3204 = scalar_lea.vmem [#allocation2], 20
      %v3205 = vld [vmem:[%s3204] ss:$8 sm:$0x3]
      %s3206 = scalar_lea.vmem [#allocation2], 36
      %v3207 = vld [vmem:[%s3206] ss:$8 sm:$0x3]
      %s3208 = scalar_lea.vmem [#allocation2], 52
      %v3209 = vld [vmem:[%s3208] ss:$8 sm:$0x3]
      %s3210 = scalar_lea.vmem [#allocation2], 68
      %v3211 = vld [vmem:[%s3210] ss:$8 sm:$0x3]
      %s3212 = scalar_lea.vmem [#allocation2], 84
      %v3213 = vld [vmem:[%s3212] ss:$8 sm:$0x3]
      %s3214 = scalar_lea.vmem [#allocation2], 100
      %v3215 = vld [vmem:[%s3214] ss:$8 sm:$0x3]
      %s3216 = scalar_lea.vmem [#allocation2], 116
      %v3217 = vld [vmem:[%s3216] ss:$8 sm:$0x3]
      %s3218 = scalar_lea.vmem [#allocation2], 5
      %v3219 = vld [vmem:[%s3218] ss:$8 sm:$0x3]
      %s3220 = scalar_lea.vmem [#allocation2], 21
      %v3221 = vld [vmem:[%s3220] ss:$8 sm:$0x3]
      %s3222 = scalar_lea.vmem [#allocation2], 37
      %v3223 = vld [vmem:[%s3222] ss:$8 sm:$0x3]
      %s3224 = scalar_lea.vmem [#allocation2], 53
      %v3225 = vld [vmem:[%s3224] ss:$8 sm:$0x3]
      %s3226 = scalar_lea.vmem [#allocation2], 69
      %v3227 = vld [vmem:[%s3226] ss:$8 sm:$0x3]
      %s3228 = scalar_lea.vmem [#allocation2], 85
      %v3229 = vld [vmem:[%s3228] ss:$8 sm:$0x3]
      %s3230 = scalar_lea.vmem [#allocation2], 101
      %v3231 = vld [vmem:[%s3230] ss:$8 sm:$0x3]
      %s3232 = scalar_lea.vmem [#allocation2], 117
      %v3233 = vld [vmem:[%s3232] ss:$8 sm:$0x3]
      %3234 = vst [vmem:[#allocation1] ss:$9 sm:$0xff] %v2200
      %s3235 = scalar_lea.vmem [#allocation1], 1
      %3236 = vst [vmem:[%s3235] ss:$9 sm:$0xff] %v2202
      %s3237 = scalar_lea.vmem [#allocation1], 2
      %3238 = vst [vmem:[%s3237] ss:$9 sm:$0xff] %v2204
      %s3239 = scalar_lea.vmem [#allocation1], 3
      %3240 = vst [vmem:[%s3239] ss:$9 sm:$0xff] %v2206
      %s3241 = scalar_lea.vmem [#allocation1], 4
      %3242 = vst [vmem:[%s3241] ss:$9 sm:$0xff] %v2208
      %s3243 = scalar_lea.vmem [#allocation1], 5
      %3244 = vst [vmem:[%s3243] ss:$9 sm:$0xff] %v2210
      %s3245 = scalar_lea.vmem [#allocation1], 6
      %3246 = vst [vmem:[%s3245] ss:$9 sm:$0xff] %v2212
      %s3247 = scalar_lea.vmem [#allocation1], 7
      %3248 = vst [vmem:[%s3247] ss:$9 sm:$0xff] %v2214
      %v3249 = vld [vmem:[#allocation1] sm:$0xff]
      %v3250 = vld [vmem:[#allocation1 + $0x9] sm:$0xff]
      %3253 = vst [vmem:[#allocation1] ss:$9 sm:$0xff] %v2216
      %s3254 = scalar_lea.vmem [#allocation1], 1
      %3255 = vst [vmem:[%s3254] ss:$9 sm:$0xff] %v2218
      %s3256 = scalar_lea.vmem [#allocation1], 2
      %3257 = vst [vmem:[%s3256] ss:$9 sm:$0xff] %v2220
      %s3258 = scalar_lea.vmem [#allocation1], 3
      %3259 = vst [vmem:[%s3258] ss:$9 sm:$0xff] %v2222
      %s3260 = scalar_lea.vmem [#allocation1], 4
      %3261 = vst [vmem:[%s3260] ss:$9 sm:$0xff] %v2224
      %s3262 = scalar_lea.vmem [#allocation1], 5
      %3263 = vst [vmem:[%s3262] ss:$9 sm:$0xff] %v2226
      %s3264 = scalar_lea.vmem [#allocation1], 6
      %3265 = vst [vmem:[%s3264] ss:$9 sm:$0xff] %v2228
      %s3266 = scalar_lea.vmem [#allocation1], 7
      %3267 = vst [vmem:[%s3266] ss:$9 sm:$0xff] %v2230
      %v3268 = vld [vmem:[#allocation1] sm:$0xff]
      %v3269 = vld [vmem:[#allocation1 + $0x9] sm:$0xff]
      %3280 = vst [vmem:[#allocation1] ss:$9 sm:$0xff] %v3203
      %s3281 = scalar_lea.vmem [#allocation1], 1
      %3282 = vst [vmem:[%s3281] ss:$9 sm:$0xff] %v3205
      %s3283 = scalar_lea.vmem [#allocation1], 2
      %3284 = vst [vmem:[%s3283] ss:$9 sm:$0xff] %v3207
      %s3285 = scalar_lea.vmem [#allocation1], 3
      %3286 = vst [vmem:[%s3285] ss:$9 sm:$0xff] %v3209
      %s3287 = scalar_lea.vmem [#allocation1], 4
      %3288 = vst [vmem:[%s3287] ss:$9 sm:$0xff] %v3211
      %s3289 = scalar_lea.vmem [#allocation1], 5
      %3290 = vst [vmem:[%s3289] ss:$9 sm:$0xff] %v3213
      %s3291 = scalar_lea.vmem [#allocation1], 6
      %3292 = vst [vmem:[%s3291] ss:$9 sm:$0xff] %v3215
      %s3293 = scalar_lea.vmem [#allocation1], 7
      %3294 = vst [vmem:[%s3293] ss:$9 sm:$0xff] %v3217
      %v3295 = vld [vmem:[#allocation1] sm:$0xff]
      %v3296 = vld [vmem:[#allocation1 + $0x9] sm:$0xff]
      %3307 = vst [vmem:[#allocation1] ss:$9 sm:$0xff] %v3219
      %s3308 = scalar_lea.vmem [#allocation1], 1
      %3309 = vst [vmem:[%s3308] ss:$9 sm:$0xff] %v3221
      %s3310 = scalar_lea.vmem [#allocation1], 2
      %3311 = vst [vmem:[%s3310] ss:$9 sm:$0xff] %v3223
      %s3312 = scalar_lea.vmem [#allocation1], 3
      %3313 = vst [vmem:[%s3312] ss:$9 sm:$0xff] %v3225
      %s3314 = scalar_lea.vmem [#allocation1], 4
      %3315 = vst [vmem:[%s3314] ss:$9 sm:$0xff] %v3227
      %s3316 = scalar_lea.vmem [#allocation1], 5
      %3317 = vst [vmem:[%s3316] ss:$9 sm:$0xff] %v3229
      %s3318 = scalar_lea.vmem [#allocation1], 6
      %3319 = vst [vmem:[%s3318] ss:$9 sm:$0xff] %v3231
      %s3320 = scalar_lea.vmem [#allocation1], 7
      %3321 = vst [vmem:[%s3320] ss:$9 sm:$0xff] %v3233
      %v3322 = vld [vmem:[#allocation1] sm:$0xff]
      %v3323 = vld [vmem:[#allocation1 + $0x9] sm:$0xff]
      %v3326 = vpack.c.bf16 %v3249, %v3249
      %v3327 = vpack.c.bf16 %v3250, %v3250
      %v3328 = vpack.c.bf16 %v3268, %v3268
      %v3329 = vpack.c.bf16 %v3269, %v3269
      %v3330 = vpack.c.bf16 %v3295, %v3295
      %v3331 = vpack.c.bf16 %v3296, %v3296
      %v3332 = vpack.c.bf16 %v3322, %v3322
      %v3333 = vpack.c.bf16 %v3323, %v3323
      %3334 = vmatpush.bf16.msra.mxu0 %v2750
      %3335 = vmatpush.bf16.msra.mxu0 %v2748
      %3336 = vmatpush.bf16.msra.mxu0 %v2746
      %3337 = vmatpush.bf16.msra.mxu0 %v2744
      %3338 = vmatpush.bf16.msra.mxu0 %v2742
      %3339 = vmatpush.bf16.msra.mxu0 %v2740
      %3340 = vmatpush.bf16.msra.mxu0 %v2738
      %3341 = vmatpush.bf16.msra.mxu0 %v2736
      %3342 = vmatmul.bf16.gmra.mxu0 %v3326
      %v3343 = vpop.f32.mrf.mxu0
      %v3344 = vadd.f32 %v2348, %v3343
      %v3345 = vpop.f32.mrf.mxu0
      %3346 = vdwg.mxu0
      %3347 = vmatpush.bf16.msra.mxu0 %v2766
      %3348 = vmatpush.bf16.msra.mxu0 %v2764
      %3349 = vmatpush.bf16.msra.mxu0 %v2762
      %3350 = vmatpush.bf16.msra.mxu0 %v2760
      %3351 = vmatpush.bf16.msra.mxu0 %v2758
      %3352 = vmatpush.bf16.msra.mxu0 %v2756
      %3353 = vmatpush.bf16.msra.mxu0 %v2754
      %3354 = vmatpush.bf16.msra.mxu0 %v2752
      %3355 = vmatmul.bf16.gmra.mxu0 %v3327
      %v3356 = vpop.f32.mrf.mxu0
      %v3357 = vadd.f32 %v3344, %v3356
      %v3358 = vpop.f32.mrf.mxu0
      %3359 = vdwg.mxu0
      %3360 = vmatpush.bf16.msra.mxu0 %v2782
      %3361 = vmatpush.bf16.msra.mxu0 %v2780
      %3362 = vmatpush.bf16.msra.mxu0 %v2778
      %3363 = vmatpush.bf16.msra.mxu0 %v2776
      %3364 = vmatpush.bf16.msra.mxu0 %v2774
      %3365 = vmatpush.bf16.msra.mxu0 %v2772
      %3366 = vmatpush.bf16.msra.mxu0 %v2770
      %3367 = vmatpush.bf16.msra.mxu0 %v2768
      %3368 = vmatmul.bf16.gmra.mxu0 %v3328
      %v3369 = vpop.f32.mrf.mxu0
      %v3370 = vadd.f32 %v3357, %v3369
      %v3371 = vpop.f32.mrf.mxu0
      %3372 = vdwg.mxu0
      %3373 = vmatpush.bf16.msra.mxu0 %v2798
      %3374 = vmatpush.bf16.msra.mxu0 %v2796
      %3375 = vmatpush.bf16.msra.mxu0 %v2794
      %3376 = vmatpush.bf16.msra.mxu0 %v2792
      %3377 = vmatpush.bf16.msra.mxu0 %v2790
      %3378 = vmatpush.bf16.msra.mxu0 %v2788
      %3379 = vmatpush.bf16.msra.mxu0 %v2786
      %3380 = vmatpush.bf16.msra.mxu0 %v2784
      %3381 = vmatmul.bf16.gmra.mxu0 %v3329
      %v3382 = vpop.f32.mrf.mxu0
      %v3383 = vadd.f32 %v3370, %v3382
      %v3384 = vpop.f32.mrf.mxu0
      %3385 = vdwg.mxu0
      %3386 = vmatpush.bf16.msra.mxu0 %v2814
      %3387 = vmatpush.bf16.msra.mxu0 %v2812
      %3388 = vmatpush.bf16.msra.mxu0 %v2810
      %3389 = vmatpush.bf16.msra.mxu0 %v2808
      %3390 = vmatpush.bf16.msra.mxu0 %v2806
      %3391 = vmatpush.bf16.msra.mxu0 %v2804
      %3392 = vmatpush.bf16.msra.mxu0 %v2802
      %3393 = vmatpush.bf16.msra.mxu0 %v2800
      %3394 = vmatmul.bf16.gmra.mxu0 %v3330
      %v3395 = vpop.f32.mrf.mxu0
      %v3396 = vadd.f32 %v3383, %v3395
      %v3397 = vpop.f32.mrf.mxu0
      %3398 = vdwg.mxu0
      %3399 = vmatpush.bf16.msra.mxu0 %v2830
      %3400 = vmatpush.bf16.msra.mxu0 %v2828
      %3401 = vmatpush.bf16.msra.mxu0 %v2826
      %3402 = vmatpush.bf16.msra.mxu0 %v2824
      %3403 = vmatpush.bf16.msra.mxu0 %v2822
      %3404 = vmatpush.bf16.msra.mxu0 %v2820
      %3405 = vmatpush.bf16.msra.mxu0 %v2818
      %3406 = vmatpush.bf16.msra.mxu0 %v2816
      %3407 = vmatmul.bf16.gmra.mxu0 %v3331
      %v3408 = vpop.f32.mrf.mxu0
      %v3409 = vadd.f32 %v3396, %v3408
      %v3410 = vpop.f32.mrf.mxu0
      %3411 = vdwg.mxu0
      %3412 = vmatpush.bf16.msra.mxu0 %v2846
      %3413 = vmatpush.bf16.msra.mxu0 %v2844
      %3414 = vmatpush.bf16.msra.mxu0 %v2842
      %3415 = vmatpush.bf16.msra.mxu0 %v2840
      %3416 = vmatpush.bf16.msra.mxu0 %v2838
      %3417 = vmatpush.bf16.msra.mxu0 %v2836
      %3418 = vmatpush.bf16.msra.mxu0 %v2834
      %3419 = vmatpush.bf16.msra.mxu0 %v2832
      %3420 = vmatmul.bf16.gmra.mxu0 %v3332
      %v3421 = vpop.f32.mrf.mxu0
      %v3422 = vadd.f32 %v3409, %v3421
      %v3423 = vpop.f32.mrf.mxu0
      %3424 = vdwg.mxu0
      %3425 = vmatpush.bf16.msra.mxu0 %v2862
      %3426 = vmatpush.bf16.msra.mxu0 %v2860
      %3427 = vmatpush.bf16.msra.mxu0 %v2858
      %3428 = vmatpush.bf16.msra.mxu0 %v2856
      %3429 = vmatpush.bf16.msra.mxu0 %v2854
      %3430 = vmatpush.bf16.msra.mxu0 %v2852
      %3431 = vmatpush.bf16.msra.mxu0 %v2850
      %3432 = vmatpush.bf16.msra.mxu0 %v2848
      %3433 = vmatmul.bf16.gmra.mxu0 %v3333
      %v3434 = vpop.f32.mrf.mxu0
      %v3435 = vadd.f32 %v3422, %v3434
      %v3436 = vpop.f32.mrf.mxu0
      %3437 = vdwg.mxu0
      %3438 = vmatpush.bf16.msra.mxu0 %v2751
      %3439 = vmatpush.bf16.msra.mxu0 %v2749
      %3440 = vmatpush.bf16.msra.mxu0 %v2747
      %3441 = vmatpush.bf16.msra.mxu0 %v2745
      %3442 = vmatpush.bf16.msra.mxu0 %v2743
      %3443 = vmatpush.bf16.msra.mxu0 %v2741
      %3444 = vmatpush.bf16.msra.mxu0 %v2739
      %3445 = vmatpush.bf16.msra.mxu0 %v2737
      %3446 = vmatmul.bf16.gmra.mxu0 %v3326
      %v3447 = vpop.f32.mrf.mxu0
      %v3448 = vadd.f32 %v2349, %v3447
      %v3449 = vpop.f32.mrf.mxu0
      %3450 = vdwg.mxu0
      %3451 = vmatpush.bf16.msra.mxu0 %v2767
      %3452 = vmatpush.bf16.msra.mxu0 %v2765
      %3453 = vmatpush.bf16.msra.mxu0 %v2763
      %3454 = vmatpush.bf16.msra.mxu0 %v2761
      %3455 = vmatpush.bf16.msra.mxu0 %v2759
      %3456 = vmatpush.bf16.msra.mxu0 %v2757
      %3457 = vmatpush.bf16.msra.mxu0 %v2755
      %3458 = vmatpush.bf16.msra.mxu0 %v2753
      %3459 = vmatmul.bf16.gmra.mxu0 %v3327
      %v3460 = vpop.f32.mrf.mxu0
      %v3461 = vadd.f32 %v3448, %v3460
      %v3462 = vpop.f32.mrf.mxu0
      %3463 = vdwg.mxu0
      %3464 = vmatpush.bf16.msra.mxu0 %v2783
      %3465 = vmatpush.bf16.msra.mxu0 %v2781
      %3466 = vmatpush.bf16.msra.mxu0 %v2779
      %3467 = vmatpush.bf16.msra.mxu0 %v2777
      %3468 = vmatpush.bf16.msra.mxu0 %v2775
      %3469 = vmatpush.bf16.msra.mxu0 %v2773
      %3470 = vmatpush.bf16.msra.mxu0 %v2771
      %3471 = vmatpush.bf16.msra.mxu0 %v2769
      %3472 = vmatmul.bf16.gmra.mxu0 %v3328
      %v3473 = vpop.f32.mrf.mxu0
      %v3474 = vadd.f32 %v3461, %v3473
      %v3475 = vpop.f32.mrf.mxu0
      %3476 = vdwg.mxu0
      %3477 = vmatpush.bf16.msra.mxu0 %v2799
      %3478 = vmatpush.bf16.msra.mxu0 %v2797
      %3479 = vmatpush.bf16.msra.mxu0 %v2795
      %3480 = vmatpush.bf16.msra.mxu0 %v2793
      %3481 = vmatpush.bf16.msra.mxu0 %v2791
      %3482 = vmatpush.bf16.msra.mxu0 %v2789
      %3483 = vmatpush.bf16.msra.mxu0 %v2787
      %3484 = vmatpush.bf16.msra.mxu0 %v2785
      %3485 = vmatmul.bf16.gmra.mxu0 %v3329
      %v3486 = vpop.f32.mrf.mxu0
      %v3487 = vadd.f32 %v3474, %v3486
      %v3488 = vpop.f32.mrf.mxu0
      %3489 = vdwg.mxu0
      %3490 = vmatpush.bf16.msra.mxu0 %v2815
      %3491 = vmatpush.bf16.msra.mxu0 %v2813
      %3492 = vmatpush.bf16.msra.mxu0 %v2811
      %3493 = vmatpush.bf16.msra.mxu0 %v2809
      %3494 = vmatpush.bf16.msra.mxu0 %v2807
      %3495 = vmatpush.bf16.msra.mxu0 %v2805
      %3496 = vmatpush.bf16.msra.mxu0 %v2803
      %3497 = vmatpush.bf16.msra.mxu0 %v2801
      %3498 = vmatmul.bf16.gmra.mxu0 %v3330
      %v3499 = vpop.f32.mrf.mxu0
      %v3500 = vadd.f32 %v3487, %v3499
      %v3501 = vpop.f32.mrf.mxu0
      %3502 = vdwg.mxu0
      %3503 = vmatpush.bf16.msra.mxu0 %v2831
      %3504 = vmatpush.bf16.msra.mxu0 %v2829
      %3505 = vmatpush.bf16.msra.mxu0 %v2827
      %3506 = vmatpush.bf16.msra.mxu0 %v2825
      %3507 = vmatpush.bf16.msra.mxu0 %v2823
      %3508 = vmatpush.bf16.msra.mxu0 %v2821
      %3509 = vmatpush.bf16.msra.mxu0 %v2819
      %3510 = vmatpush.bf16.msra.mxu0 %v2817
      %3511 = vmatmul.bf16.gmra.mxu0 %v3331
      %v3512 = vpop.f32.mrf.mxu0
      %v3513 = vadd.f32 %v3500, %v3512
      %v3514 = vpop.f32.mrf.mxu0
      %3515 = vdwg.mxu0
      %3516 = vmatpush.bf16.msra.mxu0 %v2847
      %3517 = vmatpush.bf16.msra.mxu0 %v2845
      %3518 = vmatpush.bf16.msra.mxu0 %v2843
      %3519 = vmatpush.bf16.msra.mxu0 %v2841
      %3520 = vmatpush.bf16.msra.mxu0 %v2839
      %3521 = vmatpush.bf16.msra.mxu0 %v2837
      %3522 = vmatpush.bf16.msra.mxu0 %v2835
      %3523 = vmatpush.bf16.msra.mxu0 %v2833
      %3524 = vmatmul.bf16.gmra.mxu0 %v3332
      %v3525 = vpop.f32.mrf.mxu0
      %v3526 = vadd.f32 %v3513, %v3525
      %v3527 = vpop.f32.mrf.mxu0
      %3528 = vdwg.mxu0
      %3529 = vmatpush.bf16.msra.mxu0 %v2863
      %3530 = vmatpush.bf16.msra.mxu0 %v2861
      %3531 = vmatpush.bf16.msra.mxu0 %v2859
      %3532 = vmatpush.bf16.msra.mxu0 %v2857
      %3533 = vmatpush.bf16.msra.mxu0 %v2855
      %3534 = vmatpush.bf16.msra.mxu0 %v2853
      %3535 = vmatpush.bf16.msra.mxu0 %v2851
      %3536 = vmatpush.bf16.msra.mxu0 %v2849
      %3537 = vmatmul.bf16.gmra.mxu0 %v3333
      %v3538 = vpop.f32.mrf.mxu0
      %v3539 = vadd.f32 %v3526, %v3538
      %v3540 = vpop.f32.mrf.mxu0
      %3541 = vdwg.mxu0
      %v3542 = vmax.f32 %v3435, 0.0
      %v3543 = vmax.f32 %v3539, 0.0
      %s3544 = scalar_lea.vmem [#allocation2], 6
      %v3545 = vld [vmem:[%s3544] ss:$8 sm:$0x3]
      %s3546 = scalar_lea.vmem [#allocation2], 22
      %v3547 = vld [vmem:[%s3546] ss:$8 sm:$0x3]
      %s3548 = scalar_lea.vmem [#allocation2], 38
      %v3549 = vld [vmem:[%s3548] ss:$8 sm:$0x3]
      %s3550 = scalar_lea.vmem [#allocation2], 54
      %v3551 = vld [vmem:[%s3550] ss:$8 sm:$0x3]
      %s3552 = scalar_lea.vmem [#allocation2], 70
      %v3553 = vld [vmem:[%s3552] ss:$8 sm:$0x3]
      %s3554 = scalar_lea.vmem [#allocation2], 86
      %v3555 = vld [vmem:[%s3554] ss:$8 sm:$0x3]
      %s3556 = scalar_lea.vmem [#allocation2], 102
      %v3557 = vld [vmem:[%s3556] ss:$8 sm:$0x3]
      %s3558 = scalar_lea.vmem [#allocation2], 118
      %v3559 = vld [vmem:[%s3558] ss:$8 sm:$0x3]
      %s3560 = scalar_lea.vmem [#allocation2], 7
      %v3561 = vld [vmem:[%s3560] ss:$8 sm:$0x3]
      %s3562 = scalar_lea.vmem [#allocation2], 23
      %v3563 = vld [vmem:[%s3562] ss:$8 sm:$0x3]
      %s3564 = scalar_lea.vmem [#allocation2], 39
      %v3565 = vld [vmem:[%s3564] ss:$8 sm:$0x3]
      %s3566 = scalar_lea.vmem [#allocation2], 55
      %v3567 = vld [vmem:[%s3566] ss:$8 sm:$0x3]
      %s3568 = scalar_lea.vmem [#allocation2], 71
      %v3569 = vld [vmem:[%s3568] ss:$8 sm:$0x3]
      %s3570 = scalar_lea.vmem [#allocation2], 87
      %v3571 = vld [vmem:[%s3570] ss:$8 sm:$0x3]
      %s3572 = scalar_lea.vmem [#allocation2], 103
      %v3573 = vld [vmem:[%s3572] ss:$8 sm:$0x3]
      %s3574 = scalar_lea.vmem [#allocation2], 119
      %v3575 = vld [vmem:[%s3574] ss:$8 sm:$0x3]
      %3576 = vst [vmem:[#allocation1] ss:$9 sm:$0xff] %v3203
      %s3577 = scalar_lea.vmem [#allocation1], 1
      %3578 = vst [vmem:[%s3577] ss:$9 sm:$0xff] %v3205
      %s3579 = scalar_lea.vmem [#allocation1], 2
      %3580 = vst [vmem:[%s3579] ss:$9 sm:$0xff] %v3207
      %s3581 = scalar_lea.vmem [#allocation1], 3
      %3582 = vst [vmem:[%s3581] ss:$9 sm:$0xff] %v3209
      %s3583 = scalar_lea.vmem [#allocation1], 4
      %3584 = vst [vmem:[%s3583] ss:$9 sm:$0xff] %v3211
      %s3585 = scalar_lea.vmem [#allocation1], 5
      %3586 = vst [vmem:[%s3585] ss:$9 sm:$0xff] %v3213
      %s3587 = scalar_lea.vmem [#allocation1], 6
      %3588 = vst [vmem:[%s3587] ss:$9 sm:$0xff] %v3215
      %s3589 = scalar_lea.vmem [#allocation1], 7
      %3590 = vst [vmem:[%s3589] ss:$9 sm:$0xff] %v3217
      %v3591 = vld [vmem:[#allocation1] sm:$0xff]
      %v3592 = vld [vmem:[#allocation1 + $0x9] sm:$0xff]
      %3595 = vst [vmem:[#allocation1] ss:$9 sm:$0xff] %v3219
      %s3596 = scalar_lea.vmem [#allocation1], 1
      %3597 = vst [vmem:[%s3596] ss:$9 sm:$0xff] %v3221
      %s3598 = scalar_lea.vmem [#allocation1], 2
      %3599 = vst [vmem:[%s3598] ss:$9 sm:$0xff] %v3223
      %s3600 = scalar_lea.vmem [#allocation1], 3
      %3601 = vst [vmem:[%s3600] ss:$9 sm:$0xff] %v3225
      %s3602 = scalar_lea.vmem [#allocation1], 4
      %3603 = vst [vmem:[%s3602] ss:$9 sm:$0xff] %v3227
      %s3604 = scalar_lea.vmem [#allocation1], 5
      %3605 = vst [vmem:[%s3604] ss:$9 sm:$0xff] %v3229
      %s3606 = scalar_lea.vmem [#allocation1], 6
      %3607 = vst [vmem:[%s3606] ss:$9 sm:$0xff] %v3231
      %s3608 = scalar_lea.vmem [#allocation1], 7
      %3609 = vst [vmem:[%s3608] ss:$9 sm:$0xff] %v3233
      %v3610 = vld [vmem:[#allocation1] sm:$0xff]
      %v3611 = vld [vmem:[#allocation1 + $0x9] sm:$0xff]
      %3622 = vst [vmem:[#allocation1] ss:$9 sm:$0xff] %v3545
      %s3623 = scalar_lea.vmem [#allocation1], 1
      %3624 = vst [vmem:[%s3623] ss:$9 sm:$0xff] %v3547
      %s3625 = scalar_lea.vmem [#allocation1], 2
      %3626 = vst [vmem:[%s3625] ss:$9 sm:$0xff] %v3549
      %s3627 = scalar_lea.vmem [#allocation1], 3
      %3628 = vst [vmem:[%s3627] ss:$9 sm:$0xff] %v3551
      %s3629 = scalar_lea.vmem [#allocation1], 4
      %3630 = vst [vmem:[%s3629] ss:$9 sm:$0xff] %v3553
      %s3631 = scalar_lea.vmem [#allocation1], 5
      %3632 = vst [vmem:[%s3631] ss:$9 sm:$0xff] %v3555
      %s3633 = scalar_lea.vmem [#allocation1], 6
      %3634 = vst [vmem:[%s3633] ss:$9 sm:$0xff] %v3557
      %s3635 = scalar_lea.vmem [#allocation1], 7
      %3636 = vst [vmem:[%s3635] ss:$9 sm:$0xff] %v3559
      %v3637 = vld [vmem:[#allocation1] sm:$0xff]
      %v3638 = vld [vmem:[#allocation1 + $0x9] sm:$0xff]
      %3649 = vst [vmem:[#allocation1] ss:$9 sm:$0xff] %v3561
      %s3650 = scalar_lea.vmem [#allocation1], 1
      %3651 = vst [vmem:[%s3650] ss:$9 sm:$0xff] %v3563
      %s3652 = scalar_lea.vmem [#allocation1], 2
      %3653 = vst [vmem:[%s3652] ss:$9 sm:$0xff] %v3565
      %s3654 = scalar_lea.vmem [#allocation1], 3
      %3655 = vst [vmem:[%s3654] ss:$9 sm:$0xff] %v3567
      %s3656 = scalar_lea.vmem [#allocation1], 4
      %3657 = vst [vmem:[%s3656] ss:$9 sm:$0xff] %v3569
      %s3658 = scalar_lea.vmem [#allocation1], 5
      %3659 = vst [vmem:[%s3658] ss:$9 sm:$0xff] %v3571
      %s3660 = scalar_lea.vmem [#allocation1], 6
      %3661 = vst [vmem:[%s3660] ss:$9 sm:$0xff] %v3573
      %s3662 = scalar_lea.vmem [#allocation1], 7
      %3663 = vst [vmem:[%s3662] ss:$9 sm:$0xff] %v3575
      %v3664 = vld [vmem:[#allocation1] sm:$0xff]
      %v3665 = vld [vmem:[#allocation1 + $0x9] sm:$0xff]
      %v3668 = vpack.c.bf16 %v3591, %v3591
      %v3669 = vpack.c.bf16 %v3592, %v3592
      %v3670 = vpack.c.bf16 %v3610, %v3610
      %v3671 = vpack.c.bf16 %v3611, %v3611
      %v3672 = vpack.c.bf16 %v3637, %v3637
      %v3673 = vpack.c.bf16 %v3638, %v3638
      %v3674 = vpack.c.bf16 %v3664, %v3664
      %v3675 = vpack.c.bf16 %v3665, %v3665
      %3676 = vmatpush.bf16.msra.mxu0 %v2750
      %3677 = vmatpush.bf16.msra.mxu0 %v2748
      %3678 = vmatpush.bf16.msra.mxu0 %v2746
      %3679 = vmatpush.bf16.msra.mxu0 %v2744
      %3680 = vmatpush.bf16.msra.mxu0 %v2742
      %3681 = vmatpush.bf16.msra.mxu0 %v2740
      %3682 = vmatpush.bf16.msra.mxu0 %v2738
      %3683 = vmatpush.bf16.msra.mxu0 %v2736
      %3684 = vmatmul.bf16.gmra.mxu0 %v3668
      %v3685 = vpop.f32.mrf.mxu0
      %v3686 = vadd.f32 %v2348, %v3685
      %v3687 = vpop.f32.mrf.mxu0
      %3688 = vdwg.mxu0
      %3689 = vmatpush.bf16.msra.mxu0 %v2766
      %3690 = vmatpush.bf16.msra.mxu0 %v2764
      %3691 = vmatpush.bf16.msra.mxu0 %v2762
      %3692 = vmatpush.bf16.msra.mxu0 %v2760
      %3693 = vmatpush.bf16.msra.mxu0 %v2758
      %3694 = vmatpush.bf16.msra.mxu0 %v2756
      %3695 = vmatpush.bf16.msra.mxu0 %v2754
      %3696 = vmatpush.bf16.msra.mxu0 %v2752
      %3697 = vmatmul.bf16.gmra.mxu0 %v3669
      %v3698 = vpop.f32.mrf.mxu0
      %v3699 = vadd.f32 %v3686, %v3698
      %v3700 = vpop.f32.mrf.mxu0
      %3701 = vdwg.mxu0
      %3702 = vmatpush.bf16.msra.mxu0 %v2782
      %3703 = vmatpush.bf16.msra.mxu0 %v2780
      %3704 = vmatpush.bf16.msra.mxu0 %v2778
      %3705 = vmatpush.bf16.msra.mxu0 %v2776
      %3706 = vmatpush.bf16.msra.mxu0 %v2774
      %3707 = vmatpush.bf16.msra.mxu0 %v2772
      %3708 = vmatpush.bf16.msra.mxu0 %v2770
      %3709 = vmatpush.bf16.msra.mxu0 %v2768
      %3710 = vmatmul.bf16.gmra.mxu0 %v3670
      %v3711 = vpop.f32.mrf.mxu0
      %v3712 = vadd.f32 %v3699, %v3711
      %v3713 = vpop.f32.mrf.mxu0
      %3714 = vdwg.mxu0
      %3715 = vmatpush.bf16.msra.mxu0 %v2798
      %3716 = vmatpush.bf16.msra.mxu0 %v2796
      %3717 = vmatpush.bf16.msra.mxu0 %v2794
      %3718 = vmatpush.bf16.msra.mxu0 %v2792
      %3719 = vmatpush.bf16.msra.mxu0 %v2790
      %3720 = vmatpush.bf16.msra.mxu0 %v2788
      %3721 = vmatpush.bf16.msra.mxu0 %v2786
      %3722 = vmatpush.bf16.msra.mxu0 %v2784
      %3723 = vmatmul.bf16.gmra.mxu0 %v3671
      %v3724 = vpop.f32.mrf.mxu0
      %v3725 = vadd.f32 %v3712, %v3724
      %v3726 = vpop.f32.mrf.mxu0
      %3727 = vdwg.mxu0
      %3728 = vmatpush.bf16.msra.mxu0 %v2814
      %3729 = vmatpush.bf16.msra.mxu0 %v2812
      %3730 = vmatpush.bf16.msra.mxu0 %v2810
      %3731 = vmatpush.bf16.msra.mxu0 %v2808
      %3732 = vmatpush.bf16.msra.mxu0 %v2806
      %3733 = vmatpush.bf16.msra.mxu0 %v2804
      %3734 = vmatpush.bf16.msra.mxu0 %v2802
      %3735 = vmatpush.bf16.msra.mxu0 %v2800
      %3736 = vmatmul.bf16.gmra.mxu0 %v3672
      %v3737 = vpop.f32.mrf.mxu0
      %v3738 = vadd.f32 %v3725, %v3737
      %v3739 = vpop.f32.mrf.mxu0
      %3740 = vdwg.mxu0
      %3741 = vmatpush.bf16.msra.mxu0 %v2830
      %3742 = vmatpush.bf16.msra.mxu0 %v2828
      %3743 = vmatpush.bf16.msra.mxu0 %v2826
      %3744 = vmatpush.bf16.msra.mxu0 %v2824
      %3745 = vmatpush.bf16.msra.mxu0 %v2822
      %3746 = vmatpush.bf16.msra.mxu0 %v2820
      %3747 = vmatpush.bf16.msra.mxu0 %v2818
      %3748 = vmatpush.bf16.msra.mxu0 %v2816
      %3749 = vmatmul.bf16.gmra.mxu0 %v3673
      %v3750 = vpop.f32.mrf.mxu0
      %v3751 = vadd.f32 %v3738, %v3750
      %v3752 = vpop.f32.mrf.mxu0
      %3753 = vdwg.mxu0
      %3754 = vmatpush.bf16.msra.mxu0 %v2846
      %3755 = vmatpush.bf16.msra.mxu0 %v2844
      %3756 = vmatpush.bf16.msra.mxu0 %v2842
      %3757 = vmatpush.bf16.msra.mxu0 %v2840
      %3758 = vmatpush.bf16.msra.mxu0 %v2838
      %3759 = vmatpush.bf16.msra.mxu0 %v2836
      %3760 = vmatpush.bf16.msra.mxu0 %v2834
      %3761 = vmatpush.bf16.msra.mxu0 %v2832
      %3762 = vmatmul.bf16.gmra.mxu0 %v3674
      %v3763 = vpop.f32.mrf.mxu0
      %v3764 = vadd.f32 %v3751, %v3763
      %v3765 = vpop.f32.mrf.mxu0
      %3766 = vdwg.mxu0
      %3767 = vmatpush.bf16.msra.mxu0 %v2862
      %3768 = vmatpush.bf16.msra.mxu0 %v2860
      %3769 = vmatpush.bf16.msra.mxu0 %v2858
      %3770 = vmatpush.bf16.msra.mxu0 %v2856
      %3771 = vmatpush.bf16.msra.mxu0 %v2854
      %3772 = vmatpush.bf16.msra.mxu0 %v2852
      %3773 = vmatpush.bf16.msra.mxu0 %v2850
      %3774 = vmatpush.bf16.msra.mxu0 %v2848
      %3775 = vmatmul.bf16.gmra.mxu0 %v3675
      %v3776 = vpop.f32.mrf.mxu0
      %v3777 = vadd.f32 %v3764, %v3776
      %v3778 = vpop.f32.mrf.mxu0
      %3779 = vdwg.mxu0
      %3780 = vmatpush.bf16.msra.mxu0 %v2751
      %3781 = vmatpush.bf16.msra.mxu0 %v2749
      %3782 = vmatpush.bf16.msra.mxu0 %v2747
      %3783 = vmatpush.bf16.msra.mxu0 %v2745
      %3784 = vmatpush.bf16.msra.mxu0 %v2743
      %3785 = vmatpush.bf16.msra.mxu0 %v2741
      %3786 = vmatpush.bf16.msra.mxu0 %v2739
      %3787 = vmatpush.bf16.msra.mxu0 %v2737
      %3788 = vmatmul.bf16.gmra.mxu0 %v3668
      %v3789 = vpop.f32.mrf.mxu0
      %v3790 = vadd.f32 %v2349, %v3789
      %v3791 = vpop.f32.mrf.mxu0
      %3792 = vdwg.mxu0
      %3793 = vmatpush.bf16.msra.mxu0 %v2767
      %3794 = vmatpush.bf16.msra.mxu0 %v2765
      %3795 = vmatpush.bf16.msra.mxu0 %v2763
      %3796 = vmatpush.bf16.msra.mxu0 %v2761
      %3797 = vmatpush.bf16.msra.mxu0 %v2759
      %3798 = vmatpush.bf16.msra.mxu0 %v2757
      %3799 = vmatpush.bf16.msra.mxu0 %v2755
      %3800 = vmatpush.bf16.msra.mxu0 %v2753
      %3801 = vmatmul.bf16.gmra.mxu0 %v3669
      %v3802 = vpop.f32.mrf.mxu0
      %v3803 = vadd.f32 %v3790, %v3802
      %v3804 = vpop.f32.mrf.mxu0
      %3805 = vdwg.mxu0
      %3806 = vmatpush.bf16.msra.mxu0 %v2783
      %3807 = vmatpush.bf16.msra.mxu0 %v2781
      %3808 = vmatpush.bf16.msra.mxu0 %v2779
      %3809 = vmatpush.bf16.msra.mxu0 %v2777
      %3810 = vmatpush.bf16.msra.mxu0 %v2775
      %3811 = vmatpush.bf16.msra.mxu0 %v2773
      %3812 = vmatpush.bf16.msra.mxu0 %v2771
      %3813 = vmatpush.bf16.msra.mxu0 %v2769
      %3814 = vmatmul.bf16.gmra.mxu0 %v3670
      %v3815 = vpop.f32.mrf.mxu0
      %v3816 = vadd.f32 %v3803, %v3815
      %v3817 = vpop.f32.mrf.mxu0
      %3818 = vdwg.mxu0
      %3819 = vmatpush.bf16.msra.mxu0 %v2799
      %3820 = vmatpush.bf16.msra.mxu0 %v2797
      %3821 = vmatpush.bf16.msra.mxu0 %v2795
      %3822 = vmatpush.bf16.msra.mxu0 %v2793
      %3823 = vmatpush.bf16.msra.mxu0 %v2791
      %3824 = vmatpush.bf16.msra.mxu0 %v2789
      %3825 = vmatpush.bf16.msra.mxu0 %v2787
      %3826 = vmatpush.bf16.msra.mxu0 %v2785
      %3827 = vmatmul.bf16.gmra.mxu0 %v3671
      %v3828 = vpop.f32.mrf.mxu0
      %v3829 = vadd.f32 %v3816, %v3828
      %v3830 = vpop.f32.mrf.mxu0
      %3831 = vdwg.mxu0
      %3832 = vmatpush.bf16.msra.mxu0 %v2815
      %3833 = vmatpush.bf16.msra.mxu0 %v2813
      %3834 = vmatpush.bf16.msra.mxu0 %v2811
      %3835 = vmatpush.bf16.msra.mxu0 %v2809
      %3836 = vmatpush.bf16.msra.mxu0 %v2807
      %3837 = vmatpush.bf16.msra.mxu0 %v2805
      %3838 = vmatpush.bf16.msra.mxu0 %v2803
      %3839 = vmatpush.bf16.msra.mxu0 %v2801
      %3840 = vmatmul.bf16.gmra.mxu0 %v3672
      %v3841 = vpop.f32.mrf.mxu0
      %v3842 = vadd.f32 %v3829, %v3841
      %v3843 = vpop.f32.mrf.mxu0
      %3844 = vdwg.mxu0
      %3845 = vmatpush.bf16.msra.mxu0 %v2831
      %3846 = vmatpush.bf16.msra.mxu0 %v2829
      %3847 = vmatpush.bf16.msra.mxu0 %v2827
      %3848 = vmatpush.bf16.msra.mxu0 %v2825
      %3849 = vmatpush.bf16.msra.mxu0 %v2823
      %3850 = vmatpush.bf16.msra.mxu0 %v2821
      %3851 = vmatpush.bf16.msra.mxu0 %v2819
      %3852 = vmatpush.bf16.msra.mxu0 %v2817
      %3853 = vmatmul.bf16.gmra.mxu0 %v3673
      %v3854 = vpop.f32.mrf.mxu0
      %v3855 = vadd.f32 %v3842, %v3854
      %v3856 = vpop.f32.mrf.mxu0
      %3857 = vdwg.mxu0
      %3858 = vmatpush.bf16.msra.mxu0 %v2847
      %3859 = vmatpush.bf16.msra.mxu0 %v2845
      %3860 = vmatpush.bf16.msra.mxu0 %v2843
      %3861 = vmatpush.bf16.msra.mxu0 %v2841
      %3862 = vmatpush.bf16.msra.mxu0 %v2839
      %3863 = vmatpush.bf16.msra.mxu0 %v2837
      %3864 = vmatpush.bf16.msra.mxu0 %v2835
      %3865 = vmatpush.bf16.msra.mxu0 %v2833
      %3866 = vmatmul.bf16.gmra.mxu0 %v3674
      %v3867 = vpop.f32.mrf.mxu0
      %v3868 = vadd.f32 %v3855, %v3867
      %v3869 = vpop.f32.mrf.mxu0
      %3870 = vdwg.mxu0
      %3871 = vmatpush.bf16.msra.mxu0 %v2863
      %3872 = vmatpush.bf16.msra.mxu0 %v2861
      %3873 = vmatpush.bf16.msra.mxu0 %v2859
      %3874 = vmatpush.bf16.msra.mxu0 %v2857
      %3875 = vmatpush.bf16.msra.mxu0 %v2855
      %3876 = vmatpush.bf16.msra.mxu0 %v2853
      %3877 = vmatpush.bf16.msra.mxu0 %v2851
      %3878 = vmatpush.bf16.msra.mxu0 %v2849
      %3879 = vmatmul.bf16.gmra.mxu0 %v3675
      %v3880 = vpop.f32.mrf.mxu0
      %v3881 = vadd.f32 %v3868, %v3880
      %v3882 = vpop.f32.mrf.mxu0
      %3883 = vdwg.mxu0
      %v3884 = vmax.f32 %v3777, 0.0
      %v3885 = vmax.f32 %v3881, 0.0
      %v3886 = vpack.c.bf16 %v3200, %v3200
      %v3887 = vpack.c.bf16 %v3201, %v3201
      %v3888 = vpack.c.bf16 %v3542, %v3542
      %v3889 = vpack.c.bf16 %v3543, %v3543
      %v3890 = vpack.c.bf16 %v3884, %v3884
      %v3891 = vpack.c.bf16 %v3885, %v3885
      %v3892 = vld [vmem:[%s5] sm:$0xf]
      %v3893 = vld [vmem:[%s5 + $0x4] sm:$0xf]
      %v3894 = vld [vmem:[%s5 + $0x8] sm:$0xf]
      %v3895 = vld [vmem:[%s5 + $0xc] sm:$0xf]
      %v3896 = vld [vmem:[%s5 + $0x10] sm:$0xf]
      %v3897 = vld [vmem:[%s5 + $0x14] sm:$0xf]
      %v3898 = vld [vmem:[%s5 + $0x18] sm:$0xf]
      %v3899 = vld [vmem:[%s5 + $0x1c] sm:$0xf]
      %v3900 = vld [vmem:[%s5 + $0x20] sm:$0xf]
      %v3901 = vld [vmem:[%s5 + $0x24] sm:$0xf]
      %v3902 = vld [vmem:[%s5 + $0x28] sm:$0xf]
      %v3903 = vld [vmem:[%s5 + $0x2c] sm:$0xf]
      %v3904 = vld [vmem:[%s5 + $0x30] sm:$0xf]
      %v3905 = vld [vmem:[%s5 + $0x34] sm:$0xf]
      %v3906 = vld [vmem:[%s5 + $0x38] sm:$0xf]
      %v3907 = vld [vmem:[%s5 + $0x3c] sm:$0xf]
      %v3908 = vld [vmem:[%s5 + $0x40] sm:$0xf]
      %v3909 = vld [vmem:[%s5 + $0x44] sm:$0xf]
      %v3910 = vld [vmem:[%s5 + $0x48] sm:$0xf]
      %v3911 = vld [vmem:[%s5 + $0x4c] sm:$0xf]
      %v3912 = vld [vmem:[%s5 + $0x50] sm:$0xf]
      %v3913 = vld [vmem:[%s5 + $0x54] sm:$0xf]
      %v3914 = vld [vmem:[%s5 + $0x58] sm:$0xf]
      %v3915 = vld [vmem:[%s5 + $0x5c] sm:$0xf]
      %v3916 = vld [vmem:[%s5 + $0x60] sm:$0xf]
      %v3917 = vld [vmem:[%s5 + $0x64] sm:$0xf]
      %v3918 = vld [vmem:[%s5 + $0x68] sm:$0xf]
      %v3919 = vld [vmem:[%s5 + $0x6c] sm:$0xf]
      %v3920 = vld [vmem:[%s5 + $0x70] sm:$0xf]
      %v3921 = vld [vmem:[%s5 + $0x74] sm:$0xf]
      %v3922 = vld [vmem:[%s5 + $0x78] sm:$0xf]
      %v3923 = vld [vmem:[%s5 + $0x7c] sm:$0xf]
      %v3924 = vld [vmem:[%s5 + $0x80] sm:$0xf]
      %v3925 = vld [vmem:[%s5 + $0x84] sm:$0xf]
      %v3926 = vld [vmem:[%s5 + $0x88] sm:$0xf]
      %v3927 = vld [vmem:[%s5 + $0x8c] sm:$0xf]
      %v3928 = vld [vmem:[%s5 + $0x90] sm:$0xf]
      %v3929 = vld [vmem:[%s5 + $0x94] sm:$0xf]
      %v3930 = vld [vmem:[%s5 + $0x98] sm:$0xf]
      %v3931 = vld [vmem:[%s5 + $0x9c] sm:$0xf]
      %v3932 = vld [vmem:[%s5 + $0xa0] sm:$0xf]
      %v3933 = vld [vmem:[%s5 + $0xa4] sm:$0xf]
      %v3934 = vld [vmem:[%s5 + $0xa8] sm:$0xf]
      %v3935 = vld [vmem:[%s5 + $0xac] sm:$0xf]
      %v3936 = vld [vmem:[%s5 + $0xb0] sm:$0xf]
      %v3937 = vld [vmem:[%s5 + $0xb4] sm:$0xf]
      %v3938 = vld [vmem:[%s5 + $0xb8] sm:$0xf]
      %v3939 = vld [vmem:[%s5 + $0xbc] sm:$0xf]
      %v3940 = vld [vmem:[%s5 + $0xc0] sm:$0xf]
      %v3941 = vld [vmem:[%s5 + $0xc4] sm:$0xf]
      %v3942 = vld [vmem:[%s5 + $0xc8] sm:$0xf]
      %v3943 = vld [vmem:[%s5 + $0xcc] sm:$0xf]
      %v3944 = vld [vmem:[%s5 + $0xd0] sm:$0xf]
      %v3945 = vld [vmem:[%s5 + $0xd4] sm:$0xf]
      %v3946 = vld [vmem:[%s5 + $0xd8] sm:$0xf]
      %v3947 = vld [vmem:[%s5 + $0xdc] sm:$0xf]
      %v3948 = vld [vmem:[%s5 + $0xe0] sm:$0xf]
      %v3949 = vld [vmem:[%s5 + $0xe4] sm:$0xf]
      %v3950 = vld [vmem:[%s5 + $0xe8] sm:$0xf]
      %v3951 = vld [vmem:[%s5 + $0xec] sm:$0xf]
      %v3952 = vld [vmem:[%s5 + $0xf0] sm:$0xf]
      %v3953 = vld [vmem:[%s5 + $0xf4] sm:$0xf]
      %v3954 = vld [vmem:[%s5 + $0xf8] sm:$0xf]
      %v3955 = vld [vmem:[%s5 + $0xfc] sm:$0xf]
      %v3956 = vld [vmem:[%s5 + $0x100] sm:$0xf]
      %v3957 = vld [vmem:[%s5 + $0x104] sm:$0xf]
      %v3958 = vld [vmem:[%s5 + $0x108] sm:$0xf]
      %v3959 = vld [vmem:[%s5 + $0x10c] sm:$0xf]
      %v3960 = vld [vmem:[%s5 + $0x110] sm:$0xf]
      %v3961 = vld [vmem:[%s5 + $0x114] sm:$0xf]
      %v3962 = vld [vmem:[%s5 + $0x118] sm:$0xf]
      %v3963 = vld [vmem:[%s5 + $0x11c] sm:$0xf]
      %v3964 = vld [vmem:[%s5 + $0x120] sm:$0xf]
      %v3965 = vld [vmem:[%s5 + $0x124] sm:$0xf]
      %v3966 = vld [vmem:[%s5 + $0x128] sm:$0xf]
      %v3967 = vld [vmem:[%s5 + $0x12c] sm:$0xf]
      %v3968 = vld [vmem:[%s5 + $0x130] sm:$0xf]
      %v3969 = vld [vmem:[%s5 + $0x134] sm:$0xf]
      %v3970 = vld [vmem:[%s5 + $0x138] sm:$0xf]
      %v3971 = vld [vmem:[%s5 + $0x13c] sm:$0xf]
      %v3972 = vld [vmem:[%s5 + $0x140] sm:$0xf]
      %v3973 = vld [vmem:[%s5 + $0x144] sm:$0xf]
      %v3974 = vld [vmem:[%s5 + $0x148] sm:$0xf]
      %v3975 = vld [vmem:[%s5 + $0x14c] sm:$0xf]
      %v3976 = vld [vmem:[%s5 + $0x150] sm:$0xf]
      %v3977 = vld [vmem:[%s5 + $0x154] sm:$0xf]
      %v3978 = vld [vmem:[%s5 + $0x158] sm:$0xf]
      %v3979 = vld [vmem:[%s5 + $0x15c] sm:$0xf]
      %v3980 = vld [vmem:[%s5 + $0x160] sm:$0xf]
      %v3981 = vld [vmem:[%s5 + $0x164] sm:$0xf]
      %v3982 = vld [vmem:[%s5 + $0x168] sm:$0xf]
      %v3983 = vld [vmem:[%s5 + $0x16c] sm:$0xf]
      %v3984 = vld [vmem:[%s5 + $0x170] sm:$0xf]
      %v3985 = vld [vmem:[%s5 + $0x174] sm:$0xf]
      %v3986 = vld [vmem:[%s5 + $0x178] sm:$0xf]
      %v3987 = vld [vmem:[%s5 + $0x17c] sm:$0xf]
      %v3988 = vld [vmem:[%s6] sm:$0x1]
      %v3990 = vperm.slane %v3988, 0
      %v4088 = vunpack.c.l.b16 %v3892
      %v4089 = vunpack.c.l.b16 %v3893
      %v4090 = vunpack.c.l.b16 %v3894
      %v4091 = vunpack.c.l.b16 %v3895
      %v4092 = vunpack.c.l.b16 %v3896
      %v4093 = vunpack.c.l.b16 %v3897
      %v4094 = vunpack.c.l.b16 %v3898
      %v4095 = vunpack.c.l.b16 %v3899
      %v4096 = vunpack.c.l.b16 %v3900
      %v4097 = vunpack.c.l.b16 %v3901
      %v4098 = vunpack.c.l.b16 %v3902
      %v4099 = vunpack.c.l.b16 %v3903
      %v4100 = vunpack.c.l.b16 %v3904
      %v4101 = vunpack.c.l.b16 %v3905
      %v4102 = vunpack.c.l.b16 %v3906
      %v4103 = vunpack.c.l.b16 %v3907
      %v4104 = vunpack.c.l.b16 %v3908
      %v4105 = vunpack.c.l.b16 %v3909
      %v4106 = vunpack.c.l.b16 %v3910
      %v4107 = vunpack.c.l.b16 %v3911
      %v4108 = vunpack.c.l.b16 %v3912
      %v4109 = vunpack.c.l.b16 %v3913
      %v4110 = vunpack.c.l.b16 %v3914
      %v4111 = vunpack.c.l.b16 %v3915
      %v4112 = vunpack.c.l.b16 %v3916
      %v4113 = vunpack.c.l.b16 %v3917
      %v4114 = vunpack.c.l.b16 %v3918
      %v4115 = vunpack.c.l.b16 %v3919
      %v4116 = vunpack.c.l.b16 %v3920
      %v4117 = vunpack.c.l.b16 %v3921
      %v4118 = vunpack.c.l.b16 %v3922
      %v4119 = vunpack.c.l.b16 %v3923
      %v4120 = vunpack.c.l.b16 %v3924
      %v4121 = vunpack.c.l.b16 %v3925
      %v4122 = vunpack.c.l.b16 %v3926
      %v4123 = vunpack.c.l.b16 %v3927
      %v4124 = vunpack.c.l.b16 %v3928
      %v4125 = vunpack.c.l.b16 %v3929
      %v4126 = vunpack.c.l.b16 %v3930
      %v4127 = vunpack.c.l.b16 %v3931
      %v4128 = vunpack.c.l.b16 %v3932
      %v4129 = vunpack.c.l.b16 %v3933
      %v4130 = vunpack.c.l.b16 %v3934
      %v4131 = vunpack.c.l.b16 %v3935
      %v4132 = vunpack.c.l.b16 %v3936
      %v4133 = vunpack.c.l.b16 %v3937
      %v4134 = vunpack.c.l.b16 %v3938
      %v4135 = vunpack.c.l.b16 %v3939
      %v4136 = vunpack.c.l.b16 %v3940
      %v4137 = vunpack.c.l.b16 %v3941
      %v4138 = vunpack.c.l.b16 %v3942
      %v4139 = vunpack.c.l.b16 %v3943
      %v4140 = vunpack.c.l.b16 %v3944
      %v4141 = vunpack.c.l.b16 %v3945
      %v4142 = vunpack.c.l.b16 %v3946
      %v4143 = vunpack.c.l.b16 %v3947
      %v4144 = vunpack.c.l.b16 %v3948
      %v4145 = vunpack.c.l.b16 %v3949
      %v4146 = vunpack.c.l.b16 %v3950
      %v4147 = vunpack.c.l.b16 %v3951
      %v4148 = vunpack.c.l.b16 %v3952
      %v4149 = vunpack.c.l.b16 %v3953
      %v4150 = vunpack.c.l.b16 %v3954
      %v4151 = vunpack.c.l.b16 %v3955
      %v4152 = vunpack.c.l.b16 %v3956
      %v4153 = vunpack.c.l.b16 %v3957
      %v4154 = vunpack.c.l.b16 %v3958
      %v4155 = vunpack.c.l.b16 %v3959
      %v4156 = vunpack.c.l.b16 %v3960
      %v4157 = vunpack.c.l.b16 %v3961
      %v4158 = vunpack.c.l.b16 %v3962
      %v4159 = vunpack.c.l.b16 %v3963
      %v4160 = vunpack.c.l.b16 %v3964
      %v4161 = vunpack.c.l.b16 %v3965
      %v4162 = vunpack.c.l.b16 %v3966
      %v4163 = vunpack.c.l.b16 %v3967
      %v4164 = vunpack.c.l.b16 %v3968
      %v4165 = vunpack.c.l.b16 %v3969
      %v4166 = vunpack.c.l.b16 %v3970
      %v4167 = vunpack.c.l.b16 %v3971
      %v4168 = vunpack.c.l.b16 %v3972
      %v4169 = vunpack.c.l.b16 %v3973
      %v4170 = vunpack.c.l.b16 %v3974
      %v4171 = vunpack.c.l.b16 %v3975
      %v4172 = vunpack.c.l.b16 %v3976
      %v4173 = vunpack.c.l.b16 %v3977
      %v4174 = vunpack.c.l.b16 %v3978
      %v4175 = vunpack.c.l.b16 %v3979
      %v4176 = vunpack.c.l.b16 %v3980
      %v4177 = vunpack.c.l.b16 %v3981
      %v4178 = vunpack.c.l.b16 %v3982
      %v4179 = vunpack.c.l.b16 %v3983
      %v4180 = vunpack.c.l.b16 %v3984
      %v4181 = vunpack.c.l.b16 %v3985
      %v4182 = vunpack.c.l.b16 %v3986
      %v4183 = vunpack.c.l.b16 %v3987
      %v4184 = vpack.c.b16 %v4089, %v4088
      %v4185 = vpack.c.b16 %v4091, %v4090
      %v4186 = vpack.c.b16 %v4093, %v4092
      %v4187 = vpack.c.b16 %v4095, %v4094
      %v4188 = vpack.c.b16 %v4097, %v4096
      %v4189 = vpack.c.b16 %v4099, %v4098
      %v4190 = vpack.c.b16 %v4101, %v4100
      %v4191 = vpack.c.b16 %v4103, %v4102
      %v4192 = vpack.c.b16 %v4105, %v4104
      %v4193 = vpack.c.b16 %v4107, %v4106
      %v4194 = vpack.c.b16 %v4109, %v4108
      %v4195 = vpack.c.b16 %v4111, %v4110
      %v4196 = vpack.c.b16 %v4113, %v4112
      %v4197 = vpack.c.b16 %v4115, %v4114
      %v4198 = vpack.c.b16 %v4117, %v4116
      %v4199 = vpack.c.b16 %v4119, %v4118
      %v4200 = vpack.c.b16 %v4121, %v4120
      %v4201 = vpack.c.b16 %v4123, %v4122
      %v4202 = vpack.c.b16 %v4125, %v4124
      %v4203 = vpack.c.b16 %v4127, %v4126
      %v4204 = vpack.c.b16 %v4129, %v4128
      %v4205 = vpack.c.b16 %v4131, %v4130
      %v4206 = vpack.c.b16 %v4133, %v4132
      %v4207 = vpack.c.b16 %v4135, %v4134
      %v4208 = vpack.c.b16 %v4137, %v4136
      %v4209 = vpack.c.b16 %v4139, %v4138
      %v4210 = vpack.c.b16 %v4141, %v4140
      %v4211 = vpack.c.b16 %v4143, %v4142
      %v4212 = vpack.c.b16 %v4145, %v4144
      %v4213 = vpack.c.b16 %v4147, %v4146
      %v4214 = vpack.c.b16 %v4149, %v4148
      %v4215 = vpack.c.b16 %v4151, %v4150
      %v4216 = vpack.c.b16 %v4153, %v4152
      %v4217 = vpack.c.b16 %v4155, %v4154
      %v4218 = vpack.c.b16 %v4157, %v4156
      %v4219 = vpack.c.b16 %v4159, %v4158
      %v4220 = vpack.c.b16 %v4161, %v4160
      %v4221 = vpack.c.b16 %v4163, %v4162
      %v4222 = vpack.c.b16 %v4165, %v4164
      %v4223 = vpack.c.b16 %v4167, %v4166
      %v4224 = vpack.c.b16 %v4169, %v4168
      %v4225 = vpack.c.b16 %v4171, %v4170
      %v4226 = vpack.c.b16 %v4173, %v4172
      %v4227 = vpack.c.b16 %v4175, %v4174
      %v4228 = vpack.c.b16 %v4177, %v4176
      %v4229 = vpack.c.b16 %v4179, %v4178
      %v4230 = vpack.c.b16 %v4181, %v4180
      %v4231 = vpack.c.b16 %v4183, %v4182
      %4280 = vmatpush.bf16.msra.mxu0 %v4191
      %4281 = vmatpush.bf16.msra.mxu0 %v4190
      %4282 = vmatpush.bf16.msra.mxu0 %v4189
      %4283 = vmatpush.bf16.msra.mxu0 %v4188
      %4284 = vmatpush.bf16.msra.mxu0 %v4187
      %4285 = vmatpush.bf16.msra.mxu0 %v4186
      %4286 = vmatpush.bf16.msra.mxu0 %v4185
      %4287 = vmatpush.bf16.msra.mxu0 %v4184
      %4288 = vmatmul.bf16.gmra.mxu0 %v3886
      %v4289 = vpop.f32.mrf.mxu0
      %v4290 = vadd.f32 %v3990, %v4289
      %v4291 = vpop.f32.mrf.mxu0
      %4292 = vdwg.mxu0
      %4293 = vmatpush.bf16.msra.mxu0 %v4199
      %4294 = vmatpush.bf16.msra.mxu0 %v4198
      %4295 = vmatpush.bf16.msra.mxu0 %v4197
      %4296 = vmatpush.bf16.msra.mxu0 %v4196
      %4297 = vmatpush.bf16.msra.mxu0 %v4195
      %4298 = vmatpush.bf16.msra.mxu0 %v4194
      %4299 = vmatpush.bf16.msra.mxu0 %v4193
      %4300 = vmatpush.bf16.msra.mxu0 %v4192
      %4301 = vmatmul.bf16.gmra.mxu0 %v3887
      %v4302 = vpop.f32.mrf.mxu0
      %v4303 = vadd.f32 %v4290, %v4302
      %v4304 = vpop.f32.mrf.mxu0
      %4305 = vdwg.mxu0
      %4306 = vmatpush.bf16.msra.mxu0 %v4207
      %4307 = vmatpush.bf16.msra.mxu0 %v4206
      %4308 = vmatpush.bf16.msra.mxu0 %v4205
      %4309 = vmatpush.bf16.msra.mxu0 %v4204
      %4310 = vmatpush.bf16.msra.mxu0 %v4203
      %4311 = vmatpush.bf16.msra.mxu0 %v4202
      %4312 = vmatpush.bf16.msra.mxu0 %v4201
      %4313 = vmatpush.bf16.msra.mxu0 %v4200
      %4314 = vmatmul.bf16.gmra.mxu0 %v3888
      %v4315 = vpop.f32.mrf.mxu0
      %v4316 = vadd.f32 %v4303, %v4315
      %v4317 = vpop.f32.mrf.mxu0
      %4318 = vdwg.mxu0
      %4319 = vmatpush.bf16.msra.mxu0 %v4215
      %4320 = vmatpush.bf16.msra.mxu0 %v4214
      %4321 = vmatpush.bf16.msra.mxu0 %v4213
      %4322 = vmatpush.bf16.msra.mxu0 %v4212
      %4323 = vmatpush.bf16.msra.mxu0 %v4211
      %4324 = vmatpush.bf16.msra.mxu0 %v4210
      %4325 = vmatpush.bf16.msra.mxu0 %v4209
      %4326 = vmatpush.bf16.msra.mxu0 %v4208
      %4327 = vmatmul.bf16.gmra.mxu0 %v3889
      %v4328 = vpop.f32.mrf.mxu0
      %v4329 = vadd.f32 %v4316, %v4328
      %v4330 = vpop.f32.mrf.mxu0
      %4331 = vdwg.mxu0
      %4332 = vmatpush.bf16.msra.mxu0 %v4223
      %4333 = vmatpush.bf16.msra.mxu0 %v4222
      %4334 = vmatpush.bf16.msra.mxu0 %v4221
      %4335 = vmatpush.bf16.msra.mxu0 %v4220
      %4336 = vmatpush.bf16.msra.mxu0 %v4219
      %4337 = vmatpush.bf16.msra.mxu0 %v4218
      %4338 = vmatpush.bf16.msra.mxu0 %v4217
      %4339 = vmatpush.bf16.msra.mxu0 %v4216
      %4340 = vmatmul.bf16.gmra.mxu0 %v3890
      %v4341 = vpop.f32.mrf.mxu0
      %v4342 = vadd.f32 %v4329, %v4341
      %v4343 = vpop.f32.mrf.mxu0
      %4344 = vdwg.mxu0
      %4345 = vmatpush.bf16.msra.mxu0 %v4231
      %4346 = vmatpush.bf16.msra.mxu0 %v4230
      %4347 = vmatpush.bf16.msra.mxu0 %v4229
      %4348 = vmatpush.bf16.msra.mxu0 %v4228
      %4349 = vmatpush.bf16.msra.mxu0 %v4227
      %4350 = vmatpush.bf16.msra.mxu0 %v4226
      %4351 = vmatpush.bf16.msra.mxu0 %v4225
      %4352 = vmatpush.bf16.msra.mxu0 %v4224
      %4353 = vmatmul.bf16.gmra.mxu0 %v3891
      %v4354 = vpop.f32.mrf.mxu0
      %v4355 = vadd.f32 %v4342, %v4354
      %v4356 = vpop.f32.mrf.mxu0
      %4357 = vdwg.mxu0
      %v4358 = vmax.f32 %v4355, 0.0
      %v4359 = vpack.c.bf16 %v4358, %v4358
      %v4360 = vld [vmem:[%s7] sm:$0xff]
      %v4361 = vld [vmem:[%s7 + $0x8] sm:$0xff]
      %v4362 = vld [vmem:[%s7 + $0x10] sm:$0xff]
      %v4363 = vld [vmem:[%s7 + $0x18] sm:$0xff]
      %v4364 = vld [vmem:[%s7 + $0x20] sm:$0xff]
      %v4365 = vld [vmem:[%s7 + $0x28] sm:$0xff]
      %v4366 = vld [vmem:[%s7 + $0x30] sm:$0xff]
      %v4367 = vld [vmem:[%s7 + $0x38] sm:$0xff]
      %v4368 = vld [vmem:[%s7 + $0x40] sm:$0xff]
      %v4369 = vld [vmem:[%s7 + $0x48] sm:$0xff]
      %v4370 = vld [vmem:[%s7 + $0x50] sm:$0xff]
      %v4371 = vld [vmem:[%s7 + $0x58] sm:$0xff]
      %v4372 = vld [vmem:[%s7 + $0x60] sm:$0xff]
      %v4373 = vld [vmem:[%s7 + $0x68] sm:$0xff]
      %v4374 = vld [vmem:[%s7 + $0x70] sm:$0xff]
      %v4375 = vld [vmem:[%s7 + $0x78] sm:$0xff]
      %v4376 = vld [vmem:[%s8] sm:$0xf]
      %v4378 = vperm.slane %v4376, 0
      %v4379 = vperm.slane %v4376, 1
      %v4380 = vperm.slane %v4376, 2
      %v4381 = vperm.slane %v4376, 3
      %v4402 = vunpack.c.l.b16 %v4360
      %v4403 = vunpack.c.h.b16 %v4360
      %v4404 = vunpack.c.l.b16 %v4361
      %v4405 = vunpack.c.h.b16 %v4361
      %v4406 = vunpack.c.l.b16 %v4362
      %v4407 = vunpack.c.h.b16 %v4362
      %v4408 = vunpack.c.l.b16 %v4363
      %v4409 = vunpack.c.h.b16 %v4363
      %v4410 = vunpack.c.l.b16 %v4364
      %v4411 = vunpack.c.h.b16 %v4364
      %v4412 = vunpack.c.l.b16 %v4365
      %v4413 = vunpack.c.h.b16 %v4365
      %v4414 = vunpack.c.l.b16 %v4366
      %v4415 = vunpack.c.h.b16 %v4366
      %v4416 = vunpack.c.l.b16 %v4367
      %v4417 = vunpack.c.h.b16 %v4367
      %v4418 = vunpack.c.l.b16 %v4368
      %v4419 = vunpack.c.h.b16 %v4368
      %v4420 = vunpack.c.l.b16 %v4369
      %v4421 = vunpack.c.h.b16 %v4369
      %v4422 = vunpack.c.l.b16 %v4370
      %v4423 = vunpack.c.h.b16 %v4370
      %v4424 = vunpack.c.l.b16 %v4371
      %v4425 = vunpack.c.h.b16 %v4371
      %v4426 = vunpack.c.l.b16 %v4372
      %v4427 = vunpack.c.h.b16 %v4372
      %v4428 = vunpack.c.l.b16 %v4373
      %v4429 = vunpack.c.h.b16 %v4373
      %v4430 = vunpack.c.l.b16 %v4374
      %v4431 = vunpack.c.h.b16 %v4374
      %v4432 = vunpack.c.l.b16 %v4375
      %v4433 = vunpack.c.h.b16 %v4375
      %v4434 = vpack.c.b16 %v4406, %v4402
      %v4435 = vpack.c.b16 %v4407, %v4403
      %v4436 = vpack.c.b16 %v4408, %v4404
      %v4437 = vpack.c.b16 %v4409, %v4405
      %v4438 = vpack.c.b16 %v4414, %v4410
      %v4439 = vpack.c.b16 %v4415, %v4411
      %v4440 = vpack.c.b16 %v4416, %v4412
      %v4441 = vpack.c.b16 %v4417, %v4413
      %v4442 = vpack.c.b16 %v4422, %v4418
      %v4443 = vpack.c.b16 %v4423, %v4419
      %v4444 = vpack.c.b16 %v4424, %v4420
      %v4445 = vpack.c.b16 %v4425, %v4421
      %v4446 = vpack.c.b16 %v4430, %v4426
      %v4447 = vpack.c.b16 %v4431, %v4427
      %v4448 = vpack.c.b16 %v4432, %v4428
      %v4449 = vpack.c.b16 %v4433, %v4429
      %vm4466 = vcmask 523264
      %v4468 = vsel %vm4466, %v4359, 0
      %4470 = vmatpush.bf16.msra.mxu0 0
      %4471 = vmatpush.bf16.msra.mxu0 0
      %4472 = vmatpush.bf16.msra.mxu0 0
      %4473 = vmatpush.bf16.msra.mxu0 0
      %4474 = vmatpush.bf16.msra.mxu0 %v4446
      %4475 = vmatpush.bf16.msra.mxu0 %v4442
      %4476 = vmatpush.bf16.msra.mxu0 %v4438
      %4477 = vmatpush.bf16.msra.mxu0 %v4434
      %4478 = vmatmul.bf16.gmra.mxu0 %v4468
      %v4479 = vpop.f32.mrf.mxu0
      %v4480 = vadd.f32 %v4378, %v4479
      %v4481 = vpop.f32.mrf.mxu0
      %4482 = vdwg.mxu0
      %4483 = vmatpush.bf16.msra.mxu0 0
      %4484 = vmatpush.bf16.msra.mxu0 0
      %4485 = vmatpush.bf16.msra.mxu0 0
      %4486 = vmatpush.bf16.msra.mxu0 0
      %4487 = vmatpush.bf16.msra.mxu0 %v4447
      %4488 = vmatpush.bf16.msra.mxu0 %v4443
      %4489 = vmatpush.bf16.msra.mxu0 %v4439
      %4490 = vmatpush.bf16.msra.mxu0 %v4435
      %4491 = vmatmul.bf16.gmra.mxu0 %v4468
      %v4492 = vpop.f32.mrf.mxu0
      %v4493 = vadd.f32 %v4379, %v4492
      %v4494 = vpop.f32.mrf.mxu0
      %4495 = vdwg.mxu0
      %4496 = vmatpush.bf16.msra.mxu0 0
      %4497 = vmatpush.bf16.msra.mxu0 0
      %4498 = vmatpush.bf16.msra.mxu0 0
      %4499 = vmatpush.bf16.msra.mxu0 0
      %4500 = vmatpush.bf16.msra.mxu0 %v4448
      %4501 = vmatpush.bf16.msra.mxu0 %v4444
      %4502 = vmatpush.bf16.msra.mxu0 %v4440
      %4503 = vmatpush.bf16.msra.mxu0 %v4436
      %4504 = vmatmul.bf16.gmra.mxu0 %v4468
      %v4505 = vpop.f32.mrf.mxu0
      %v4506 = vadd.f32 %v4380, %v4505
      %v4507 = vpop.f32.mrf.mxu0
      %4508 = vdwg.mxu0
      %4509 = vmatpush.bf16.msra.mxu0 0
      %4510 = vmatpush.bf16.msra.mxu0 0
      %4511 = vmatpush.bf16.msra.mxu0 0
      %4512 = vmatpush.bf16.msra.mxu0 0
      %4513 = vmatpush.bf16.msra.mxu0 %v4449
      %4514 = vmatpush.bf16.msra.mxu0 %v4445
      %4515 = vmatpush.bf16.msra.mxu0 %v4441
      %4516 = vmatpush.bf16.msra.mxu0 %v4437
      %4517 = vmatmul.bf16.gmra.mxu0 %v4468
      %v4518 = vpop.f32.mrf.mxu0
      %v4519 = vadd.f32 %v4381, %v4518
      %v4520 = vpop.f32.mrf.mxu0
      %4521 = vdwg.mxu0
      %v4522 = vmax.f32 %v4480, 0.0
      %v4523 = vmax.f32 %v4493, 0.0
      %v4524 = vmax.f32 %v4506, 0.0
      %v4525 = vmax.f32 %v4519, 0.0
      %v4526 = vpack.c.bf16 %v4522, %v4522
      %v4527 = vpack.c.bf16 %v4523, %v4523
      %v4528 = vpack.c.bf16 %v4524, %v4524
      %v4529 = vpack.c.bf16 %v4525, %v4525
      %v4530 = vld [vmem:[%s9] sm:$0xf]
      %v4531 = vld [vmem:[%s9 + $0x4] sm:$0xf]
      %v4532 = vld [vmem:[%s9 + $0x8] sm:$0xf]
      %v4533 = vld [vmem:[%s9 + $0xc] sm:$0xf]
      %v4534 = vld [vmem:[%s9 + $0x10] sm:$0xf]
      %v4535 = vld [vmem:[%s9 + $0x14] sm:$0xf]
      %v4536 = vld [vmem:[%s9 + $0x18] sm:$0xf]
      %v4537 = vld [vmem:[%s9 + $0x1c] sm:$0xf]
      %v4538 = vld [vmem:[%s9 + $0x20] sm:$0xf]
      %v4539 = vld [vmem:[%s9 + $0x24] sm:$0xf]
      %v4540 = vld [vmem:[%s9 + $0x28] sm:$0xf]
      %v4541 = vld [vmem:[%s9 + $0x2c] sm:$0xf]
      %v4542 = vld [vmem:[%s9 + $0x30] sm:$0xf]
      %v4543 = vld [vmem:[%s9 + $0x34] sm:$0xf]
      %v4544 = vld [vmem:[%s9 + $0x38] sm:$0xf]
      %v4545 = vld [vmem:[%s9 + $0x3c] sm:$0xf]
      %v4546 = vld [vmem:[%s9 + $0x40] sm:$0xf]
      %v4547 = vld [vmem:[%s9 + $0x44] sm:$0xf]
      %v4548 = vld [vmem:[%s9 + $0x48] sm:$0xf]
      %v4549 = vld [vmem:[%s9 + $0x4c] sm:$0xf]
      %v4550 = vld [vmem:[%s9 + $0x50] sm:$0xf]
      %v4551 = vld [vmem:[%s9 + $0x54] sm:$0xf]
      %v4552 = vld [vmem:[%s9 + $0x58] sm:$0xf]
      %v4553 = vld [vmem:[%s9 + $0x5c] sm:$0xf]
      %v4554 = vld [vmem:[%s9 + $0x60] sm:$0xf]
      %v4555 = vld [vmem:[%s9 + $0x64] sm:$0xf]
      %v4556 = vld [vmem:[%s9 + $0x68] sm:$0xf]
      %v4557 = vld [vmem:[%s9 + $0x6c] sm:$0xf]
      %v4558 = vld [vmem:[%s9 + $0x70] sm:$0xf]
      %v4559 = vld [vmem:[%s9 + $0x74] sm:$0xf]
      %v4560 = vld [vmem:[%s9 + $0x78] sm:$0xf]
      %v4561 = vld [vmem:[%s9 + $0x7c] sm:$0xf]
      %v4562 = vld [vmem:[%s9 + $0x80] sm:$0xf]
      %v4563 = vld [vmem:[%s9 + $0x84] sm:$0xf]
      %v4564 = vld [vmem:[%s9 + $0x88] sm:$0xf]
      %v4565 = vld [vmem:[%s9 + $0x8c] sm:$0xf]
      %v4566 = vld [vmem:[%s9 + $0x90] sm:$0xf]
      %v4567 = vld [vmem:[%s9 + $0x94] sm:$0xf]
      %v4568 = vld [vmem:[%s9 + $0x98] sm:$0xf]
      %v4569 = vld [vmem:[%s9 + $0x9c] sm:$0xf]
      %v4570 = vld [vmem:[%s9 + $0xa0] sm:$0xf]
      %v4571 = vld [vmem:[%s9 + $0xa4] sm:$0xf]
      %v4572 = vld [vmem:[%s9 + $0xa8] sm:$0xf]
      %v4573 = vld [vmem:[%s9 + $0xac] sm:$0xf]
      %v4574 = vld [vmem:[%s9 + $0xb0] sm:$0xf]
      %v4575 = vld [vmem:[%s9 + $0xb4] sm:$0xf]
      %v4576 = vld [vmem:[%s9 + $0xb8] sm:$0xf]
      %v4577 = vld [vmem:[%s9 + $0xbc] sm:$0xf]
      %v4578 = vld [vmem:[%s9 + $0xc0] sm:$0xf]
      %v4579 = vld [vmem:[%s9 + $0xc4] sm:$0xf]
      %v4580 = vld [vmem:[%s9 + $0xc8] sm:$0xf]
      %v4581 = vld [vmem:[%s9 + $0xcc] sm:$0xf]
      %v4582 = vld [vmem:[%s9 + $0xd0] sm:$0xf]
      %v4583 = vld [vmem:[%s9 + $0xd4] sm:$0xf]
      %v4584 = vld [vmem:[%s9 + $0xd8] sm:$0xf]
      %v4585 = vld [vmem:[%s9 + $0xdc] sm:$0xf]
      %v4586 = vld [vmem:[%s9 + $0xe0] sm:$0xf]
      %v4587 = vld [vmem:[%s9 + $0xe4] sm:$0xf]
      %v4588 = vld [vmem:[%s9 + $0xe8] sm:$0xf]
      %v4589 = vld [vmem:[%s9 + $0xec] sm:$0xf]
      %v4590 = vld [vmem:[%s9 + $0xf0] sm:$0xf]
      %v4591 = vld [vmem:[%s9 + $0xf4] sm:$0xf]
      %v4592 = vld [vmem:[%s9 + $0xf8] sm:$0xf]
      %v4593 = vld [vmem:[%s9 + $0xfc] sm:$0xf]
      %v4594 = vld [vmem:[%s10] sm:$0x1]
      %v4596 = vperm.slane %v4594, 0
      %v4662 = vunpack.c.l.b16 %v4530
      %v4663 = vunpack.c.l.b16 %v4531
      %v4664 = vunpack.c.l.b16 %v4532
      %v4665 = vunpack.c.l.b16 %v4533
      %v4666 = vunpack.c.l.b16 %v4534
      %v4667 = vunpack.c.l.b16 %v4535
      %v4668 = vunpack.c.l.b16 %v4536
      %v4669 = vunpack.c.l.b16 %v4537
      %v4670 = vunpack.c.l.b16 %v4538
      %v4671 = vunpack.c.l.b16 %v4539
      %v4672 = vunpack.c.l.b16 %v4540
      %v4673 = vunpack.c.l.b16 %v4541
      %v4674 = vunpack.c.l.b16 %v4542
      %v4675 = vunpack.c.l.b16 %v4543
      %v4676 = vunpack.c.l.b16 %v4544
      %v4677 = vunpack.c.l.b16 %v4545
      %v4678 = vunpack.c.l.b16 %v4546
      %v4679 = vunpack.c.l.b16 %v4547
      %v4680 = vunpack.c.l.b16 %v4548
      %v4681 = vunpack.c.l.b16 %v4549
      %v4682 = vunpack.c.l.b16 %v4550
      %v4683 = vunpack.c.l.b16 %v4551
      %v4684 = vunpack.c.l.b16 %v4552
      %v4685 = vunpack.c.l.b16 %v4553
      %v4686 = vunpack.c.l.b16 %v4554
      %v4687 = vunpack.c.l.b16 %v4555
      %v4688 = vunpack.c.l.b16 %v4556
      %v4689 = vunpack.c.l.b16 %v4557
      %v4690 = vunpack.c.l.b16 %v4558
      %v4691 = vunpack.c.l.b16 %v4559
      %v4692 = vunpack.c.l.b16 %v4560
      %v4693 = vunpack.c.l.b16 %v4561
      %v4694 = vunpack.c.l.b16 %v4562
      %v4695 = vunpack.c.l.b16 %v4563
      %v4696 = vunpack.c.l.b16 %v4564
      %v4697 = vunpack.c.l.b16 %v4565
      %v4698 = vunpack.c.l.b16 %v4566
      %v4699 = vunpack.c.l.b16 %v4567
      %v4700 = vunpack.c.l.b16 %v4568
      %v4701 = vunpack.c.l.b16 %v4569
      %v4702 = vunpack.c.l.b16 %v4570
      %v4703 = vunpack.c.l.b16 %v4571
      %v4704 = vunpack.c.l.b16 %v4572
      %v4705 = vunpack.c.l.b16 %v4573
      %v4706 = vunpack.c.l.b16 %v4574
      %v4707 = vunpack.c.l.b16 %v4575
      %v4708 = vunpack.c.l.b16 %v4576
      %v4709 = vunpack.c.l.b16 %v4577
      %v4710 = vunpack.c.l.b16 %v4578
      %v4711 = vunpack.c.l.b16 %v4579
      %v4712 = vunpack.c.l.b16 %v4580
      %v4713 = vunpack.c.l.b16 %v4581
      %v4714 = vunpack.c.l.b16 %v4582
      %v4715 = vunpack.c.l.b16 %v4583
      %v4716 = vunpack.c.l.b16 %v4584
      %v4717 = vunpack.c.l.b16 %v4585
      %v4718 = vunpack.c.l.b16 %v4586
      %v4719 = vunpack.c.l.b16 %v4587
      %v4720 = vunpack.c.l.b16 %v4588
      %v4721 = vunpack.c.l.b16 %v4589
      %v4722 = vunpack.c.l.b16 %v4590
      %v4723 = vunpack.c.l.b16 %v4591
      %v4724 = vunpack.c.l.b16 %v4592
      %v4725 = vunpack.c.l.b16 %v4593
      %v4726 = vpack.c.b16 %v4663, %v4662
      %v4727 = vpack.c.b16 %v4665, %v4664
      %v4728 = vpack.c.b16 %v4667, %v4666
      %v4729 = vpack.c.b16 %v4669, %v4668
      %v4730 = vpack.c.b16 %v4671, %v4670
      %v4731 = vpack.c.b16 %v4673, %v4672
      %v4732 = vpack.c.b16 %v4675, %v4674
      %v4733 = vpack.c.b16 %v4677, %v4676
      %v4734 = vpack.c.b16 %v4679, %v4678
      %v4735 = vpack.c.b16 %v4681, %v4680
      %v4736 = vpack.c.b16 %v4683, %v4682
      %v4737 = vpack.c.b16 %v4685, %v4684
      %v4738 = vpack.c.b16 %v4687, %v4686
      %v4739 = vpack.c.b16 %v4689, %v4688
      %v4740 = vpack.c.b16 %v4691, %v4690
      %v4741 = vpack.c.b16 %v4693, %v4692
      %v4742 = vpack.c.b16 %v4695, %v4694
      %v4743 = vpack.c.b16 %v4697, %v4696
      %v4744 = vpack.c.b16 %v4699, %v4698
      %v4745 = vpack.c.b16 %v4701, %v4700
      %v4746 = vpack.c.b16 %v4703, %v4702
      %v4747 = vpack.c.b16 %v4705, %v4704
      %v4748 = vpack.c.b16 %v4707, %v4706
      %v4749 = vpack.c.b16 %v4709, %v4708
      %v4750 = vpack.c.b16 %v4711, %v4710
      %v4751 = vpack.c.b16 %v4713, %v4712
      %v4752 = vpack.c.b16 %v4715, %v4714
      %v4753 = vpack.c.b16 %v4717, %v4716
      %v4754 = vpack.c.b16 %v4719, %v4718
      %v4755 = vpack.c.b16 %v4721, %v4720
      %v4756 = vpack.c.b16 %v4723, %v4722
      %v4757 = vpack.c.b16 %v4725, %v4724
      %4790 = vmatpush.bf16.msra.mxu0 %v4733
      %4791 = vmatpush.bf16.msra.mxu0 %v4732
      %4792 = vmatpush.bf16.msra.mxu0 %v4731
      %4793 = vmatpush.bf16.msra.mxu0 %v4730
      %4794 = vmatpush.bf16.msra.mxu0 %v4729
      %4795 = vmatpush.bf16.msra.mxu0 %v4728
      %4796 = vmatpush.bf16.msra.mxu0 %v4727
      %4797 = vmatpush.bf16.msra.mxu0 %v4726
      %4798 = vmatmul.bf16.gmra.mxu0 %v4526
      %v4799 = vpop.f32.mrf.mxu0
      %v4800 = vadd.f32 %v4596, %v4799
      %v4801 = vpop.f32.mrf.mxu0
      %4802 = vdwg.mxu0
      %4803 = vmatpush.bf16.msra.mxu0 %v4741
      %4804 = vmatpush.bf16.msra.mxu0 %v4740
      %4805 = vmatpush.bf16.msra.mxu0 %v4739
      %4806 = vmatpush.bf16.msra.mxu0 %v4738
      %4807 = vmatpush.bf16.msra.mxu0 %v4737
      %4808 = vmatpush.bf16.msra.mxu0 %v4736
      %4809 = vmatpush.bf16.msra.mxu0 %v4735
      %4810 = vmatpush.bf16.msra.mxu0 %v4734
      %4811 = vmatmul.bf16.gmra.mxu0 %v4527
      %v4812 = vpop.f32.mrf.mxu0
      %v4813 = vadd.f32 %v4800, %v4812
      %v4814 = vpop.f32.mrf.mxu0
      %4815 = vdwg.mxu0
      %4816 = vmatpush.bf16.msra.mxu0 %v4749
      %4817 = vmatpush.bf16.msra.mxu0 %v4748
      %4818 = vmatpush.bf16.msra.mxu0 %v4747
      %4819 = vmatpush.bf16.msra.mxu0 %v4746
      %4820 = vmatpush.bf16.msra.mxu0 %v4745
      %4821 = vmatpush.bf16.msra.mxu0 %v4744
      %4822 = vmatpush.bf16.msra.mxu0 %v4743
      %4823 = vmatpush.bf16.msra.mxu0 %v4742
      %4824 = vmatmul.bf16.gmra.mxu0 %v4528
      %v4825 = vpop.f32.mrf.mxu0
      %v4826 = vadd.f32 %v4813, %v4825
      %v4827 = vpop.f32.mrf.mxu0
      %4828 = vdwg.mxu0
      %4829 = vmatpush.bf16.msra.mxu0 %v4757
      %4830 = vmatpush.bf16.msra.mxu0 %v4756
      %4831 = vmatpush.bf16.msra.mxu0 %v4755
      %4832 = vmatpush.bf16.msra.mxu0 %v4754
      %4833 = vmatpush.bf16.msra.mxu0 %v4753
      %4834 = vmatpush.bf16.msra.mxu0 %v4752
      %4835 = vmatpush.bf16.msra.mxu0 %v4751
      %4836 = vmatpush.bf16.msra.mxu0 %v4750
      %4837 = vmatmul.bf16.gmra.mxu0 %v4529
      %v4838 = vpop.f32.mrf.mxu0
      %v4839 = vadd.f32 %v4826, %v4838
      %v4840 = vpop.f32.mrf.mxu0
      %4841 = vdwg.mxu0
      %4842 = vmax.xlane.f32.xlu0 %v4839
      %v4843 = vpop.xlane.xlu0 %4842
      %v4844 = vsub.f32 %v4839, %v4843
      %v4845 = vmul.f32 %v4844, 1.442695
      %v4846 = vpow.pop %v4845
      %4847 = vadd.xlane.f32.xlu0 %v4846
      %v4848 = vpop.xlane.xlu0 %4847
      %v4849 = vrcp.pop %v4848
      %v4850 = vmul.f32 %v4848, %v4849
      %v4851 = vsub.f32 1.0, %v4850
      %v4852 = vmul.f32 %v4849, %v4851
      %v4853 = vadd.f32 %v4849, %v4852
      %vm4854 = vweird.f32 %v4848
      %vm4855 = vweird.f32 %v4849
      %vm4856 = vmor %vm4854, %vm4855
      %v4857 = vsel %vm4856, %v4849, %v4853
      %v4858 = vand.u32 2147483647, %v4848
      %vm4859 = vcmp.eq.f32.partialorder %v4858, 8.507059e+37
      %v4860 = vand.u32 %v4848, 2147483648
      %v4861 = vor.u32 1.1754944e-38, %v4860
      %v4862 = vsel %vm4859, %v4861, %v4857
      %v4863 = vmul.f32 %v4846, %v4862
      %4864 = vst [vmem:[%s389] sm:$0xff] %v4863
      %p4865 = scmp.lt.s32.totalorder %s22, 1
      %s4866 = scalar_select %p4865, %s22, 1
      %s4867 = smul.addr %s4866, 8
      %s4868 = scalar_lea.vmem %s11, %s4867
      // Predicated region
      $region65: #{policy_forward.1} parent=63 // pred_check
        %p4869 = pneg %p276
      $region66: #{policy_forward.1} parent=63 // pred_check_branch
        %4871 = sbr.rel (%p4869) target = $region68
      $region67: #{policy_forward.1} parent=63 // pred_region
        _
      $region68: #{policy_forward.1} parent=63 // pred_fallthru
        _
    $region64: #{policy_forward.1} parent=5 // pred_fallthru
      _
    %p4872 = scmp.le.s32.totalorder 2, %s17
    // Predicated region
    $region69: #{policy_forward.1} parent=5 // pred_check
      %p4873 = pneg %p4872
    $region70: #{policy_forward.1} parent=5 // pred_check_branch
      %4875 = sbr.rel (%p4873) target = $region72
    $region71: #{policy_forward.1} parent=5 // pred_region
      %s4876 = ssub.s32 %s17, 2
      // Predicated region
      $region73: #{policy_forward.1} parent=71 // pred_check
        %p4877 = pneg %p282
      $region74: #{policy_forward.1} parent=71 // pred_check_branch
        %4879 = sbr.rel (%p4877) target = $region76
      $region75: #{policy_forward.1} parent=71 // pred_region
        %p4880 = scmp.lt.s32.totalorder %s23, 1
        %s4881 = scalar_select %p4880, %s23, 1
        %s4882 = smul.addr %s4881, 8
        %s4883 = scalar_lea.vmem %s11, %s4882
      $region76: #{policy_forward.1} parent=71 // pred_fallthru
        _
    $region72: #{policy_forward.1} parent=5 // pred_fallthru
      _
  $region6: #{policy_forward.1} parent=0 // loop_footer
    %s21 = sadd.s32 1, %s17
  $region7: #{policy_forward.1} parent=0 // loop_footer_branch
    %16 = sbr.rel target = $region3
  $region8: #{policy_forward.1} parent=0 // loop_exit
    _

</llo_original>
